<compile_context>
chip_gen: v7x
topology: tpu7x:2x2x1
jax: 0.10.0
libtpu: 0.0.40
codegen_flags: <defaults>
</compile_context>

<pallas_src>
import functools

import jax
import jax.numpy as jnp
from jax import lax
from jax.experimental import pallas as pl
from jax.experimental.pallas import tpu as pltpu

KS = 3          # conv / spatial max-pool kernel size
TAU = 2
MARGIN = TAU // 2   # cross-level max collapse below is only valid for tau=2


# ----------------------------------------------------------------------------
# Kernel 1: 3x3 same-padding Conv2d as 9 accumulated MXU matmuls
# ----------------------------------------------------------------------------
def _conv3x3_kernel(x_ref, w_ref, b_ref, out_ref, scr, *, H, W, C):
    """3x3 same conv for one batch element, channels-last flat layout.

    x_ref  : (1, H*W, C)           VMEM  input, flat spatial rows
    w_ref  : (9, C, C)             VMEM  tap-major weights, w_ref[kh*3+kw] = (Cin, Cout)
    b_ref  : (1, C)                VMEM  bias row
    out_ref: (1, H*W, C)           VMEM
    scr    : (H*W + 2*(W+1), C)    VMEM  zero-halo'd copy of the input
    """
    HW = H * W
    PAD = W + 1                       # halo covers flat shifts in [-(W+1), W+1]

    # Zero only the halo margins; the interior is fully overwritten below.
    scr[0:PAD, :] = jnp.zeros((PAD, C), jnp.float32)
    scr[PAD + HW:PAD + HW + PAD, :] = jnp.zeros((PAD, C), jnp.float32)
    scr[PAD:PAD + HW, :] = x_ref[0]

    # Column-wrap masks: a flat shift of +-1 wraps across image rows, so the
    # first / last column of each row must be zeroed for the dw=-1 / dw=+1 taps.
    col = lax.broadcasted_iota(jnp.int32, (HW, C), 0) % W
    not_first_col = col != 0
    not_last_col = col != (W - 1)

    acc = jnp.zeros((HW, C), jnp.float32)
    for kh in range(KS):
        for kw in range(KS):
            start = PAD + (kh - 1) * W + (kw - 1)          # static offset
            xs = scr[start:start + HW, :]
            if kw == 0:
                xs = jnp.where(not_first_col, xs, 0.0)
            elif kw == 2:
                xs = jnp.where(not_last_col, xs, 0.0)
            # MXU matmul, contraction over Cin.  If Cin were tiled as a grid
            # reduction axis this accumulator would become a VMEM scratch with
            # pl.when init/finalize; here all taps live in one invocation.
            acc = acc + jnp.dot(xs, w_ref[kh * KS + kw],
                                preferred_element_type=jnp.float32)
    out_ref[0] = acc + b_ref[...]


def conv3x3_pallas(x_flat, w_taps, b_row, H, W):
    # x_flat: (N, H*W, C) channels-last, w_taps: (9, C, C), b_row: (1, C)
    N, HW, C = x_flat.shape
    P = HW + 2 * (W + 1)
    kern = functools.partial(_conv3x3_kernel, H=H, W=W, C=C)
    # TODO(synk): for production FPN sizes (C=256, H*W ~ 18k) tile H*W into row
    # strips (with halo) and/or Cin as a grid reduction axis so the blocks fit
    # v7x's 64 MiB VMEM; whole-image blocks are fine at these test shapes.
    return pl.pallas_call(
        kern,
        out_shape=jax.ShapeDtypeStruct((N, HW, C), jnp.float32),
        grid=(N,),
        in_specs=[
            pl.BlockSpec((1, HW, C), lambda n: (n, 0, 0)),
            pl.BlockSpec((9, C, C), lambda n: (0, 0, 0)),
            pl.BlockSpec((1, C), lambda n: (0, 0)),
        ],
        out_specs=pl.BlockSpec((1, HW, C), lambda n: (n, 0, 0)),
        scratch_shapes=[pltpu.VMEM((P, C), jnp.float32)],
        compiler_params=pltpu.CompilerParams(
            dimension_semantics=("parallel",)),
    )(x_flat, w_taps, b_row)


# ----------------------------------------------------------------------------
# Kernel 2: cross-level max + separable 3x3 spatial max (-inf pad) + residual + ReLU
# ----------------------------------------------------------------------------
def _maxfilt_kernel(*refs, D, H, W, C):
    """refs = (f_0, ..., f_{D-1}, x, out, scr)

    f_k : (1, H*W, C)          VMEM  conv features resized to this level
    x   : (1, H*W, C)          VMEM  original input at this level
    out : (1, H*W, C)          VMEM
    scr : (H*W + 2*(W+1), C)   VMEM  -inf halo workspace
    """
    f_refs = refs[:D]
    x_ref = refs[D]
    out_ref = refs[D + 1]
    scr = refs[D + 2]
    HW = H * W
    PAD = W + 1
    NEG = -jnp.inf

    # Max over the stacked pyramid levels.  This collapse of the (tau+1, 3, 3)
    # MaxPool3d is valid for tau=2: the depth slice taken at min(l, margin)
    # always covers every stacked level.
    m = f_refs[0][0]
    for d in range(1, D):
        m = jnp.maximum(m, f_refs[d][0])

    # -inf halo, data in the interior.
    scr[0:PAD, :] = jnp.full((PAD, C), NEG, jnp.float32)
    scr[PAD + HW:PAD + HW + PAD, :] = jnp.full((PAD, C), NEG, jnp.float32)
    scr[PAD:PAD + HW, :] = m

    # Separable 3x3 max: H-direction first (flat stride W, no wrap issues) ...
    rmax = jnp.maximum(
        jnp.maximum(scr[PAD - W:PAD - W + HW, :], scr[PAD:PAD + HW, :]),
        scr[PAD + W:PAD + W + HW, :])

    # ... then W-direction (flat stride 1, mask the row-wrap neighbours).
    scr[PAD:PAD + HW, :] = rmax
    col = lax.broadcasted_iota(jnp.int32, (HW, C), 0) % W
    left = jnp.where(col != 0, scr[PAD - 1:PAD - 1 + HW, :], NEG)
    right = jnp.where(col != (W - 1), scr[PAD + 1:PAD + 1 + HW, :], NEG)
    pooled = jnp.maximum(jnp.maximum(left, rmax), right)

    out_ref[0] = jnp.maximum(pooled + x_ref[0], 0.0)


def maxfilt_pallas(window, x_flat, H, W):
    # window: list of D arrays (N, H*W, C); x_flat: (N, H*W, C)
    D = len(window)
    N, HW, C = x_flat.shape
    P = HW + 2 * (W + 1)
    kern = functools.partial(_maxfilt_kernel, D=D, H=H, W=W, C=C)
    spec = pl.BlockSpec((1, HW, C), lambda n: (n, 0, 0))
    return pl.pallas_call(
        kern,
        out_shape=jax.ShapeDtypeStruct((N, HW, C), jnp.float32),
        grid=(N,),
        in_specs=[spec] * (D + 1),
        out_specs=spec,
        scratch_shapes=[pltpu.VMEM((P, C), jnp.float32)],
        compiler_params=pltpu.CompilerParams(
            dimension_semantics=("parallel",)),
    )(*window, x_flat)


# ----------------------------------------------------------------------------
# Glue: PyTorch-exact bilinear resize (align_corners=False), NHWC, separable.
# TODO(synk): fuse this resize into the maxfilt kernel (scalar-prefetched
# h0/h1/w0/w1/frac tables + row gathers) to remove the extra HBM round trip.
# ----------------------------------------------------------------------------
def bilinear_resize_nhwc(x, out_h, out_w):
    N, in_h, in_w, C = x.shape

    def src_idx(out_size, in_size):
        scale = in_size / out_size
        idx = (jnp.arange(out_size, dtype=jnp.float32) + 0.5) * scale - 0.5
        idx = jnp.maximum(idx, 0.0)
        i0 = jnp.minimum(jnp.floor(idx).astype(jnp.int32), in_size - 1)
        i1 = jnp.minimum(i0 + 1, in_size - 1)
        return i0, i1, idx - i0.astype(jnp.float32)

    h0, h1, hf = src_idx(out_h, in_h)
    w0, w1, wf = src_idx(out_w, in_w)
    hf = hf[None, :, None, None]
    wf = wf[None, None, :, None]
    # Separable: interpolate along H first (gathers at in_w width), then W.
    rows = x[:, h0] * (1.0 - hf) + x[:, h1] * hf                 # (N, out_h, in_w, C)
    return rows[:, :, w0] * (1.0 - wf) + rows[:, :, w1] * wf     # (N, out_h, out_w, C)


# ----------------------------------------------------------------------------
# Full forward (mirrors MaxFiltering.forward)
# ----------------------------------------------------------------------------
def max_filtering_forward(inputs, conv_w, conv_b):
    # inputs: list of NCHW arrays; conv_w: (C, C, 3, 3); conv_b: (C,)
    assert MARGIN == 1, "cross-level max collapse hard-codes tau=2"
    L = len(inputs)
    N, C = int(inputs[0].shape[0]), int(inputs[0].shape[1])
    shapes = [(int(x.shape[2]), int(x.shape[3])) for x in inputs]

    # One layout change in / out; everything in between stays channels-last.
    x_nhwc = [jnp.transpose(x, (0, 2, 3, 1)).astype(jnp.float32) for x in inputs]
    w_taps = jnp.transpose(conv_w, (2, 3, 1, 0)).reshape(KS * KS, C, C)
    b_row = conv_b.reshape(1, C).astype(jnp.float32)

    feats = []
    for x, (H, W) in zip(x_nhwc, shapes):
        f = conv3x3_pallas(x.reshape(N, H * W, C), w_taps, b_row, H, W)
        feats.append(f.reshape(N, H, W, C))

    outs = []
    for l in range(L):
        H, W = shapes[l]
        window = []
        for k in range(max(0, l - MARGIN), min(L, l + MARGIN + 1)):
            f = feats[k] if k == l else bilinear_resize_nhwc(feats[k], H, W)
            window.append(f.reshape(N, H * W, C))
        o = maxfilt_pallas(window, x_nhwc[l].reshape(N, H * W, C), H, W)
        outs.append(jnp.transpose(o.reshape(N, H, W, C), (0, 3, 1, 2)))
    return outs


# ----------------------------------------------------------------------------
# Pure-JAX reference (explicit padding, NCHW) — self-check only.
# ----------------------------------------------------------------------------
def _ref_forward(inputs, conv_w, conv_b):
    feats = []
    for x in inputs:
        N, C, H, W = x.shape
        xp = jnp.pad(x, ((0, 0), (0, 0), (1, 1), (1, 1)))
        acc = jnp.broadcast_to(conv_b[None, :, None, None], (N, C, H, W))
        for kh in range(KS):
            for kw in range(KS):
                acc = acc + jnp.einsum(
                    "nchw,oc->nohw", xp[:, :, kh:kh + H, kw:kw + W],
                    conv_w[:, :, kh, kw], precision=lax.Precision.HIGHEST)
        feats.append(acc)

    outs = []
    L = len(feats)
    for l in range(L):
        N, C, H, W = feats[l].shape
        window = []
        for k in range(max(0, l - MARGIN), min(L, l + MARGIN + 1)):
            f = feats[k]
            if k != l:
                f = jnp.transpose(
                    bilinear_resize_nhwc(jnp.transpose(f, (0, 2, 3, 1)), H, W),
                    (0, 3, 1, 2))
            window.append(f)
        m = window[0]
        for f in window[1:]:
            m = jnp.maximum(m, f)
        mp = jnp.pad(m, ((0, 0), (0, 0), (1, 1), (1, 1)),
                     constant_values=-jnp.inf)
        pooled = m
        for kh in range(KS):
            for kw in range(KS):
                pooled = jnp.maximum(pooled, mp[:, :, kh:kh + H, kw:kw + W])
        outs.append(jnp.maximum(pooled + inputs[l], 0.0))
    return outs


if __name__ == "__main__":
    key = jax.random.PRNGKey(0)
    kx0, kx1, kx2, kw, kb = jax.random.split(key, 5)
    N, C = 2, 4
    sizes = [16, 8, 4]                       # 3 FPN-like pyramid levels
    inputs = [
        jax.random.normal(kx0, (N, C, sizes[0], sizes[0]), jnp.float32),
        jax.random.normal(kx1, (N, C, sizes[1], sizes[1]), jnp.float32),
        jax.random.normal(kx2, (N, C, sizes[2], sizes[2]), jnp.float32),
    ]
    conv_w = jax.random.normal(kw, (C, C, 3, 3), jnp.float32) * 0.1
    conv_b = jax.random.normal(kb, (C,), jnp.float32) * 0.1

    outs = max_filtering_forward(inputs, conv_w, conv_b)
    for o in outs:
        jax.block_until_ready(o)
    assert all(o.shape == x.shape and o.dtype == jnp.float32
               for o, x in zip(outs, inputs))

    # numerical self-check against the pure-JAX reference
    refs = _ref_forward(inputs, conv_w, conv_b)
    for o, r in zip(outs, refs):
        err = float(jnp.max(jnp.abs(o - r)))
        assert err < 5e-2, f"max abs error {err}"

    print("KERNEL_OK")
</pallas_src>

<mosaic_0001>
module attributes {stable_mosaic.version = 11 : i64} {
  func.func @_conv3x3_kernel(%arg0: i32, %arg1: memref<1x256x4xf32, #tpu.memory_space<vmem>>, %arg2: memref<9x4x4xf32, #tpu.memory_space<vmem>>, %arg3: memref<1x4xf32, #tpu.memory_space<vmem>>, %arg4: memref<1x256x4xf32, #tpu.memory_space<vmem>>, %arg5: memref<290x4xf32, #tpu.memory_space<vmem>>) attributes {dimension_semantics = [#tpu.dimension_semantics<parallel>], iteration_bounds = array<i64: 2>, scalar_prefetch = 0 : i64, scratch_operands = 1 : i64, tpu.core_type = #tpu.core_type<tc>, window_params = [{transform_indices = @transform_0, window_bounds = array<i64: 1, 256, 4>}, {pipeline_mode = #tpu.pipeline_mode<synchronous>, transform_indices = @transform_1, window_bounds = array<i64: 9, 4, 4>}, {pipeline_mode = #tpu.pipeline_mode<synchronous>, transform_indices = @transform_2, window_bounds = array<i64: 1, 4>}, {transform_indices = @transform_3, window_bounds = array<i64: 1, 256, 4>}]} {
    %cst = arith.constant 0.000000e+00 : f32
    %0 = vector.broadcast %cst : f32 to vector<17x4xf32>
    %c0 = arith.constant 0 : index
    %c0_0 = arith.constant 0 : index
    %1 = vector.load %arg5[%c0, %c0_0] : memref<290x4xf32, #tpu.memory_space<vmem>>, vector<17x4xf32>
    tpu.vector_store %arg5[%c0, %c0_0], %0 {strides = array<i32>} : memref<290x4xf32, #tpu.memory_space<vmem>>, vector<17x4xf32>,
    %cst_1 = arith.constant 0.000000e+00 : f32
    %2 = vector.broadcast %cst_1 : f32 to vector<17x4xf32>
    %c273 = arith.constant 273 : index
    %c0_2 = arith.constant 0 : index
    %3 = vector.load %arg5[%c273, %c0_2] : memref<290x4xf32, #tpu.memory_space<vmem>>, vector<17x4xf32>
    tpu.vector_store %arg5[%c273, %c0_2], %2 {strides = array<i32>} : memref<290x4xf32, #tpu.memory_space<vmem>>, vector<17x4xf32>,
    %c0_3 = arith.constant 0 : index
    %c0_4 = arith.constant 0 : index
    %c0_5 = arith.constant 0 : index
    %4 = vector.load %arg1[%c0_3, %c0_4, %c0_5] : memref<1x256x4xf32, #tpu.memory_space<vmem>>, vector<1x256x4xf32>
    %5 = vector.shape_cast %4 : vector<1x256x4xf32> to vector<256x4xf32>
    %c17 = arith.constant 17 : index
    %c0_6 = arith.constant 0 : index
    %6 = vector.load %arg5[%c17, %c0_6] : memref<290x4xf32, #tpu.memory_space<vmem>>, vector<256x4xf32>
    tpu.vector_store %arg5[%c17, %c0_6], %5 {strides = array<i32>} : memref<290x4xf32, #tpu.memory_space<vmem>>, vector<256x4xf32>,
    %7 = tpu.iota {dimensions = array<i32: 0>} : vector<256x4xi32>
    %c16_i32 = arith.constant 16 : i32
    %c0_i32 = arith.constant 0 : i32
    %8 = arith.cmpi eq, %c16_i32, %c0_i32 : i32
    %c1_i32 = arith.constant 1 : i32
    %9 = arith.select %8, %c1_i32, %c16_i32 : i32
    %10 = vector.broadcast %9 : i32 to vector<256x4xi32>
    %11 = arith.remsi %7, %10 : vector<256x4xi32>
    %c0_i32_7 = arith.constant 0 : i32
    %12 = vector.broadcast %c0_i32_7 : i32 to vector<256x4xi32>
    %13 = arith.cmpi ne, %11, %12 : vector<256x4xi32>
    %c0_i32_8 = arith.constant 0 : i32
    %14 = vector.broadcast %c0_i32_8 : i32 to vector<256x4xi32>
    %15 = arith.cmpi slt, %11, %14 : vector<256x4xi32>
    %c0_i32_9 = arith.constant 0 : i32
    %16 = arith.cmpi slt, %9, %c0_i32_9 : i32
    %17 = vector.broadcast %16 : i1 to vector<256x4xi1>
    %18 = vector.broadcast %17 : vector<256x4xi1> to vector<256x4xi1>
    %19 = arith.xori %15, %18 : vector<256x4xi1>
    %20 = arith.andi %19, %13 : vector<256x4xi1>
    %21 = vector.broadcast %9 : i32 to vector<256x4xi32>
    %22 = arith.addi %11, %21 : vector<256x4xi32>
    %23 = arith.select %20, %22, %11 : vector<256x4xi1>, vector<256x4xi32>
    %c0_i32_10 = arith.constant 0 : i32
    %24 = vector.broadcast %c0_i32_10 : i32 to vector<256x4xi32>
    %25 = arith.cmpi ne, %23, %24 : vector<256x4xi32>
    %c15_i32 = arith.constant 15 : i32
    %26 = vector.broadcast %c15_i32 : i32 to vector<256x4xi32>
    %27 = arith.cmpi ne, %23, %26 : vector<256x4xi32>
    %cst_11 = arith.constant 0.000000e+00 : f32
    %28 = vector.broadcast %cst_11 : f32 to vector<256x4xf32>
    %c0_12 = arith.constant 0 : index
    %c0_13 = arith.constant 0 : index
    %29 = vector.load %arg5[%c0_12, %c0_13] : memref<290x4xf32, #tpu.memory_space<vmem>>, vector<256x4xf32>
    %cst_14 = arith.constant 0.000000e+00 : f32
    %30 = vector.broadcast %cst_14 : f32 to vector<256x4xf32>
    %31 = arith.select %25, %29, %30 : vector<256x4xi1>, vector<256x4xf32>
    %c0_15 = arith.constant 0 : index
    %c0_16 = arith.constant 0 : index
    %c0_17 = arith.constant 0 : index
    %32 = vector.load %arg2[%c0_15, %c0_16, %c0_17] : memref<9x4x4xf32, #tpu.memory_space<vmem>>, vector<1x4x4xf32>
    %33 = vector.shape_cast %32 : vector<1x4x4xf32> to vector<4x4xf32>
    %cst_18 = arith.constant dense<0.000000e+00> : vector<256x4xf32>
    %34 = tpu.matmul %31, %33, %cst_18 {dimension_numbers = #tpu.dot_dimension_numbers<[1], [0], [0], [1], [0, 0, 1, 1], [], []>} : vector<256x4xf32>, vector<4x4xf32>, vector<256x4xf32> -> vector<256x4xf32>
    %35 = arith.addf %28, %34 : vector<256x4xf32>
    %c1 = arith.constant 1 : index
    %c0_19 = arith.constant 0 : index
    %36 = vector.load %arg5[%c1, %c0_19] : memref<290x4xf32, #tpu.memory_space<vmem>>, vector<256x4xf32>
    %c1_20 = arith.constant 1 : index
    %c0_21 = arith.constant 0 : index
    %c0_22 = arith.constant 0 : index
    %37 = vector.load %arg2[%c1_20, %c0_21, %c0_22] : memref<9x4x4xf32, #tpu.memory_space<vmem>>, vector<1x4x4xf32>
    %38 = vector.shape_cast %37 : vector<1x4x4xf32> to vector<4x4xf32>
    %cst_23 = arith.constant dense<0.000000e+00> : vector<256x4xf32>
    %39 = tpu.matmul %36, %38, %cst_23 {dimension_numbers = #tpu.dot_dimension_numbers<[1], [0], [0], [1], [0, 0, 1, 1], [], []>} : vector<256x4xf32>, vector<4x4xf32>, vector<256x4xf32> -> vector<256x4xf32>
    %40 = arith.addf %35, %39 : vector<256x4xf32>
    %c2 = arith.constant 2 : index
    %c0_24 = arith.constant 0 : index
    %41 = vector.load %arg5[%c2, %c0_24] : memref<290x4xf32, #tpu.memory_space<vmem>>, vector<256x4xf32>
    %cst_25 = arith.constant 0.000000e+00 : f32
    %42 = vector.broadcast %cst_25 : f32 to vector<256x4xf32>
    %43 = arith.select %27, %41, %42 : vector<256x4xi1>, vector<256x4xf32>
    %c2_26 = arith.constant 2 : index
    %c0_27 = arith.constant 0 : index
    %c0_28 = arith.constant 0 : index
    %44 = vector.load %arg2[%c2_26, %c0_27, %c0_28] : memref<9x4x4xf32, #tpu.memory_space<vmem>>, vector<1x4x4xf32>
    %45 = vector.shape_cast %44 : vector<1x4x4xf32> to vector<4x4xf32>
    %cst_29 = arith.constant dense<0.000000e+00> : vector<256x4xf32>
    %46 = tpu.matmul %43, %45, %cst_29 {dimension_numbers = #tpu.dot_dimension_numbers<[1], [0], [0], [1], [0, 0, 1, 1], [], []>} : vector<256x4xf32>, vector<4x4xf32>, vector<256x4xf32> -> vector<256x4xf32>
    %47 = arith.addf %40, %46 : vector<256x4xf32>
    %c16 = arith.constant 16 : index
    %c0_30 = arith.constant 0 : index
    %48 = vector.load %arg5[%c16, %c0_30] : memref<290x4xf32, #tpu.memory_space<vmem>>, vector<256x4xf32>
    %cst_31 = arith.constant 0.000000e+00 : f32
    %49 = vector.broadcast %cst_31 : f32 to vector<256x4xf32>
    %50 = arith.select %25, %48, %49 : vector<256x4xi1>, vector<256x4xf32>
    %c3 = arith.constant 3 : index
    %c0_32 = arith.constant 0 : index
    %c0_33 = arith.constant 0 : index
    %51 = vector.load %arg2[%c3, %c0_32, %c0_33] : memref<9x4x4xf32, #tpu.memory_space<vmem>>, vector<1x4x4xf32>
    %52 = vector.shape_cast %51 : vector<1x4x4xf32> to vector<4x4xf32>
    %cst_34 = arith.constant dense<0.000000e+00> : vector<256x4xf32>
    %53 = tpu.matmul %50, %52, %cst_34 {dimension_numbers = #tpu.dot_dimension_numbers<[1], [0], [0], [1], [0, 0, 1, 1], [], []>} : vector<256x4xf32>, vector<4x4xf32>, vector<256x4xf32> -> vector<256x4xf32>
    %54 = arith.addf %47, %53 : vector<256x4xf32>
    %c17_35 = arith.constant 17 : index
    %c0_36 = arith.constant 0 : index
    %55 = vector.load %arg5[%c17_35, %c0_36] : memref<290x4xf32, #tpu.memory_space<vmem>>, vector<256x4xf32>
    %c4 = arith.constant 4 : index
    %c0_37 = arith.constant 0 : index
    %c0_38 = arith.constant 0 : index
    %56 = vector.load %arg2[%c4, %c0_37, %c0_38] : memref<9x4x4xf32, #tpu.memory_space<vmem>>, vector<1x4x4xf32>
    %57 = vector.shape_cast %56 : vector<1x4x4xf32> to vector<4x4xf32>
    %cst_39 = arith.constant dense<0.000000e+00> : vector<256x4xf32>
    %58 = tpu.matmul %55, %57, %cst_39 {dimension_numbers = #tpu.dot_dimension_numbers<[1], [0], [0], [1], [0, 0, 1, 1], [], []>} : vector<256x4xf32>, vector<4x4xf32>, vector<256x4xf32> -> vector<256x4xf32>
    %59 = arith.addf %54, %58 : vector<256x4xf32>
    %c18 = arith.constant 18 : index
    %c0_40 = arith.constant 0 : index
    %60 = vector.load %arg5[%c18, %c0_40] : memref<290x4xf32, #tpu.memory_space<vmem>>, vector<256x4xf32>
    %cst_41 = arith.constant 0.000000e+00 : f32
    %61 = vector.broadcast %cst_41 : f32 to vector<256x4xf32>
    %62 = arith.select %27, %60, %61 : vector<256x4xi1>, vector<256x4xf32>
    %c5 = arith.constant 5 : index
    %c0_42 = arith.constant 0 : index
    %c0_43 = arith.constant 0 : index
    %63 = vector.load %arg2[%c5, %c0_42, %c0_43] : memref<9x4x4xf32, #tpu.memory_space<vmem>>, vector<1x4x4xf32>
    %64 = vector.shape_cast %63 : vector<1x4x4xf32> to vector<4x4xf32>
    %cst_44 = arith.constant dense<0.000000e+00> : vector<256x4xf32>
    %65 = tpu.matmul %62, %64, %cst_44 {dimension_numbers = #tpu.dot_dimension_numbers<[1], [0], [0], [1], [0, 0, 1, 1], [], []>} : vector<256x4xf32>, vector<4x4xf32>, vector<256x4xf32> -> vector<256x4xf32>
    %66 = arith.addf %59, %65 : vector<256x4xf32>
    %c32 = arith.constant 32 : index
    %c0_45 = arith.constant 0 : index
    %67 = vector.load %arg5[%c32, %c0_45] : memref<290x4xf32, #tpu.memory_space<vmem>>, vector<256x4xf32>
    %cst_46 = arith.constant 0.000000e+00 : f32
    %68 = vector.broadcast %cst_46 : f32 to vector<256x4xf32>
    %69 = arith.select %25, %67, %68 : vector<256x4xi1>, vector<256x4xf32>
    %c6 = arith.constant 6 : index
    %c0_47 = arith.constant 0 : index
    %c0_48 = arith.constant 0 : index
    %70 = vector.load %arg2[%c6, %c0_47, %c0_48] : memref<9x4x4xf32, #tpu.memory_space<vmem>>, vector<1x4x4xf32>
    %71 = vector.shape_cast %70 : vector<1x4x4xf32> to vector<4x4xf32>
    %cst_49 = arith.constant dense<0.000000e+00> : vector<256x4xf32>
    %72 = tpu.matmul %69, %71, %cst_49 {dimension_numbers = #tpu.dot_dimension_numbers<[1], [0], [0], [1], [0, 0, 1, 1], [], []>} : vector<256x4xf32>, vector<4x4xf32>, vector<256x4xf32> -> vector<256x4xf32>
    %73 = arith.addf %66, %72 : vector<256x4xf32>
    %c33 = arith.constant 33 : index
    %c0_50 = arith.constant 0 : index
    %74 = vector.load %arg5[%c33, %c0_50] : memref<290x4xf32, #tpu.memory_space<vmem>>, vector<256x4xf32>
    %c7 = arith.constant 7 : index
    %c0_51 = arith.constant 0 : index
    %c0_52 = arith.constant 0 : index
    %75 = vector.load %arg2[%c7, %c0_51, %c0_52] : memref<9x4x4xf32, #tpu.memory_space<vmem>>, vector<1x4x4xf32>
    %76 = vector.shape_cast %75 : vector<1x4x4xf32> to vector<4x4xf32>
    %cst_53 = arith.constant dense<0.000000e+00> : vector<256x4xf32>
    %77 = tpu.matmul %74, %76, %cst_53 {dimension_numbers = #tpu.dot_dimension_numbers<[1], [0], [0], [1], [0, 0, 1, 1], [], []>} : vector<256x4xf32>, vector<4x4xf32>, vector<256x4xf32> -> vector<256x4xf32>
    %78 = arith.addf %73, %77 : vector<256x4xf32>
    %c34 = arith.constant 34 : index
    %c0_54 = arith.constant 0 : index
    %79 = vector.load %arg5[%c34, %c0_54] : memref<290x4xf32, #tpu.memory_space<vmem>>, vector<256x4xf32>
    %cst_55 = arith.constant 0.000000e+00 : f32
    %80 = vector.broadcast %cst_55 : f32 to vector<256x4xf32>
    %81 = arith.select %27, %79, %80 : vector<256x4xi1>, vector<256x4xf32>
    %c8 = arith.constant 8 : index
    %c0_56 = arith.constant 0 : index
    %c0_57 = arith.constant 0 : index
    %82 = vector.load %arg2[%c8, %c0_56, %c0_57] : memref<9x4x4xf32, #tpu.memory_space<vmem>>, vector<1x4x4xf32>
    %83 = vector.shape_cast %82 : vector<1x4x4xf32> to vector<4x4xf32>
    %cst_58 = arith.constant dense<0.000000e+00> : vector<256x4xf32>
    %84 = tpu.matmul %81, %83, %cst_58 {dimension_numbers = #tpu.dot_dimension_numbers<[1], [0], [0], [1], [0, 0, 1, 1], [], []>} : vector<256x4xf32>, vector<4x4xf32>, vector<256x4xf32> -> vector<256x4xf32>
    %85 = arith.addf %78, %84 : vector<256x4xf32>
    %c0_59 = arith.constant 0 : index
    %c0_60 = arith.constant 0 : index
    %86 = vector.load %arg3[%c0_59, %c0_60] : memref<1x4xf32, #tpu.memory_space<vmem>>, vector<1x4xf32>
    %87 = vector.broadcast %86 : vector<1x4xf32> to vector<256x4xf32>
    %88 = arith.addf %85, %87 : vector<256x4xf32>
    %c0_61 = arith.constant 0 : index
    %c0_62 = arith.constant 0 : index
    %c0_63 = arith.constant 0 : index
    %89 = vector.load %arg4[%c0_61, %c0_62, %c0_63] : memref<1x256x4xf32, #tpu.memory_space<vmem>>, vector<1x256x4xf32>
    %90 = vector.shape_cast %89 : vector<1x256x4xf32> to vector<256x4xf32>
    %91 = vector.shape_cast %88 : vector<256x4xf32> to vector<1x256x4xf32>
    tpu.vector_store %arg4[%c0_61, %c0_62, %c0_63], %91 {strides = array<i32>} : memref<1x256x4xf32, #tpu.memory_space<vmem>>, vector<1x256x4xf32>,
    return
  }
  func.func @transform_0(%arg0: i32) -> (i32, i32, i32) {
    %c0_i32 = arith.constant 0 : i32
    %c0_i32_0 = arith.constant 0 : i32
    %c0_i32_1 = arith.constant 0 : i32
    return %arg0, %c0_i32, %c0_i32_0 : i32, i32, i32
  }
  func.func @transform_1(%arg0: i32) -> (i32, i32, i32) {
    %c0_i32 = arith.constant 0 : i32
    %c0_i32_0 = arith.constant 0 : i32
    %c0_i32_1 = arith.constant 0 : i32
    %c0_i32_2 = arith.constant 0 : i32
    return %c0_i32, %c0_i32_0, %c0_i32_1 : i32, i32, i32
  }
  func.func @transform_2(%arg0: i32) -> (i32, i32) {
    %c0_i32 = arith.constant 0 : i32
    %c0_i32_0 = arith.constant 0 : i32
    %c0_i32_1 = arith.constant 0 : i32
    return %c0_i32, %c0_i32_0 : i32, i32
  }
  func.func @transform_3(%arg0: i32) -> (i32, i32, i32) {
    %c0_i32 = arith.constant 0 : i32
    %c0_i32_0 = arith.constant 0 : i32
    %c0_i32_1 = arith.constant 0 : i32
    return %arg0, %c0_i32, %c0_i32_0 : i32, i32, i32
  }
}

</mosaic_0001>

<llo_original>
// kernel: tpu_custom_call.1
$region0: #{tpu_custom_call.1}
  #allocation0 [shape = 'u32[]', space=smem, size = 0x4, offset = 0x4, fixed_abs, tag = 'smem constant byte address 0x4 - core index']
  #allocation1 [shape = 'u32[144,128]{1,0:T(1,128)}', space=vmem, size = 0x12000, scoped, tag = 'internal scratch']
  #allocation2 [shape = 'f32[290,4]{1,0:T(8,128)}', space=vmem, size = 0x25000, scoped, tag = 'scratch operand']
  %s0 = inlined_call_operand.vmem [shape: f32[2,256,4], index: 0, kind: input, shape index: {}]
  %s1 = inlined_call_operand.vmem [shape: f32[9,4,4], index: 1, kind: input, shape index: {}]
  %s2 = inlined_call_operand.vmem [shape: f32[1,4], index: 2, kind: input, shape index: {}]
  %s3 = inlined_call_operand.vmem [shape: f32[2,256,4], index: 3, kind: output, shape index: {}]
  %s4 = sld [smem:[#allocation0]]
  $region45: #{tpu_custom_call.1} parent=0
    _
  %s6 = ssub.s32 1, %s4
  %s7 = scalar_select 0, %s6, %s4
  loop: start=0, step=1, limit=4
  $region2: #{tpu_custom_call.1} parent=0 // loop_pre_header
    _
  $region3: #{tpu_custom_call.1} parent=0 // loop_header
    %s9 = sphi 0, %s13
    %p10 = scmp.ge.s32.totalorder %s9, 4
    %s19 = sphi 0, %s21
    %s22 = sphi 0, %s19
    %s23 = sphi 0, %s22
    %s39 = sphi 0, %s23
    %s43 = sphi 0, %s43
    %s45 = sphi 0, %s43
    %s46 = sphi 0, %s45
    %s60 = sphi 0, %s46
    %s64 = sphi 0, %s64
    %s66 = sphi 0, %s64
    %s67 = sphi 0, %s66
    %s81 = sphi 0, %s67
    %s87 = sphi 0, %s89
    %s90 = sphi 0, %s87
    %s91 = sphi 0, %s90
    %s107 = sphi 0, %s91
  $region4: #{tpu_custom_call.1} parent=0 // loop_header_branch
    %12 = sbr.rel (%p10) target = $region8
  $region5: #{tpu_custom_call.1} parent=0 // loop_body
    %s14 = ssub.s32 %s9, 1
    %s15 = ssub.s32 %s9, 2
    %s16 = sadd.s32 %s9, 1
    %s17 = ssub.s32 %s9, %s16
    %p18 = scmp.eq.s32.totalorder %s17, 0
    %s20 = sadd.s32 %s19, 1
    %s21 = scalar_select %p18, %s19, %s20
    %p24 = pneg %p18
    %p25 = scmp.eq.s32.totalorder %s9, 1
    %p26 = por %p24, %p25
    %p27 = scmp.ne.s32.totalorder %s19, %s22
    %p28 = scmp.eq.s32.totalorder %s9, 0
    %p29 = por %p27, %p28
    %p30 = scmp.ne.s32.totalorder %s19, %s22
    %p31 = scmp.eq.s32.totalorder %s14, 1
    %p32 = por %p30, %p31
    %p33 = scmp.ne.s32.totalorder %s22, %s23
    %p34 = scmp.eq.s32.totalorder %s14, 0
    %p35 = por %p33, %p34
    %p36 = scmp.ne.s32.totalorder %s22, %s23
    %p37 = scmp.eq.s32.totalorder %s15, 1
    %p38 = por %p36, %p37
    %p40 = scmp.ne.s32.totalorder %s23, %s39
    %p41 = scmp.eq.s32.totalorder %s15, 0
    %p42 = por %p40, %p41
    %s44 = sadd.s32 %s43, 1
    %p47 = scmp.eq.s32.totalorder %s9, 1
    %p48 = scmp.ne.s32.totalorder %s43, %s45
    %p49 = scmp.eq.s32.totalorder %s9, 0
    %p50 = por %p48, %p49
    %p51 = scmp.ne.s32.totalorder %s43, %s45
    %p52 = scmp.eq.s32.totalorder %s14, 1
    %p53 = por %p51, %p52
    %p54 = scmp.ne.s32.totalorder %s45, %s46
    %p55 = scmp.eq.s32.totalorder %s14, 0
    %p56 = por %p54, %p55
    %p57 = scmp.ne.s32.totalorder %s45, %s46
    %p58 = scmp.eq.s32.totalorder %s15, 1
    %p59 = por %p57, %p58
    %p61 = scmp.ne.s32.totalorder %s46, %s60
    %p62 = scmp.eq.s32.totalorder %s15, 0
    %p63 = por %p61, %p62
    %s65 = sadd.s32 %s64, 1
    %p68 = scmp.eq.s32.totalorder %s9, 1
    %p69 = scmp.ne.s32.totalorder %s64, %s66
    %p70 = scmp.eq.s32.totalorder %s9, 0
    %p71 = por %p69, %p70
    %p72 = scmp.ne.s32.totalorder %s64, %s66
    %p73 = scmp.eq.s32.totalorder %s14, 1
    %p74 = por %p72, %p73
    %p75 = scmp.ne.s32.totalorder %s66, %s67
    %p76 = scmp.eq.s32.totalorder %s14, 0
    %p77 = por %p75, %p76
    %p78 = scmp.ne.s32.totalorder %s66, %s67
    %p79 = scmp.eq.s32.totalorder %s15, 1
    %p80 = por %p78, %p79
    %p82 = scmp.ne.s32.totalorder %s67, %s81
    %p83 = scmp.eq.s32.totalorder %s15, 0
    %p84 = por %p82, %p83
    %s85 = ssub.s32 %s9, %s16
    %p86 = scmp.eq.s32.totalorder %s85, 0
    %s88 = sadd.s32 %s87, 1
    %s89 = scalar_select %p86, %s87, %s88
    %p92 = pneg %p86
    %p93 = scmp.eq.s32.totalorder %s9, 1
    %p94 = por %p92, %p93
    %p95 = scmp.ne.s32.totalorder %s87, %s90
    %p96 = scmp.eq.s32.totalorder %s9, 0
    %p97 = por %p95, %p96
    %p98 = scmp.ne.s32.totalorder %s87, %s90
    %p99 = scmp.eq.s32.totalorder %s14, 1
    %p100 = por %p98, %p99
    %p101 = scmp.ne.s32.totalorder %s90, %s91
    %p102 = scmp.eq.s32.totalorder %s14, 0
    %p103 = por %p101, %p102
    %p104 = scmp.ne.s32.totalorder %s90, %s91
    %p105 = scmp.eq.s32.totalorder %s15, 1
    %p106 = por %p104, %p105
    %p108 = scmp.ne.s32.totalorder %s91, %s107
    %p109 = scmp.eq.s32.totalorder %s15, 0
    %p110 = por %p108, %p109
    %p111 = scmp.le.s32.totalorder 1, %s9
    %p112 = scmp.lt.s32.totalorder %s9, 3
    %p113 = pnand %p111, %p112
    %p114 = pneg %p113
    // Predicated region
    $region9: #{tpu_custom_call.1} parent=5 // pred_check
      _
    $region10: #{tpu_custom_call.1} parent=5 // pred_check_branch
      %116 = sbr.rel (%p113) target = $region12
    $region11: #{tpu_custom_call.1} parent=5 // pred_region
      %s117 = ssub.s32 %s9, 1
      // Predicated region
      $region13: #{tpu_custom_call.1} parent=11 // pred_check
        %p118 = pneg %p56
      $region14: #{tpu_custom_call.1} parent=11 // pred_check_branch
        %120 = sbr.rel (%p118) target = $region16
      $region15: #{tpu_custom_call.1} parent=11 // pred_region
        _
      $region16: #{tpu_custom_call.1} parent=11 // pred_fallthru
        _
      // Predicated region
      $region17: #{tpu_custom_call.1} parent=11 // pred_check
        %p121 = pneg %p77
      $region18: #{tpu_custom_call.1} parent=11 // pred_check_branch
        %123 = sbr.rel (%p121) target = $region20
      $region19: #{tpu_custom_call.1} parent=11 // pred_region
        _
      $region20: #{tpu_custom_call.1} parent=11 // pred_fallthru
        _
    $region12: #{tpu_custom_call.1} parent=5 // pred_fallthru
      _
    %p124 = scmp.lt.s32.totalorder %s9, 2
    // Predicated region
    $region21: #{tpu_custom_call.1} parent=5 // pred_check
      %p125 = pneg %p124
    $region22: #{tpu_custom_call.1} parent=5 // pred_check_branch
      %127 = sbr.rel (%p125) target = $region24
    $region23: #{tpu_custom_call.1} parent=5 // pred_region
      // Predicated region
      $region25: #{tpu_custom_call.1} parent=23 // pred_check
        %p128 = pneg %p29
      $region26: #{tpu_custom_call.1} parent=23 // pred_check_branch
        %130 = sbr.rel (%p128) target = $region28
      $region27: #{tpu_custom_call.1} parent=23 // pred_region
        %p131 = scmp.lt.s32.totalorder %s9, 1
        %s132 = scalar_select %p131, %s9, 1
        %s133 = smul.addr %s132, 32
        %s134 = smul.addr %s133, 8
        %s135 = scalar_lea.vmem %s0, %s134
      $region28: #{tpu_custom_call.1} parent=23 // pred_fallthru
        _
    $region24: #{tpu_custom_call.1} parent=5 // pred_fallthru
      _
    %p136 = scmp.le.s32.totalorder 1, %s9
    %p137 = scmp.lt.s32.totalorder %s9, 3
    %p138 = pnand %p136, %p137
    %p139 = pneg %p138
    // Predicated region
    $region29: #{tpu_custom_call.1} parent=5 // pred_check
      _
    $region30: #{tpu_custom_call.1} parent=5 // pred_check_branch
      %141 = sbr.rel (%p138) target = $region32
    $region31: #{tpu_custom_call.1} parent=5 // pred_region
      %s142 = ssub.s32 %s9, 1
      %p143 = scmp.lt.s32.totalorder %s14, 1
      %s144 = scalar_select %p143, %s14, 1
      %s145 = smul.addr %s144, 32
      %s146 = smul.addr %s145, 8
      %s147 = scalar_lea.vmem %s0, %s146
      %p148 = pneg %p35
      %p149 = pneg %p32
      %p150 = pneg %p56
      %p151 = pneg %p53
      %p152 = pneg %p77
      %p153 = pneg %p74
      %p154 = pneg %p103
      %p155 = pneg %p100
      %p156 = scmp.lt.s32.totalorder %s14, 1
      %s157 = scalar_select %p156, %s14, 1
      %s158 = smul.addr %s157, 32
      %s159 = smul.addr %s158, 8
      %s160 = scalar_lea.vmem %s3, %s159
      %p161 = scmp.lt.s32.totalorder %s14, 1
      %s162 = scalar_select %p161, %s14, 1
      %s163 = smul.addr %s162, 32
      %s164 = smul.addr %s163, 8
      %s165 = scalar_lea.vmem %s0, %s164
      %p166 = scmp.lt.s32.totalorder %s14, 1
      %s167 = scalar_select %p166, %s14, 1
      %s168 = smul.addr %s167, 32
      %s169 = smul.addr %s168, 8
      %s170 = scalar_lea.vmem %s3, %s169
      %vm171 = vcmask 31744
      %172 = vst.msk [vmem:[#allocation2] sm:$0xff] %vm171, 0.0
      %173 = vst.msk [vmem:[#allocation2 + $0x8] sm:$0xff] %vm171, 0.0
      %vm174 = vcmask 24576
      %175 = vst.msk [vmem:[#allocation2 + $0x10] sm:$0x1] %vm174, 0.0
      %176 = vst.msk [vmem:[#allocation2 + $0x111] sm:$0xff] %vm171, 0.0
      %177 = vst.msk [vmem:[#allocation2 + $0x119] sm:$0xff] %vm171, 0.0
      %178 = vst.msk [vmem:[#allocation2 + $0x121] sm:$0x1] %vm174, 0.0
      %v179 = vld [vmem:[%s165] sm:$0xff]
      %v180 = vld [vmem:[%s165 + $0x8] sm:$0xff]
      %v181 = vld [vmem:[%s165 + $0x10] sm:$0xff]
      %v182 = vld [vmem:[%s165 + $0x18] sm:$0xff]
      %v183 = vld [vmem:[%s165 + $0x20] sm:$0xff]
      %v184 = vld [vmem:[%s165 + $0x28] sm:$0xff]
      %v185 = vld [vmem:[%s165 + $0x30] sm:$0xff]
      %v186 = vld [vmem:[%s165 + $0x38] sm:$0xff]
      %v187 = vld [vmem:[%s165 + $0x40] sm:$0xff]
      %v188 = vld [vmem:[%s165 + $0x48] sm:$0xff]
      %v189 = vld [vmem:[%s165 + $0x50] sm:$0xff]
      %v190 = vld [vmem:[%s165 + $0x58] sm:$0xff]
      %v191 = vld [vmem:[%s165 + $0x60] sm:$0xff]
      %v192 = vld [vmem:[%s165 + $0x68] sm:$0xff]
      %v193 = vld [vmem:[%s165 + $0x70] sm:$0xff]
      %v194 = vld [vmem:[%s165 + $0x78] sm:$0xff]
      %v195 = vld [vmem:[%s165 + $0x80] sm:$0xff]
      %v196 = vld [vmem:[%s165 + $0x88] sm:$0xff]
      %v197 = vld [vmem:[%s165 + $0x90] sm:$0xff]
      %v198 = vld [vmem:[%s165 + $0x98] sm:$0xff]
      %v199 = vld [vmem:[%s165 + $0xa0] sm:$0xff]
      %v200 = vld [vmem:[%s165 + $0xa8] sm:$0xff]
      %v201 = vld [vmem:[%s165 + $0xb0] sm:$0xff]
      %v202 = vld [vmem:[%s165 + $0xb8] sm:$0xff]
      %v203 = vld [vmem:[%s165 + $0xc0] sm:$0xff]
      %v204 = vld [vmem:[%s165 + $0xc8] sm:$0xff]
      %v205 = vld [vmem:[%s165 + $0xd0] sm:$0xff]
      %v206 = vld [vmem:[%s165 + $0xd8] sm:$0xff]
      %v207 = vld [vmem:[%s165 + $0xe0] sm:$0xff]
      %v208 = vld [vmem:[%s165 + $0xe8] sm:$0xff]
      %v209 = vld [vmem:[%s165 + $0xf0] sm:$0xff]
      %v210 = vld [vmem:[%s165 + $0xf8] sm:$0xff]
      %211 = vst.msk [vmem:[#allocation2 + $0x11] sm:$0xff] %vm171, %v179
      %212 = vst.msk [vmem:[#allocation2 + $0x19] sm:$0xff] %vm171, %v180
      %213 = vst.msk [vmem:[#allocation2 + $0x21] sm:$0xff] %vm171, %v181
      %214 = vst.msk [vmem:[#allocation2 + $0x29] sm:$0xff] %vm171, %v182
      %215 = vst.msk [vmem:[#allocation2 + $0x31] sm:$0xff] %vm171, %v183
      %216 = vst.msk [vmem:[#allocation2 + $0x39] sm:$0xff] %vm171, %v184
      %217 = vst.msk [vmem:[#allocation2 + $0x41] sm:$0xff] %vm171, %v185
      %218 = vst.msk [vmem:[#allocation2 + $0x49] sm:$0xff] %vm171, %v186
      %219 = vst.msk [vmem:[#allocation2 + $0x51] sm:$0xff] %vm171, %v187
      %220 = vst.msk [vmem:[#allocation2 + $0x59] sm:$0xff] %vm171, %v188
      %221 = vst.msk [vmem:[#allocation2 + $0x61] sm:$0xff] %vm171, %v189
      %222 = vst.msk [vmem:[#allocation2 + $0x69] sm:$0xff] %vm171, %v190
      %223 = vst.msk [vmem:[#allocation2 + $0x71] sm:$0xff] %vm171, %v191
      %224 = vst.msk [vmem:[#allocation2 + $0x79] sm:$0xff] %vm171, %v192
      %225 = vst.msk [vmem:[#allocation2 + $0x81] sm:$0xff] %vm171, %v193
      %226 = vst.msk [vmem:[#allocation2 + $0x89] sm:$0xff] %vm171, %v194
      %227 = vst.msk [vmem:[#allocation2 + $0x91] sm:$0xff] %vm171, %v195
      %228 = vst.msk [vmem:[#allocation2 + $0x99] sm:$0xff] %vm171, %v196
      %229 = vst.msk [vmem:[#allocation2 + $0xa1] sm:$0xff] %vm171, %v197
      %230 = vst.msk [vmem:[#allocation2 + $0xa9] sm:$0xff] %vm171, %v198
      %231 = vst.msk [vmem:[#allocation2 + $0xb1] sm:$0xff] %vm171, %v199
      %232 = vst.msk [vmem:[#allocation2 + $0xb9] sm:$0xff] %vm171, %v200
      %233 = vst.msk [vmem:[#allocation2 + $0xc1] sm:$0xff] %vm171, %v201
      %234 = vst.msk [vmem:[#allocation2 + $0xc9] sm:$0xff] %vm171, %v202
      %235 = vst.msk [vmem:[#allocation2 + $0xd1] sm:$0xff] %vm171, %v203
      %236 = vst.msk [vmem:[#allocation2 + $0xd9] sm:$0xff] %vm171, %v204
      %237 = vst.msk [vmem:[#allocation2 + $0xe1] sm:$0xff] %vm171, %v205
      %238 = vst.msk [vmem:[#allocation2 + $0xe9] sm:$0xff] %vm171, %v206
      %239 = vst.msk [vmem:[#allocation2 + $0xf1] sm:$0xff] %vm171, %v207
      %240 = vst.msk [vmem:[#allocation2 + $0xf9] sm:$0xff] %vm171, %v208
      %241 = vst.msk [vmem:[#allocation2 + $0x101] sm:$0xff] %vm171, %v209
      %242 = vst.msk [vmem:[#allocation2 + $0x109] sm:$0xff] %vm171, %v210
      %v243 = vlaneseq
      %v244 = vshrl.u32 %v243, 7
      %v245 = vadd.s32 %v244, 8
      %v246 = vadd.s32 %v244, 16
      %v247 = vadd.s32 %v244, 24
      %v248 = vadd.s32 %v244, 32
      %v249 = vadd.s32 %v244, 40
      %v250 = vadd.s32 %v244, 48
      %v251 = vadd.s32 %v244, 56
      %v252 = vadd.s32 %v244, 64
      %v253 = vadd.s32 %v244, 72
      %v254 = vadd.s32 %v244, 80
      %v255 = vadd.s32 %v244, 88
      %v256 = vadd.s32 %v244, 96
      %v257 = vadd.s32 %v244, 104
      %v258 = vadd.s32 %v244, 112
      %v259 = vadd.s32 %v244, 120
      %v260 = vadd.s32 %v244, 128
      %v261 = vadd.s32 %v244, 136
      %v262 = vadd.s32 %v244, 144
      %v263 = vadd.s32 %v244, 152
      %v264 = vadd.s32 %v244, 160
      %v265 = vadd.s32 %v244, 168
      %v266 = vadd.s32 %v244, 176
      %v267 = vadd.s32 %v244, 184
      %v268 = vadd.s32 %v244, 192
      %v269 = vadd.s32 %v244, 200
      %v270 = vadd.s32 %v244, 208
      %v271 = vadd.s32 %v244, 216
      %v272 = vadd.s32 %v244, 224
      %v273 = vadd.s32 %v244, 232
      %v274 = vadd.s32 %v244, 240
      %v275 = vadd.s32 %v244, 248
      %vm276 = vcmp.lt.s32.totalorder %v244, 0
      %v277 = vsub.s32 0, %v244
      %v278 = vsel %vm276, %v277, %v244
      %v279 = vshrl.u32 %v278, 4
      %v280 = vand.u32 %v278, 15
      %v281 = vsub.s32 0, %v280
      %v282 = vsel %vm276, %v281, %v280
      %vm283 = vcmp.lt.s32.totalorder %v245, 0
      %v284 = vsub.s32 0, %v245
      %v285 = vsel %vm283, %v284, %v245
      %v286 = vshrl.u32 %v285, 4
      %v287 = vand.u32 %v285, 15
      %v288 = vsub.s32 0, %v287
      %v289 = vsel %vm283, %v288, %v287
      %vm290 = vcmp.lt.s32.totalorder %v246, 0
      %v291 = vsub.s32 0, %v246
      %v292 = vsel %vm290, %v291, %v246
      %v293 = vshrl.u32 %v292, 4
      %v294 = vand.u32 %v292, 15
      %v295 = vsub.s32 0, %v294
      %v296 = vsel %vm290, %v295, %v294
      %vm297 = vcmp.lt.s32.totalorder %v247, 0
      %v298 = vsub.s32 0, %v247
      %v299 = vsel %vm297, %v298, %v247
      %v300 = vshrl.u32 %v299, 4
      %v301 = vand.u32 %v299, 15
      %v302 = vsub.s32 0, %v301
      %v303 = vsel %vm297, %v302, %v301
      %vm304 = vcmp.lt.s32.totalorder %v248, 0
      %v305 = vsub.s32 0, %v248
      %v306 = vsel %vm304, %v305, %v248
      %v307 = vshrl.u32 %v306, 4
      %v308 = vand.u32 %v306, 15
      %v309 = vsub.s32 0, %v308
      %v310 = vsel %vm304, %v309, %v308
      %vm311 = vcmp.lt.s32.totalorder %v249, 0
      %v312 = vsub.s32 0, %v249
      %v313 = vsel %vm311, %v312, %v249
      %v314 = vshrl.u32 %v313, 4
      %v315 = vand.u32 %v313, 15
      %v316 = vsub.s32 0, %v315
      %v317 = vsel %vm311, %v316, %v315
      %vm318 = vcmp.lt.s32.totalorder %v250, 0
      %v319 = vsub.s32 0, %v250
      %v320 = vsel %vm318, %v319, %v250
      %v321 = vshrl.u32 %v320, 4
      %v322 = vand.u32 %v320, 15
      %v323 = vsub.s32 0, %v322
      %v324 = vsel %vm318, %v323, %v322
      %vm325 = vcmp.lt.s32.totalorder %v251, 0
      %v326 = vsub.s32 0, %v251
      %v327 = vsel %vm325, %v326, %v251
      %v328 = vshrl.u32 %v327, 4
      %v329 = vand.u32 %v327, 15
      %v330 = vsub.s32 0, %v329
      %v331 = vsel %vm325, %v330, %v329
      %vm332 = vcmp.lt.s32.totalorder %v252, 0
      %v333 = vsub.s32 0, %v252
      %v334 = vsel %vm332, %v333, %v252
      %v335 = vshrl.u32 %v334, 4
      %v336 = vand.u32 %v334, 15
      %v337 = vsub.s32 0, %v336
      %v338 = vsel %vm332, %v337, %v336
      %vm339 = vcmp.lt.s32.totalorder %v253, 0
      %v340 = vsub.s32 0, %v253
      %v341 = vsel %vm339, %v340, %v253
      %v342 = vshrl.u32 %v341, 4
      %v343 = vand.u32 %v341, 15
      %v344 = vsub.s32 0, %v343
      %v345 = vsel %vm339, %v344, %v343
      %vm346 = vcmp.lt.s32.totalorder %v254, 0
      %v347 = vsub.s32 0, %v254
      %v348 = vsel %vm346, %v347, %v254
      %v349 = vshrl.u32 %v348, 4
      %v350 = vand.u32 %v348, 15
      %v351 = vsub.s32 0, %v350
      %v352 = vsel %vm346, %v351, %v350
      %vm353 = vcmp.lt.s32.totalorder %v255, 0
      %v354 = vsub.s32 0, %v255
      %v355 = vsel %vm353, %v354, %v255
      %v356 = vshrl.u32 %v355, 4
      %v357 = vand.u32 %v355, 15
      %v358 = vsub.s32 0, %v357
      %v359 = vsel %vm353, %v358, %v357
      %vm360 = vcmp.lt.s32.totalorder %v256, 0
      %v361 = vsub.s32 0, %v256
      %v362 = vsel %vm360, %v361, %v256
      %v363 = vshrl.u32 %v362, 4
      %v364 = vand.u32 %v362, 15
      %v365 = vsub.s32 0, %v364
      %v366 = vsel %vm360, %v365, %v364
      %vm367 = vcmp.lt.s32.totalorder %v257, 0
      %v368 = vsub.s32 0, %v257
      %v369 = vsel %vm367, %v368, %v257
      %v370 = vshrl.u32 %v369, 4
      %v371 = vand.u32 %v369, 15
      %v372 = vsub.s32 0, %v371
      %v373 = vsel %vm367, %v372, %v371
      %vm374 = vcmp.lt.s32.totalorder %v258, 0
      %v375 = vsub.s32 0, %v258
      %v376 = vsel %vm374, %v375, %v258
      %v377 = vshrl.u32 %v376, 4
      %v378 = vand.u32 %v376, 15
      %v379 = vsub.s32 0, %v378
      %v380 = vsel %vm374, %v379, %v378
      %vm381 = vcmp.lt.s32.totalorder %v259, 0
      %v382 = vsub.s32 0, %v259
      %v383 = vsel %vm381, %v382, %v259
      %v384 = vshrl.u32 %v383, 4
      %v385 = vand.u32 %v383, 15
      %v386 = vsub.s32 0, %v385
      %v387 = vsel %vm381, %v386, %v385
      %vm388 = vcmp.lt.s32.totalorder %v260, 0
      %v389 = vsub.s32 0, %v260
      %v390 = vsel %vm388, %v389, %v260
      %v391 = vshrl.u32 %v390, 4
      %v392 = vand.u32 %v390, 15
      %v393 = vsub.s32 0, %v392
      %v394 = vsel %vm388, %v393, %v392
      %vm395 = vcmp.lt.s32.totalorder %v261, 0
      %v396 = vsub.s32 0, %v261
      %v397 = vsel %vm395, %v396, %v261
      %v398 = vshrl.u32 %v397, 4
      %v399 = vand.u32 %v397, 15
      %v400 = vsub.s32 0, %v399
      %v401 = vsel %vm395, %v400, %v399
      %vm402 = vcmp.lt.s32.totalorder %v262, 0
      %v403 = vsub.s32 0, %v262
      %v404 = vsel %vm402, %v403, %v262
      %v405 = vshrl.u32 %v404, 4
      %v406 = vand.u32 %v404, 15
      %v407 = vsub.s32 0, %v406
      %v408 = vsel %vm402, %v407, %v406
      %vm409 = vcmp.lt.s32.totalorder %v263, 0
      %v410 = vsub.s32 0, %v263
      %v411 = vsel %vm409, %v410, %v263
      %v412 = vshrl.u32 %v411, 4
      %v413 = vand.u32 %v411, 15
      %v414 = vsub.s32 0, %v413
      %v415 = vsel %vm409, %v414, %v413
      %vm416 = vcmp.lt.s32.totalorder %v264, 0
      %v417 = vsub.s32 0, %v264
      %v418 = vsel %vm416, %v417, %v264
      %v419 = vshrl.u32 %v418, 4
      %v420 = vand.u32 %v418, 15
      %v421 = vsub.s32 0, %v420
      %v422 = vsel %vm416, %v421, %v420
      %vm423 = vcmp.lt.s32.totalorder %v265, 0
      %v424 = vsub.s32 0, %v265
      %v425 = vsel %vm423, %v424, %v265
      %v426 = vshrl.u32 %v425, 4
      %v427 = vand.u32 %v425, 15
      %v428 = vsub.s32 0, %v427
      %v429 = vsel %vm423, %v428, %v427
      %vm430 = vcmp.lt.s32.totalorder %v266, 0
      %v431 = vsub.s32 0, %v266
      %v432 = vsel %vm430, %v431, %v266
      %v433 = vshrl.u32 %v432, 4
      %v434 = vand.u32 %v432, 15
      %v435 = vsub.s32 0, %v434
      %v436 = vsel %vm430, %v435, %v434
      %vm437 = vcmp.lt.s32.totalorder %v267, 0
      %v438 = vsub.s32 0, %v267
      %v439 = vsel %vm437, %v438, %v267
      %v440 = vshrl.u32 %v439, 4
      %v441 = vand.u32 %v439, 15
      %v442 = vsub.s32 0, %v441
      %v443 = vsel %vm437, %v442, %v441
      %vm444 = vcmp.lt.s32.totalorder %v268, 0
      %v445 = vsub.s32 0, %v268
      %v446 = vsel %vm444, %v445, %v268
      %v447 = vshrl.u32 %v446, 4
      %v448 = vand.u32 %v446, 15
      %v449 = vsub.s32 0, %v448
      %v450 = vsel %vm444, %v449, %v448
      %vm451 = vcmp.lt.s32.totalorder %v269, 0
      %v452 = vsub.s32 0, %v269
      %v453 = vsel %vm451, %v452, %v269
      %v454 = vshrl.u32 %v453, 4
      %v455 = vand.u32 %v453, 15
      %v456 = vsub.s32 0, %v455
      %v457 = vsel %vm451, %v456, %v455
      %vm458 = vcmp.lt.s32.totalorder %v270, 0
      %v459 = vsub.s32 0, %v270
      %v460 = vsel %vm458, %v459, %v270
      %v461 = vshrl.u32 %v460, 4
      %v462 = vand.u32 %v460, 15
      %v463 = vsub.s32 0, %v462
      %v464 = vsel %vm458, %v463, %v462
      %vm465 = vcmp.lt.s32.totalorder %v271, 0
      %v466 = vsub.s32 0, %v271
      %v467 = vsel %vm465, %v466, %v271
      %v468 = vshrl.u32 %v467, 4
      %v469 = vand.u32 %v467, 15
      %v470 = vsub.s32 0, %v469
      %v471 = vsel %vm465, %v470, %v469
      %vm472 = vcmp.lt.s32.totalorder %v272, 0
      %v473 = vsub.s32 0, %v272
      %v474 = vsel %vm472, %v473, %v272
      %v475 = vshrl.u32 %v474, 4
      %v476 = vand.u32 %v474, 15
      %v477 = vsub.s32 0, %v476
      %v478 = vsel %vm472, %v477, %v476
      %vm479 = vcmp.lt.s32.totalorder %v273, 0
      %v480 = vsub.s32 0, %v273
      %v481 = vsel %vm479, %v480, %v273
      %v482 = vshrl.u32 %v481, 4
      %v483 = vand.u32 %v481, 15
      %v484 = vsub.s32 0, %v483
      %v485 = vsel %vm479, %v484, %v483
      %vm486 = vcmp.lt.s32.totalorder %v274, 0
      %v487 = vsub.s32 0, %v274
      %v488 = vsel %vm486, %v487, %v274
      %v489 = vshrl.u32 %v488, 4
      %v490 = vand.u32 %v488, 15
      %v491 = vsub.s32 0, %v490
      %v492 = vsel %vm486, %v491, %v490
      %vm493 = vcmp.lt.s32.totalorder %v275, 0
      %v494 = vsub.s32 0, %v275
      %v495 = vsel %vm493, %v494, %v275
      %v496 = vshrl.u32 %v495, 4
      %v497 = vand.u32 %v495, 15
      %v498 = vsub.s32 0, %v497
      %v499 = vsel %vm493, %v498, %v497
      %vm500 = vcmp.ne.s32.totalorder %v282, 0
      %vm501 = vcmp.ne.s32.totalorder %v289, 0
      %vm502 = vcmp.ne.s32.totalorder %v296, 0
      %vm503 = vcmp.ne.s32.totalorder %v303, 0
      %vm504 = vcmp.ne.s32.totalorder %v310, 0
      %vm505 = vcmp.ne.s32.totalorder %v317, 0
      %vm506 = vcmp.ne.s32.totalorder %v324, 0
      %vm507 = vcmp.ne.s32.totalorder %v331, 0
      %vm508 = vcmp.ne.s32.totalorder %v338, 0
      %vm509 = vcmp.ne.s32.totalorder %v345, 0
      %vm510 = vcmp.ne.s32.totalorder %v352, 0
      %vm511 = vcmp.ne.s32.totalorder %v359, 0
      %vm512 = vcmp.ne.s32.totalorder %v366, 0
      %vm513 = vcmp.ne.s32.totalorder %v373, 0
      %vm514 = vcmp.ne.s32.totalorder %v380, 0
      %vm515 = vcmp.ne.s32.totalorder %v387, 0
      %vm516 = vcmp.ne.s32.totalorder %v394, 0
      %vm517 = vcmp.ne.s32.totalorder %v401, 0
      %vm518 = vcmp.ne.s32.totalorder %v408, 0
      %vm519 = vcmp.ne.s32.totalorder %v415, 0
      %vm520 = vcmp.ne.s32.totalorder %v422, 0
      %vm521 = vcmp.ne.s32.totalorder %v429, 0
      %vm522 = vcmp.ne.s32.totalorder %v436, 0
      %vm523 = vcmp.ne.s32.totalorder %v443, 0
      %vm524 = vcmp.ne.s32.totalorder %v450, 0
      %vm525 = vcmp.ne.s32.totalorder %v457, 0
      %vm526 = vcmp.ne.s32.totalorder %v464, 0
      %vm527 = vcmp.ne.s32.totalorder %v471, 0
      %vm528 = vcmp.ne.s32.totalorder %v478, 0
      %vm529 = vcmp.ne.s32.totalorder %v485, 0
      %vm530 = vcmp.ne.s32.totalorder %v492, 0
      %vm531 = vcmp.ne.s32.totalorder %v499, 0
      %vm532 = vcmp.lt.s32.totalorder %v282, 0
      %vm533 = vcmp.lt.s32.totalorder %v289, 0
      %vm534 = vcmp.lt.s32.totalorder %v296, 0
      %vm535 = vcmp.lt.s32.totalorder %v303, 0
      %vm536 = vcmp.lt.s32.totalorder %v310, 0
      %vm537 = vcmp.lt.s32.totalorder %v317, 0
      %vm538 = vcmp.lt.s32.totalorder %v324, 0
      %vm539 = vcmp.lt.s32.totalorder %v331, 0
      %vm540 = vcmp.lt.s32.totalorder %v338, 0
      %vm541 = vcmp.lt.s32.totalorder %v345, 0
      %vm542 = vcmp.lt.s32.totalorder %v352, 0
      %vm543 = vcmp.lt.s32.totalorder %v359, 0
      %vm544 = vcmp.lt.s32.totalorder %v366, 0
      %vm545 = vcmp.lt.s32.totalorder %v373, 0
      %vm546 = vcmp.lt.s32.totalorder %v380, 0
      %vm547 = vcmp.lt.s32.totalorder %v387, 0
      %vm548 = vcmp.lt.s32.totalorder %v394, 0
      %vm549 = vcmp.lt.s32.totalorder %v401, 0
      %vm550 = vcmp.lt.s32.totalorder %v408, 0
      %vm551 = vcmp.lt.s32.totalorder %v415, 0
      %vm552 = vcmp.lt.s32.totalorder %v422, 0
      %vm553 = vcmp.lt.s32.totalorder %v429, 0
      %vm554 = vcmp.lt.s32.totalorder %v436, 0
      %vm555 = vcmp.lt.s32.totalorder %v443, 0
      %vm556 = vcmp.lt.s32.totalorder %v450, 0
      %vm557 = vcmp.lt.s32.totalorder %v457, 0
      %vm558 = vcmp.lt.s32.totalorder %v464, 0
      %vm559 = vcmp.lt.s32.totalorder %v471, 0
      %vm560 = vcmp.lt.s32.totalorder %v478, 0
      %vm561 = vcmp.lt.s32.totalorder %v485, 0
      %vm562 = vcmp.lt.s32.totalorder %v492, 0
      %vm563 = vcmp.lt.s32.totalorder %v499, 0
      %vm564 = vmand %vm532, %vm500
      %vm565 = vmand %vm533, %vm501
      %vm566 = vmand %vm534, %vm502
      %vm567 = vmand %vm535, %vm503
      %vm568 = vmand %vm536, %vm504
      %vm569 = vmand %vm537, %vm505
      %vm570 = vmand %vm538, %vm506
      %vm571 = vmand %vm539, %vm507
      %vm572 = vmand %vm540, %vm508
      %vm573 = vmand %vm541, %vm509
      %vm574 = vmand %vm542, %vm510
      %vm575 = vmand %vm543, %vm511
      %vm576 = vmand %vm544, %vm512
      %vm577 = vmand %vm545, %vm513
      %vm578 = vmand %vm546, %vm514
      %vm579 = vmand %vm547, %vm515
      %vm580 = vmand %vm548, %vm516
      %vm581 = vmand %vm549, %vm517
      %vm582 = vmand %vm550, %vm518
      %vm583 = vmand %vm551, %vm519
      %vm584 = vmand %vm552, %vm520
      %vm585 = vmand %vm553, %vm521
      %vm586 = vmand %vm554, %vm522
      %vm587 = vmand %vm555, %vm523
      %vm588 = vmand %vm556, %vm524
      %vm589 = vmand %vm557, %vm525
      %vm590 = vmand %vm558, %vm526
      %vm591 = vmand %vm559, %vm527
      %vm592 = vmand %vm560, %vm528
      %vm593 = vmand %vm561, %vm529
      %vm594 = vmand %vm562, %vm530
      %vm595 = vmand %vm563, %vm531
      %v596 = vadd.s32 %v282, 16
      %v597 = vadd.s32 %v289, 16
      %v598 = vadd.s32 %v296, 16
      %v599 = vadd.s32 %v303, 16
      %v600 = vadd.s32 %v310, 16
      %v601 = vadd.s32 %v317, 16
      %v602 = vadd.s32 %v324, 16
      %v603 = vadd.s32 %v331, 16
      %v604 = vadd.s32 %v338, 16
      %v605 = vadd.s32 %v345, 16
      %v606 = vadd.s32 %v352, 16
      %v607 = vadd.s32 %v359, 16
      %v608 = vadd.s32 %v366, 16
      %v609 = vadd.s32 %v373, 16
      %v610 = vadd.s32 %v380, 16
      %v611 = vadd.s32 %v387, 16
      %v612 = vadd.s32 %v394, 16
      %v613 = vadd.s32 %v401, 16
      %v614 = vadd.s32 %v408, 16
      %v615 = vadd.s32 %v415, 16
      %v616 = vadd.s32 %v422, 16
      %v617 = vadd.s32 %v429, 16
      %v618 = vadd.s32 %v436, 16
      %v619 = vadd.s32 %v443, 16
      %v620 = vadd.s32 %v450, 16
      %v621 = vadd.s32 %v457, 16
      %v622 = vadd.s32 %v464, 16
      %v623 = vadd.s32 %v471, 16
      %v624 = vadd.s32 %v478, 16
      %v625 = vadd.s32 %v485, 16
      %v626 = vadd.s32 %v492, 16
      %v627 = vadd.s32 %v499, 16
      %v628 = vsel %vm564, %v596, %v282
      %v629 = vsel %vm565, %v597, %v289
      %v630 = vsel %vm566, %v598, %v296
      %v631 = vsel %vm567, %v599, %v303
      %v632 = vsel %vm568, %v600, %v310
      %v633 = vsel %vm569, %v601, %v317
      %v634 = vsel %vm570, %v602, %v324
      %v635 = vsel %vm571, %v603, %v331
      %v636 = vsel %vm572, %v604, %v338
      %v637 = vsel %vm573, %v605, %v345
      %v638 = vsel %vm574, %v606, %v352
      %v639 = vsel %vm575, %v607, %v359
      %v640 = vsel %vm576, %v608, %v366
      %v641 = vsel %vm577, %v609, %v373
      %v642 = vsel %vm578, %v610, %v380
      %v643 = vsel %vm579, %v611, %v387
      %v644 = vsel %vm580, %v612, %v394
      %v645 = vsel %vm581, %v613, %v401
      %v646 = vsel %vm582, %v614, %v408
      %v647 = vsel %vm583, %v615, %v415
      %v648 = vsel %vm584, %v616, %v422
      %v649 = vsel %vm585, %v617, %v429
      %v650 = vsel %vm586, %v618, %v436
      %v651 = vsel %vm587, %v619, %v443
      %v652 = vsel %vm588, %v620, %v450
      %v653 = vsel %vm589, %v621, %v457
      %v654 = vsel %vm590, %v622, %v464
      %v655 = vsel %vm591, %v623, %v471
      %v656 = vsel %vm592, %v624, %v478
      %v657 = vsel %vm593, %v625, %v485
      %v658 = vsel %vm594, %v626, %v492
      %v659 = vsel %vm595, %v627, %v499
      %vm660 = vcmp.ne.s32.totalorder %v628, 0
      %vm661 = vcmp.ne.s32.totalorder %v629, 0
      %vm662 = vcmp.ne.s32.totalorder %v630, 0
      %vm663 = vcmp.ne.s32.totalorder %v631, 0
      %vm664 = vcmp.ne.s32.totalorder %v632, 0
      %vm665 = vcmp.ne.s32.totalorder %v633, 0
      %vm666 = vcmp.ne.s32.totalorder %v634, 0
      %vm667 = vcmp.ne.s32.totalorder %v635, 0
      %vm668 = vcmp.ne.s32.totalorder %v636, 0
      %vm669 = vcmp.ne.s32.totalorder %v637, 0
      %vm670 = vcmp.ne.s32.totalorder %v638, 0
      %vm671 = vcmp.ne.s32.totalorder %v639, 0
      %vm672 = vcmp.ne.s32.totalorder %v640, 0
      %vm673 = vcmp.ne.s32.totalorder %v641, 0
      %vm674 = vcmp.ne.s32.totalorder %v642, 0
      %vm675 = vcmp.ne.s32.totalorder %v643, 0
      %vm676 = vcmp.ne.s32.totalorder %v644, 0
      %vm677 = vcmp.ne.s32.totalorder %v645, 0
      %vm678 = vcmp.ne.s32.totalorder %v646, 0
      %vm679 = vcmp.ne.s32.totalorder %v647, 0
      %vm680 = vcmp.ne.s32.totalorder %v648, 0
      %vm681 = vcmp.ne.s32.totalorder %v649, 0
      %vm682 = vcmp.ne.s32.totalorder %v650, 0
      %vm683 = vcmp.ne.s32.totalorder %v651, 0
      %vm684 = vcmp.ne.s32.totalorder %v652, 0
      %vm685 = vcmp.ne.s32.totalorder %v653, 0
      %vm686 = vcmp.ne.s32.totalorder %v654, 0
      %vm687 = vcmp.ne.s32.totalorder %v655, 0
      %vm688 = vcmp.ne.s32.totalorder %v656, 0
      %vm689 = vcmp.ne.s32.totalorder %v657, 0
      %vm690 = vcmp.ne.s32.totalorder %v658, 0
      %vm691 = vcmp.ne.s32.totalorder %v659, 0
      %vm692 = vcmp.ne.s32.totalorder %v628, 15
      %vm693 = vcmp.ne.s32.totalorder %v629, 15
      %vm694 = vcmp.ne.s32.totalorder %v630, 15
      %vm695 = vcmp.ne.s32.totalorder %v631, 15
      %vm696 = vcmp.ne.s32.totalorder %v632, 15
      %vm697 = vcmp.ne.s32.totalorder %v633, 15
      %vm698 = vcmp.ne.s32.totalorder %v634, 15
      %vm699 = vcmp.ne.s32.totalorder %v635, 15
      %vm700 = vcmp.ne.s32.totalorder %v636, 15
      %vm701 = vcmp.ne.s32.totalorder %v637, 15
      %vm702 = vcmp.ne.s32.totalorder %v638, 15
      %vm703 = vcmp.ne.s32.totalorder %v639, 15
      %vm704 = vcmp.ne.s32.totalorder %v640, 15
      %vm705 = vcmp.ne.s32.totalorder %v641, 15
      %vm706 = vcmp.ne.s32.totalorder %v642, 15
      %vm707 = vcmp.ne.s32.totalorder %v643, 15
      %vm708 = vcmp.ne.s32.totalorder %v644, 15
      %vm709 = vcmp.ne.s32.totalorder %v645, 15
      %vm710 = vcmp.ne.s32.totalorder %v646, 15
      %vm711 = vcmp.ne.s32.totalorder %v647, 15
      %vm712 = vcmp.ne.s32.totalorder %v648, 15
      %vm713 = vcmp.ne.s32.totalorder %v649, 15
      %vm714 = vcmp.ne.s32.totalorder %v650, 15
      %vm715 = vcmp.ne.s32.totalorder %v651, 15
      %vm716 = vcmp.ne.s32.totalorder %v652, 15
      %vm717 = vcmp.ne.s32.totalorder %v653, 15
      %vm718 = vcmp.ne.s32.totalorder %v654, 15
      %vm719 = vcmp.ne.s32.totalorder %v655, 15
      %vm720 = vcmp.ne.s32.totalorder %v656, 15
      %vm721 = vcmp.ne.s32.totalorder %v657, 15
      %vm722 = vcmp.ne.s32.totalorder %v658, 15
      %vm723 = vcmp.ne.s32.totalorder %v659, 15
      %v724 = vld [vmem:[#allocation2] sm:$0xff]
      %v725 = vld [vmem:[#allocation2 + $0x8] sm:$0xff]
      %v726 = vld [vmem:[#allocation2 + $0x10] sm:$0xff]
      %v727 = vld [vmem:[#allocation2 + $0x18] sm:$0xff]
      %v728 = vld [vmem:[#allocation2 + $0x20] sm:$0xff]
      %v729 = vld [vmem:[#allocation2 + $0x28] sm:$0xff]
      %v730 = vld [vmem:[#allocation2 + $0x30] sm:$0xff]
      %v731 = vld [vmem:[#allocation2 + $0x38] sm:$0xff]
      %v732 = vld [vmem:[#allocation2 + $0x40] sm:$0xff]
      %v733 = vld [vmem:[#allocation2 + $0x48] sm:$0xff]
      %v734 = vld [vmem:[#allocation2 + $0x50] sm:$0xff]
      %v735 = vld [vmem:[#allocation2 + $0x58] sm:$0xff]
      %v736 = vld [vmem:[#allocation2 + $0x60] sm:$0xff]
      %v737 = vld [vmem:[#allocation2 + $0x68] sm:$0xff]
      %v738 = vld [vmem:[#allocation2 + $0x70] sm:$0xff]
      %v739 = vld [vmem:[#allocation2 + $0x78] sm:$0xff]
      %v740 = vld [vmem:[#allocation2 + $0x80] sm:$0xff]
      %v741 = vld [vmem:[#allocation2 + $0x88] sm:$0xff]
      %v742 = vld [vmem:[#allocation2 + $0x90] sm:$0xff]
      %v743 = vld [vmem:[#allocation2 + $0x98] sm:$0xff]
      %v744 = vld [vmem:[#allocation2 + $0xa0] sm:$0xff]
      %v745 = vld [vmem:[#allocation2 + $0xa8] sm:$0xff]
      %v746 = vld [vmem:[#allocation2 + $0xb0] sm:$0xff]
      %v747 = vld [vmem:[#allocation2 + $0xb8] sm:$0xff]
      %v748 = vld [vmem:[#allocation2 + $0xc0] sm:$0xff]
      %v749 = vld [vmem:[#allocation2 + $0xc8] sm:$0xff]
      %v750 = vld [vmem:[#allocation2 + $0xd0] sm:$0xff]
      %v751 = vld [vmem:[#allocation2 + $0xd8] sm:$0xff]
      %v752 = vld [vmem:[#allocation2 + $0xe0] sm:$0xff]
      %v753 = vld [vmem:[#allocation2 + $0xe8] sm:$0xff]
      %v754 = vld [vmem:[#allocation2 + $0xf0] sm:$0xff]
      %v755 = vld [vmem:[#allocation2 + $0xf8] sm:$0xff]
      %v756 = vsel %vm660, %v724, 0.0
      %v757 = vsel %vm661, %v725, 0.0
      %v758 = vsel %vm662, %v726, 0.0
      %v759 = vsel %vm663, %v727, 0.0
      %v760 = vsel %vm664, %v728, 0.0
      %v761 = vsel %vm665, %v729, 0.0
      %v762 = vsel %vm666, %v730, 0.0
      %v763 = vsel %vm667, %v731, 0.0
      %v764 = vsel %vm668, %v732, 0.0
      %v765 = vsel %vm669, %v733, 0.0
      %v766 = vsel %vm670, %v734, 0.0
      %v767 = vsel %vm671, %v735, 0.0
      %v768 = vsel %vm672, %v736, 0.0
      %v769 = vsel %vm673, %v737, 0.0
      %v770 = vsel %vm674, %v738, 0.0
      %v771 = vsel %vm675, %v739, 0.0
      %v772 = vsel %vm676, %v740, 0.0
      %v773 = vsel %vm677, %v741, 0.0
      %v774 = vsel %vm678, %v742, 0.0
      %v775 = vsel %vm679, %v743, 0.0
      %v776 = vsel %vm680, %v744, 0.0
      %v777 = vsel %vm681, %v745, 0.0
      %v778 = vsel %vm682, %v746, 0.0
      %v779 = vsel %vm683, %v747, 0.0
      %v780 = vsel %vm684, %v748, 0.0
      %v781 = vsel %vm685, %v749, 0.0
      %v782 = vsel %vm686, %v750, 0.0
      %v783 = vsel %vm687, %v751, 0.0
      %v784 = vsel %vm688, %v752, 0.0
      %v785 = vsel %vm689, %v753, 0.0
      %v786 = vsel %vm690, %v754, 0.0
      %v787 = vsel %vm691, %v755, 0.0
      %v788 = vld [vmem:[%s1] sm:$0xf]
      %v789 = vld [vmem:[#allocation2 + $0x1] sm:$0xff]
      %v790 = vld [vmem:[#allocation2 + $0x9] sm:$0xff]
      %v791 = vld [vmem:[#allocation2 + $0x11] sm:$0xff]
      %v792 = vld [vmem:[#allocation2 + $0x19] sm:$0xff]
      %v793 = vld [vmem:[#allocation2 + $0x21] sm:$0xff]
      %v794 = vld [vmem:[#allocation2 + $0x29] sm:$0xff]
      %v795 = vld [vmem:[#allocation2 + $0x31] sm:$0xff]
      %v796 = vld [vmem:[#allocation2 + $0x39] sm:$0xff]
      %v797 = vld [vmem:[#allocation2 + $0x41] sm:$0xff]
      %v798 = vld [vmem:[#allocation2 + $0x49] sm:$0xff]
      %v799 = vld [vmem:[#allocation2 + $0x51] sm:$0xff]
      %v800 = vld [vmem:[#allocation2 + $0x59] sm:$0xff]
      %v801 = vld [vmem:[#allocation2 + $0x61] sm:$0xff]
      %v802 = vld [vmem:[#allocation2 + $0x69] sm:$0xff]
      %v803 = vld [vmem:[#allocation2 + $0x71] sm:$0xff]
      %v804 = vld [vmem:[#allocation2 + $0x79] sm:$0xff]
      %v805 = vld [vmem:[#allocation2 + $0x81] sm:$0xff]
      %v806 = vld [vmem:[#allocation2 + $0x89] sm:$0xff]
      %v807 = vld [vmem:[#allocation2 + $0x91] sm:$0xff]
      %v808 = vld [vmem:[#allocation2 + $0x99] sm:$0xff]
      %v809 = vld [vmem:[#allocation2 + $0xa1] sm:$0xff]
      %v810 = vld [vmem:[#allocation2 + $0xa9] sm:$0xff]
      %v811 = vld [vmem:[#allocation2 + $0xb1] sm:$0xff]
      %v812 = vld [vmem:[#allocation2 + $0xb9] sm:$0xff]
      %v813 = vld [vmem:[#allocation2 + $0xc1] sm:$0xff]
      %v814 = vld [vmem:[#allocation2 + $0xc9] sm:$0xff]
      %v815 = vld [vmem:[#allocation2 + $0xd1] sm:$0xff]
      %v816 = vld [vmem:[#allocation2 + $0xd9] sm:$0xff]
      %v817 = vld [vmem:[#allocation2 + $0xe1] sm:$0xff]
      %v818 = vld [vmem:[#allocation2 + $0xe9] sm:$0xff]
      %v819 = vld [vmem:[#allocation2 + $0xf1] sm:$0xff]
      %v820 = vld [vmem:[#allocation2 + $0xf9] sm:$0xff]
      %s821 = scalar_lea.vmem %s1, 4
      %v822 = vld [vmem:[%s821] sm:$0xf]
      %v824 = vsel %vm171, %v789, 0
      %v827 = vsel %vm171, %v790, 0
      %v830 = vsel %vm171, %v791, 0
      %v833 = vsel %vm171, %v792, 0
      %v836 = vsel %vm171, %v793, 0
      %v839 = vsel %vm171, %v794, 0
      %v842 = vsel %vm171, %v795, 0
      %v845 = vsel %vm171, %v796, 0
      %v848 = vsel %vm171, %v797, 0
      %v851 = vsel %vm171, %v798, 0
      %v854 = vsel %vm171, %v799, 0
      %v857 = vsel %vm171, %v800, 0
      %v860 = vsel %vm171, %v801, 0
      %v863 = vsel %vm171, %v802, 0
      %v866 = vsel %vm171, %v803, 0
      %v869 = vsel %vm171, %v804, 0
      %v872 = vsel %vm171, %v805, 0
      %v875 = vsel %vm171, %v806, 0
      %v878 = vsel %vm171, %v807, 0
      %v881 = vsel %vm171, %v808, 0
      %v884 = vsel %vm171, %v809, 0
      %v887 = vsel %vm171, %v810, 0
      %v890 = vsel %vm171, %v811, 0
      %v893 = vsel %vm171, %v812, 0
      %v896 = vsel %vm171, %v813, 0
      %v899 = vsel %vm171, %v814, 0
      %v902 = vsel %vm171, %v815, 0
      %v905 = vsel %vm171, %v816, 0
      %v908 = vsel %vm171, %v817, 0
      %v911 = vsel %vm171, %v818, 0
      %v914 = vsel %vm171, %v819, 0
      %v917 = vsel %vm171, %v820, 0
      %vm919 = vcmask 1043456
      %v921 = vsel %vm919, %v822, 0
      %923 = vmatprep.subr.mxu0 0.0
      %924 = vmatpush1.msra.mxu0 %v921
      %925 = vmatprep.subr.mxu0 0.0
      %926 = vmatpush1.msra.mxu0 0.0
      %927 = vmatprep.subr.mxu0 0.0
      %928 = vmatpush1.msra.mxu0 0.0
      %929 = vmatprep.subr.mxu0 0.0
      %930 = vmatpush1.msra.mxu0 0.0
      %931 = vmatprep.subr.mxu0 0.0
      %932 = vmatpush1.msra.mxu0 0.0
      %933 = vmatprep.subr.mxu0 0.0
      %934 = vmatpush1.msra.mxu0 0.0
      %935 = vmatprep.subr.mxu0 0.0
      %936 = vmatpush1.msra.mxu0 0.0
      %937 = vmatprep.subr.mxu0 0.0
      %938 = vmatpush1.msra.mxu0 0.0
      %939 = vmatprep.subr.mxu0 0.0
      %940 = vmatpush1.msra.mxu0 0.0
      %941 = vmatprep.subr.mxu0 0.0
      %942 = vmatpush1.msra.mxu0 0.0
      %943 = vmatprep.subr.mxu0 0.0
      %944 = vmatpush1.msra.mxu0 0.0
      %945 = vmatprep.subr.mxu0 0.0
      %946 = vmatpush1.msra.mxu0 0.0
      %947 = vmatprep.subr.mxu0 0.0
      %948 = vmatpush1.msra.mxu0 0.0
      %949 = vmatprep.subr.mxu0 0.0
      %950 = vmatpush1.msra.mxu0 0.0
      %951 = vmatprep.subr.mxu0 0.0
      %952 = vmatpush1.msra.mxu0 0.0
      %953 = vmatprep.subr.mxu0 0.0
      %954 = vmatpush1.msra.mxu0 0.0
      %955 = vmatprep.subr.mxu0 0.0
      %956 = vmatpush1.msra.mxu0 0.0
      %957 = vmatprep.subr.mxu0 0.0
      %958 = vmatpush1.msra.mxu0 0.0
      %959 = vmatprep.subr.mxu0 0.0
      %960 = vmatpush1.msra.mxu0 0.0
      %961 = vmatprep.subr.mxu0 0.0
      %962 = vmatpush1.msra.mxu0 0.0
      %963 = vmatprep.subr.mxu0 0.0
      %964 = vmatpush1.msra.mxu0 0.0
      %965 = vmatprep.subr.mxu0 0.0
      %966 = vmatpush1.msra.mxu0 0.0
      %967 = vmatprep.subr.mxu0 0.0
      %968 = vmatpush1.msra.mxu0 0.0
      %969 = vmatprep.subr.mxu0 0.0
      %970 = vmatpush1.msra.mxu0 0.0
      %971 = vmatprep.subr.mxu0 0.0
      %972 = vmatpush1.msra.mxu0 0.0
      %973 = vmatprep.subr.mxu0 0.0
      %974 = vmatpush1.msra.mxu0 0.0
      %975 = vmatprep.subr.mxu0 0.0
      %976 = vmatpush1.msra.mxu0 0.0
      %977 = vmatprep.subr.mxu0 0.0
      %978 = vmatpush1.msra.mxu0 0.0
      %979 = vmatprep.subr.mxu0 0.0
      %980 = vmatpush1.msra.mxu0 0.0
      %981 = vmatprep.subr.mxu0 0.0
      %982 = vmatpush1.msra.mxu0 0.0
      %983 = vmatprep.subr.mxu0 0.0
      %984 = vmatpush1.msra.mxu0 0.0
      %985 = vmatprep.subr.mxu0 0.0
      %986 = vmatpush1.msra.mxu0 0.0
      %987 = vmatprep.mubr.f32.mxu0 0.0
      %988 = vmatmul.mubr.f32.gmra.mrb[0].mxu0 %v824
      %v989 = vpop.f32.mrb[0].mxu0
      %v990 = vadd.f32 0.0, %v989
      %v991 = vpop.f32.mrb[0].mxu0
      %992 = vmatprep.mubr.f32.mxu0 0.0
      %993 = vmatmul.mubr.f32.gmra.mrb[0].mxu0 %v827
      %v994 = vpop.f32.mrb[0].mxu0
      %v995 = vadd.f32 0.0, %v994
      %v996 = vpop.f32.mrb[0].mxu0
      %997 = vmatprep.mubr.f32.mxu0 0.0
      %998 = vmatmul.mubr.f32.gmra.mrb[0].mxu0 %v830
      %v999 = vpop.f32.mrb[0].mxu0
      %v1000 = vadd.f32 0.0, %v999
      %v1001 = vpop.f32.mrb[0].mxu0
      %1002 = vmatprep.mubr.f32.mxu0 0.0
      %1003 = vmatmul.mubr.f32.gmra.mrb[0].mxu0 %v833
      %v1004 = vpop.f32.mrb[0].mxu0
      %v1005 = vadd.f32 0.0, %v1004
      %v1006 = vpop.f32.mrb[0].mxu0
      %1007 = vmatprep.mubr.f32.mxu0 0.0
      %1008 = vmatmul.mubr.f32.gmra.mrb[0].mxu0 %v836
      %v1009 = vpop.f32.mrb[0].mxu0
      %v1010 = vadd.f32 0.0, %v1009
      %v1011 = vpop.f32.mrb[0].mxu0
      %1012 = vmatprep.mubr.f32.mxu0 0.0
      %1013 = vmatmul.mubr.f32.gmra.mrb[0].mxu0 %v839
      %v1014 = vpop.f32.mrb[0].mxu0
      %v1015 = vadd.f32 0.0, %v1014
      %v1016 = vpop.f32.mrb[0].mxu0
      %1017 = vmatprep.mubr.f32.mxu0 0.0
      %1018 = vmatmul.mubr.f32.gmra.mrb[0].mxu0 %v842
      %v1019 = vpop.f32.mrb[0].mxu0
      %v1020 = vadd.f32 0.0, %v1019
      %v1021 = vpop.f32.mrb[0].mxu0
      %1022 = vmatprep.mubr.f32.mxu0 0.0
      %1023 = vmatmul.mubr.f32.gmra.mrb[0].mxu0 %v845
      %v1024 = vpop.f32.mrb[0].mxu0
      %v1025 = vadd.f32 0.0, %v1024
      %v1026 = vpop.f32.mrb[0].mxu0
      %1027 = vmatprep.mubr.f32.mxu0 0.0
      %1028 = vmatmul.mubr.f32.gmra.mrb[0].mxu0 %v848
      %v1029 = vpop.f32.mrb[0].mxu0
      %v1030 = vadd.f32 0.0, %v1029
      %v1031 = vpop.f32.mrb[0].mxu0
      %1032 = vmatprep.mubr.f32.mxu0 0.0
      %1033 = vmatmul.mubr.f32.gmra.mrb[0].mxu0 %v851
      %v1034 = vpop.f32.mrb[0].mxu0
      %v1035 = vadd.f32 0.0, %v1034
      %v1036 = vpop.f32.mrb[0].mxu0
      %1037 = vmatprep.mubr.f32.mxu0 0.0
      %1038 = vmatmul.mubr.f32.gmra.mrb[0].mxu0 %v854
      %v1039 = vpop.f32.mrb[0].mxu0
      %v1040 = vadd.f32 0.0, %v1039
      %v1041 = vpop.f32.mrb[0].mxu0
      %1042 = vmatprep.mubr.f32.mxu0 0.0
      %1043 = vmatmul.mubr.f32.gmra.mrb[0].mxu0 %v857
      %v1044 = vpop.f32.mrb[0].mxu0
      %v1045 = vadd.f32 0.0, %v1044
      %v1046 = vpop.f32.mrb[0].mxu0
      %1047 = vmatprep.mubr.f32.mxu0 0.0
      %1048 = vmatmul.mubr.f32.gmra.mrb[0].mxu0 %v860
      %v1049 = vpop.f32.mrb[0].mxu0
      %v1050 = vadd.f32 0.0, %v1049
      %v1051 = vpop.f32.mrb[0].mxu0
      %1052 = vmatprep.mubr.f32.mxu0 0.0
      %1053 = vmatmul.mubr.f32.gmra.mrb[0].mxu0 %v863
      %v1054 = vpop.f32.mrb[0].mxu0
      %v1055 = vadd.f32 0.0, %v1054
      %v1056 = vpop.f32.mrb[0].mxu0
      %1057 = vmatprep.mubr.f32.mxu0 0.0
      %1058 = vmatmul.mubr.f32.gmra.mrb[0].mxu0 %v866
      %v1059 = vpop.f32.mrb[0].mxu0
      %v1060 = vadd.f32 0.0, %v1059
      %v1061 = vpop.f32.mrb[0].mxu0
      %1062 = vmatprep.mubr.f32.mxu0 0.0
      %1063 = vmatmul.mubr.f32.gmra.mrb[0].mxu0 %v869
      %v1064 = vpop.f32.mrb[0].mxu0
      %v1065 = vadd.f32 0.0, %v1064
      %v1066 = vpop.f32.mrb[0].mxu0
      %1067 = vmatprep.mubr.f32.mxu0 0.0
      %1068 = vmatmul.mubr.f32.gmra.mrb[0].mxu0 %v872
      %v1069 = vpop.f32.mrb[0].mxu0
      %v1070 = vadd.f32 0.0, %v1069
      %v1071 = vpop.f32.mrb[0].mxu0
      %1072 = vmatprep.mubr.f32.mxu0 0.0
      %1073 = vmatmul.mubr.f32.gmra.mrb[0].mxu0 %v875
      %v1074 = vpop.f32.mrb[0].mxu0
      %v1075 = vadd.f32 0.0, %v1074
      %v1076 = vpop.f32.mrb[0].mxu0
      %1077 = vmatprep.mubr.f32.mxu0 0.0
      %1078 = vmatmul.mubr.f32.gmra.mrb[0].mxu0 %v878
      %v1079 = vpop.f32.mrb[0].mxu0
      %v1080 = vadd.f32 0.0, %v1079
      %v1081 = vpop.f32.mrb[0].mxu0
      %1082 = vmatprep.mubr.f32.mxu0 0.0
      %1083 = vmatmul.mubr.f32.gmra.mrb[0].mxu0 %v881
      %v1084 = vpop.f32.mrb[0].mxu0
      %v1085 = vadd.f32 0.0, %v1084
      %v1086 = vpop.f32.mrb[0].mxu0
      %1087 = vmatprep.mubr.f32.mxu0 0.0
      %1088 = vmatmul.mubr.f32.gmra.mrb[0].mxu0 %v884
      %v1089 = vpop.f32.mrb[0].mxu0
      %v1090 = vadd.f32 0.0, %v1089
      %v1091 = vpop.f32.mrb[0].mxu0
      %1092 = vmatprep.mubr.f32.mxu0 0.0
      %1093 = vmatmul.mubr.f32.gmra.mrb[0].mxu0 %v887
      %v1094 = vpop.f32.mrb[0].mxu0
      %v1095 = vadd.f32 0.0, %v1094
      %v1096 = vpop.f32.mrb[0].mxu0
      %1097 = vmatprep.mubr.f32.mxu0 0.0
      %1098 = vmatmul.mubr.f32.gmra.mrb[0].mxu0 %v890
      %v1099 = vpop.f32.mrb[0].mxu0
      %v1100 = vadd.f32 0.0, %v1099
      %v1101 = vpop.f32.mrb[0].mxu0
      %1102 = vmatprep.mubr.f32.mxu0 0.0
      %1103 = vmatmul.mubr.f32.gmra.mrb[0].mxu0 %v893
      %v1104 = vpop.f32.mrb[0].mxu0
      %v1105 = vadd.f32 0.0, %v1104
      %v1106 = vpop.f32.mrb[0].mxu0
      %1107 = vmatprep.mubr.f32.mxu0 0.0
      %1108 = vmatmul.mubr.f32.gmra.mrb[0].mxu0 %v896
      %v1109 = vpop.f32.mrb[0].mxu0
      %v1110 = vadd.f32 0.0, %v1109
      %v1111 = vpop.f32.mrb[0].mxu0
      %1112 = vmatprep.mubr.f32.mxu0 0.0
      %1113 = vmatmul.mubr.f32.gmra.mrb[0].mxu0 %v899
      %v1114 = vpop.f32.mrb[0].mxu0
      %v1115 = vadd.f32 0.0, %v1114
      %v1116 = vpop.f32.mrb[0].mxu0
      %1117 = vmatprep.mubr.f32.mxu0 0.0
      %1118 = vmatmul.mubr.f32.gmra.mrb[0].mxu0 %v902
      %v1119 = vpop.f32.mrb[0].mxu0
      %v1120 = vadd.f32 0.0, %v1119
      %v1121 = vpop.f32.mrb[0].mxu0
      %1122 = vmatprep.mubr.f32.mxu0 0.0
      %1123 = vmatmul.mubr.f32.gmra.mrb[0].mxu0 %v905
      %v1124 = vpop.f32.mrb[0].mxu0
      %v1125 = vadd.f32 0.0, %v1124
      %v1126 = vpop.f32.mrb[0].mxu0
      %1127 = vmatprep.mubr.f32.mxu0 0.0
      %1128 = vmatmul.mubr.f32.gmra.mrb[0].mxu0 %v908
      %v1129 = vpop.f32.mrb[0].mxu0
      %v1130 = vadd.f32 0.0, %v1129
      %v1131 = vpop.f32.mrb[0].mxu0
      %1132 = vmatprep.mubr.f32.mxu0 0.0
      %1133 = vmatmul.mubr.f32.gmra.mrb[0].mxu0 %v911
      %v1134 = vpop.f32.mrb[0].mxu0
      %v1135 = vadd.f32 0.0, %v1134
      %v1136 = vpop.f32.mrb[0].mxu0
      %1137 = vmatprep.mubr.f32.mxu0 0.0
      %1138 = vmatmul.mubr.f32.gmra.mrb[0].mxu0 %v914
      %v1139 = vpop.f32.mrb[0].mxu0
      %v1140 = vadd.f32 0.0, %v1139
      %v1141 = vpop.f32.mrb[0].mxu0
      %1142 = vmatprep.mubr.f32.mxu0 0.0
      %1143 = vmatmul.mubr.f32.gmra.mrb[0].mxu0 %v917
      %v1144 = vpop.f32.mrb[0].mxu0
      %v1145 = vadd.f32 0.0, %v1144
      %v1146 = vpop.f32.mrb[0].mxu0
      %1147 = vdwg.mxu0
      %v1149 = vsel %vm171, %v756, 0
      %v1152 = vsel %vm171, %v757, 0
      %v1155 = vsel %vm171, %v758, 0
      %v1158 = vsel %vm171, %v759, 0
      %v1161 = vsel %vm171, %v760, 0
      %v1164 = vsel %vm171, %v761, 0
      %v1167 = vsel %vm171, %v762, 0
      %v1170 = vsel %vm171, %v763, 0
      %v1173 = vsel %vm171, %v764, 0
      %v1176 = vsel %vm171, %v765, 0
      %v1179 = vsel %vm171, %v766, 0
      %v1182 = vsel %vm171, %v767, 0
      %v1185 = vsel %vm171, %v768, 0
      %v1188 = vsel %vm171, %v769, 0
      %v1191 = vsel %vm171, %v770, 0
      %v1194 = vsel %vm171, %v771, 0
      %v1197 = vsel %vm171, %v772, 0
      %v1200 = vsel %vm171, %v773, 0
      %v1203 = vsel %vm171, %v774, 0
      %v1206 = vsel %vm171, %v775, 0
      %v1209 = vsel %vm171, %v776, 0
      %v1212 = vsel %vm171, %v777, 0
      %v1215 = vsel %vm171, %v778, 0
      %v1218 = vsel %vm171, %v779, 0
      %v1221 = vsel %vm171, %v780, 0
      %v1224 = vsel %vm171, %v781, 0
      %v1227 = vsel %vm171, %v782, 0
      %v1230 = vsel %vm171, %v783, 0
      %v1233 = vsel %vm171, %v784, 0
      %v1236 = vsel %vm171, %v785, 0
      %v1239 = vsel %vm171, %v786, 0
      %v1242 = vsel %vm171, %v787, 0
      %v1245 = vsel %vm919, %v788, 0
      %1247 = vmatprep.subr.mxu0 0.0
      %1248 = vmatpush1.msra.mxu0 %v1245
      %1249 = vmatprep.subr.mxu0 0.0
      %1250 = vmatpush1.msra.mxu0 0.0
      %1251 = vmatprep.subr.mxu0 0.0
      %1252 = vmatpush1.msra.mxu0 0.0
      %1253 = vmatprep.subr.mxu0 0.0
      %1254 = vmatpush1.msra.mxu0 0.0
      %1255 = vmatprep.subr.mxu0 0.0
      %1256 = vmatpush1.msra.mxu0 0.0
      %1257 = vmatprep.subr.mxu0 0.0
      %1258 = vmatpush1.msra.mxu0 0.0
      %1259 = vmatprep.subr.mxu0 0.0
      %1260 = vmatpush1.msra.mxu0 0.0
      %1261 = vmatprep.subr.mxu0 0.0
      %1262 = vmatpush1.msra.mxu0 0.0
      %1263 = vmatprep.subr.mxu0 0.0
      %1264 = vmatpush1.msra.mxu0 0.0
      %1265 = vmatprep.subr.mxu0 0.0
      %1266 = vmatpush1.msra.mxu0 0.0
      %1267 = vmatprep.subr.mxu0 0.0
      %1268 = vmatpush1.msra.mxu0 0.0
      %1269 = vmatprep.subr.mxu0 0.0
      %1270 = vmatpush1.msra.mxu0 0.0
      %1271 = vmatprep.subr.mxu0 0.0
      %1272 = vmatpush1.msra.mxu0 0.0
      %1273 = vmatprep.subr.mxu0 0.0
      %1274 = vmatpush1.msra.mxu0 0.0
      %1275 = vmatprep.subr.mxu0 0.0
      %1276 = vmatpush1.msra.mxu0 0.0
      %1277 = vmatprep.subr.mxu0 0.0
      %1278 = vmatpush1.msra.mxu0 0.0
      %1279 = vmatprep.subr.mxu0 0.0
      %1280 = vmatpush1.msra.mxu0 0.0
      %1281 = vmatprep.subr.mxu0 0.0
      %1282 = vmatpush1.msra.mxu0 0.0
      %1283 = vmatprep.subr.mxu0 0.0
      %1284 = vmatpush1.msra.mxu0 0.0
      %1285 = vmatprep.subr.mxu0 0.0
      %1286 = vmatpush1.msra.mxu0 0.0
      %1287 = vmatprep.subr.mxu0 0.0
      %1288 = vmatpush1.msra.mxu0 0.0
      %1289 = vmatprep.subr.mxu0 0.0
      %1290 = vmatpush1.msra.mxu0 0.0
      %1291 = vmatprep.subr.mxu0 0.0
      %1292 = vmatpush1.msra.mxu0 0.0
      %1293 = vmatprep.subr.mxu0 0.0
      %1294 = vmatpush1.msra.mxu0 0.0
      %1295 = vmatprep.subr.mxu0 0.0
      %1296 = vmatpush1.msra.mxu0 0.0
      %1297 = vmatprep.subr.mxu0 0.0
      %1298 = vmatpush1.msra.mxu0 0.0
      %1299 = vmatprep.subr.mxu0 0.0
      %1300 = vmatpush1.msra.mxu0 0.0
      %1301 = vmatprep.subr.mxu0 0.0
      %1302 = vmatpush1.msra.mxu0 0.0
      %1303 = vmatprep.subr.mxu0 0.0
      %1304 = vmatpush1.msra.mxu0 0.0
      %1305 = vmatprep.subr.mxu0 0.0
      %1306 = vmatpush1.msra.mxu0 0.0
      %1307 = vmatprep.subr.mxu0 0.0
      %1308 = vmatpush1.msra.mxu0 0.0
      %1309 = vmatprep.subr.mxu0 0.0
      %1310 = vmatpush1.msra.mxu0 0.0
      %1311 = vmatprep.mubr.f32.mxu0 0.0
      %1312 = vmatmul.mubr.f32.gmra.mrb[0].mxu0 %v1149
      %v1313 = vpop.f32.mrb[0].mxu0
      %v1314 = vadd.f32 %v990, %v1313
      %v1315 = vpop.f32.mrb[0].mxu0
      %1316 = vmatprep.mubr.f32.mxu0 0.0
      %1317 = vmatmul.mubr.f32.gmra.mrb[0].mxu0 %v1152
      %v1318 = vpop.f32.mrb[0].mxu0
      %v1319 = vadd.f32 %v995, %v1318
      %v1320 = vpop.f32.mrb[0].mxu0
      %1321 = vmatprep.mubr.f32.mxu0 0.0
      %1322 = vmatmul.mubr.f32.gmra.mrb[0].mxu0 %v1155
      %v1323 = vpop.f32.mrb[0].mxu0
      %v1324 = vadd.f32 %v1000, %v1323
      %v1325 = vpop.f32.mrb[0].mxu0
      %1326 = vmatprep.mubr.f32.mxu0 0.0
      %1327 = vmatmul.mubr.f32.gmra.mrb[0].mxu0 %v1158
      %v1328 = vpop.f32.mrb[0].mxu0
      %v1329 = vadd.f32 %v1005, %v1328
      %v1330 = vpop.f32.mrb[0].mxu0
      %1331 = vmatprep.mubr.f32.mxu0 0.0
      %1332 = vmatmul.mubr.f32.gmra.mrb[0].mxu0 %v1161
      %v1333 = vpop.f32.mrb[0].mxu0
      %v1334 = vadd.f32 %v1010, %v1333
      %v1335 = vpop.f32.mrb[0].mxu0
      %1336 = vmatprep.mubr.f32.mxu0 0.0
      %1337 = vmatmul.mubr.f32.gmra.mrb[0].mxu0 %v1164
      %v1338 = vpop.f32.mrb[0].mxu0
      %v1339 = vadd.f32 %v1015, %v1338
      %v1340 = vpop.f32.mrb[0].mxu0
      %1341 = vmatprep.mubr.f32.mxu0 0.0
      %1342 = vmatmul.mubr.f32.gmra.mrb[0].mxu0 %v1167
      %v1343 = vpop.f32.mrb[0].mxu0
      %v1344 = vadd.f32 %v1020, %v1343
      %v1345 = vpop.f32.mrb[0].mxu0
      %1346 = vmatprep.mubr.f32.mxu0 0.0
      %1347 = vmatmul.mubr.f32.gmra.mrb[0].mxu0 %v1170
      %v1348 = vpop.f32.mrb[0].mxu0
      %v1349 = vadd.f32 %v1025, %v1348
      %v1350 = vpop.f32.mrb[0].mxu0
      %1351 = vmatprep.mubr.f32.mxu0 0.0
      %1352 = vmatmul.mubr.f32.gmra.mrb[0].mxu0 %v1173
      %v1353 = vpop.f32.mrb[0].mxu0
      %v1354 = vadd.f32 %v1030, %v1353
      %v1355 = vpop.f32.mrb[0].mxu0
      %1356 = vmatprep.mubr.f32.mxu0 0.0
      %1357 = vmatmul.mubr.f32.gmra.mrb[0].mxu0 %v1176
      %v1358 = vpop.f32.mrb[0].mxu0
      %v1359 = vadd.f32 %v1035, %v1358
      %v1360 = vpop.f32.mrb[0].mxu0
      %1361 = vmatprep.mubr.f32.mxu0 0.0
      %1362 = vmatmul.mubr.f32.gmra.mrb[0].mxu0 %v1179
      %v1363 = vpop.f32.mrb[0].mxu0
      %v1364 = vadd.f32 %v1040, %v1363
      %v1365 = vpop.f32.mrb[0].mxu0
      %1366 = vmatprep.mubr.f32.mxu0 0.0
      %1367 = vmatmul.mubr.f32.gmra.mrb[0].mxu0 %v1182
      %v1368 = vpop.f32.mrb[0].mxu0
      %v1369 = vadd.f32 %v1045, %v1368
      %v1370 = vpop.f32.mrb[0].mxu0
      %1371 = vmatprep.mubr.f32.mxu0 0.0
      %1372 = vmatmul.mubr.f32.gmra.mrb[0].mxu0 %v1185
      %v1373 = vpop.f32.mrb[0].mxu0
      %v1374 = vadd.f32 %v1050, %v1373
      %v1375 = vpop.f32.mrb[0].mxu0
      %1376 = vmatprep.mubr.f32.mxu0 0.0
      %1377 = vmatmul.mubr.f32.gmra.mrb[0].mxu0 %v1188
      %v1378 = vpop.f32.mrb[0].mxu0
      %v1379 = vadd.f32 %v1055, %v1378
      %v1380 = vpop.f32.mrb[0].mxu0
      %1381 = vmatprep.mubr.f32.mxu0 0.0
      %1382 = vmatmul.mubr.f32.gmra.mrb[0].mxu0 %v1191
      %v1383 = vpop.f32.mrb[0].mxu0
      %v1384 = vadd.f32 %v1060, %v1383
      %v1385 = vpop.f32.mrb[0].mxu0
      %1386 = vmatprep.mubr.f32.mxu0 0.0
      %1387 = vmatmul.mubr.f32.gmra.mrb[0].mxu0 %v1194
      %v1388 = vpop.f32.mrb[0].mxu0
      %v1389 = vadd.f32 %v1065, %v1388
      %v1390 = vpop.f32.mrb[0].mxu0
      %1391 = vmatprep.mubr.f32.mxu0 0.0
      %1392 = vmatmul.mubr.f32.gmra.mrb[0].mxu0 %v1197
      %v1393 = vpop.f32.mrb[0].mxu0
      %v1394 = vadd.f32 %v1070, %v1393
      %v1395 = vpop.f32.mrb[0].mxu0
      %1396 = vmatprep.mubr.f32.mxu0 0.0
      %1397 = vmatmul.mubr.f32.gmra.mrb[0].mxu0 %v1200
      %v1398 = vpop.f32.mrb[0].mxu0
      %v1399 = vadd.f32 %v1075, %v1398
      %v1400 = vpop.f32.mrb[0].mxu0
      %1401 = vmatprep.mubr.f32.mxu0 0.0
      %1402 = vmatmul.mubr.f32.gmra.mrb[0].mxu0 %v1203
      %v1403 = vpop.f32.mrb[0].mxu0
      %v1404 = vadd.f32 %v1080, %v1403
      %v1405 = vpop.f32.mrb[0].mxu0
      %1406 = vmatprep.mubr.f32.mxu0 0.0
      %1407 = vmatmul.mubr.f32.gmra.mrb[0].mxu0 %v1206
      %v1408 = vpop.f32.mrb[0].mxu0
      %v1409 = vadd.f32 %v1085, %v1408
      %v1410 = vpop.f32.mrb[0].mxu0
      %1411 = vmatprep.mubr.f32.mxu0 0.0
      %1412 = vmatmul.mubr.f32.gmra.mrb[0].mxu0 %v1209
      %v1413 = vpop.f32.mrb[0].mxu0
      %v1414 = vadd.f32 %v1090, %v1413
      %v1415 = vpop.f32.mrb[0].mxu0
      %1416 = vmatprep.mubr.f32.mxu0 0.0
      %1417 = vmatmul.mubr.f32.gmra.mrb[0].mxu0 %v1212
      %v1418 = vpop.f32.mrb[0].mxu0
      %v1419 = vadd.f32 %v1095, %v1418
      %v1420 = vpop.f32.mrb[0].mxu0
      %1421 = vmatprep.mubr.f32.mxu0 0.0
      %1422 = vmatmul.mubr.f32.gmra.mrb[0].mxu0 %v1215
      %v1423 = vpop.f32.mrb[0].mxu0
      %v1424 = vadd.f32 %v1100, %v1423
      %v1425 = vpop.f32.mrb[0].mxu0
      %1426 = vmatprep.mubr.f32.mxu0 0.0
      %1427 = vmatmul.mubr.f32.gmra.mrb[0].mxu0 %v1218
      %v1428 = vpop.f32.mrb[0].mxu0
      %v1429 = vadd.f32 %v1105, %v1428
      %v1430 = vpop.f32.mrb[0].mxu0
      %1431 = vmatprep.mubr.f32.mxu0 0.0
      %1432 = vmatmul.mubr.f32.gmra.mrb[0].mxu0 %v1221
      %v1433 = vpop.f32.mrb[0].mxu0
      %v1434 = vadd.f32 %v1110, %v1433
      %v1435 = vpop.f32.mrb[0].mxu0
      %1436 = vmatprep.mubr.f32.mxu0 0.0
      %1437 = vmatmul.mubr.f32.gmra.mrb[0].mxu0 %v1224
      %v1438 = vpop.f32.mrb[0].mxu0
      %v1439 = vadd.f32 %v1115, %v1438
      %v1440 = vpop.f32.mrb[0].mxu0
      %1441 = vmatprep.mubr.f32.mxu0 0.0
      %1442 = vmatmul.mubr.f32.gmra.mrb[0].mxu0 %v1227
      %v1443 = vpop.f32.mrb[0].mxu0
      %v1444 = vadd.f32 %v1120, %v1443
      %v1445 = vpop.f32.mrb[0].mxu0
      %1446 = vmatprep.mubr.f32.mxu0 0.0
      %1447 = vmatmul.mubr.f32.gmra.mrb[0].mxu0 %v1230
      %v1448 = vpop.f32.mrb[0].mxu0
      %v1449 = vadd.f32 %v1125, %v1448
      %v1450 = vpop.f32.mrb[0].mxu0
      %1451 = vmatprep.mubr.f32.mxu0 0.0
      %1452 = vmatmul.mubr.f32.gmra.mrb[0].mxu0 %v1233
      %v1453 = vpop.f32.mrb[0].mxu0
      %v1454 = vadd.f32 %v1130, %v1453
      %v1455 = vpop.f32.mrb[0].mxu0
      %1456 = vmatprep.mubr.f32.mxu0 0.0
      %1457 = vmatmul.mubr.f32.gmra.mrb[0].mxu0 %v1236
      %v1458 = vpop.f32.mrb[0].mxu0
      %v1459 = vadd.f32 %v1135, %v1458
      %v1460 = vpop.f32.mrb[0].mxu0
      %1461 = vmatprep.mubr.f32.mxu0 0.0
      %1462 = vmatmul.mubr.f32.gmra.mrb[0].mxu0 %v1239
      %v1463 = vpop.f32.mrb[0].mxu0
      %v1464 = vadd.f32 %v1140, %v1463
      %v1465 = vpop.f32.mrb[0].mxu0
      %1466 = vmatprep.mubr.f32.mxu0 0.0
      %1467 = vmatmul.mubr.f32.gmra.mrb[0].mxu0 %v1242
      %v1468 = vpop.f32.mrb[0].mxu0
      %v1469 = vadd.f32 %v1145, %v1468
      %v1470 = vpop.f32.mrb[0].mxu0
      %1471 = vdwg.mxu0
      %v1472 = vld [vmem:[#allocation2 + $0x2] sm:$0xff]
      %v1473 = vld [vmem:[#allocation2 + $0xa] sm:$0xff]
      %v1474 = vld [vmem:[#allocation2 + $0x12] sm:$0xff]
      %v1475 = vld [vmem:[#allocation2 + $0x1a] sm:$0xff]
      %v1476 = vld [vmem:[#allocation2 + $0x22] sm:$0xff]
      %v1477 = vld [vmem:[#allocation2 + $0x2a] sm:$0xff]
      %v1478 = vld [vmem:[#allocation2 + $0x32] sm:$0xff]
      %v1479 = vld [vmem:[#allocation2 + $0x3a] sm:$0xff]
      %v1480 = vld [vmem:[#allocation2 + $0x42] sm:$0xff]
      %v1481 = vld [vmem:[#allocation2 + $0x4a] sm:$0xff]
      %v1482 = vld [vmem:[#allocation2 + $0x52] sm:$0xff]
      %v1483 = vld [vmem:[#allocation2 + $0x5a] sm:$0xff]
      %v1484 = vld [vmem:[#allocation2 + $0x62] sm:$0xff]
      %v1485 = vld [vmem:[#allocation2 + $0x6a] sm:$0xff]
      %v1486 = vld [vmem:[#allocation2 + $0x72] sm:$0xff]
      %v1487 = vld [vmem:[#allocation2 + $0x7a] sm:$0xff]
      %v1488 = vld [vmem:[#allocation2 + $0x82] sm:$0xff]
      %v1489 = vld [vmem:[#allocation2 + $0x8a] sm:$0xff]
      %v1490 = vld [vmem:[#allocation2 + $0x92] sm:$0xff]
      %v1491 = vld [vmem:[#allocation2 + $0x9a] sm:$0xff]
      %v1492 = vld [vmem:[#allocation2 + $0xa2] sm:$0xff]
      %v1493 = vld [vmem:[#allocation2 + $0xaa] sm:$0xff]
      %v1494 = vld [vmem:[#allocation2 + $0xb2] sm:$0xff]
      %v1495 = vld [vmem:[#allocation2 + $0xba] sm:$0xff]
      %v1496 = vld [vmem:[#allocation2 + $0xc2] sm:$0xff]
      %v1497 = vld [vmem:[#allocation2 + $0xca] sm:$0xff]
      %v1498 = vld [vmem:[#allocation2 + $0xd2] sm:$0xff]
      %v1499 = vld [vmem:[#allocation2 + $0xda] sm:$0xff]
      %v1500 = vld [vmem:[#allocation2 + $0xe2] sm:$0xff]
      %v1501 = vld [vmem:[#allocation2 + $0xea] sm:$0xff]
      %v1502 = vld [vmem:[#allocation2 + $0xf2] sm:$0xff]
      %v1503 = vld [vmem:[#allocation2 + $0xfa] sm:$0xff]
      %v1504 = vsel %vm692, %v1472, 0.0
      %v1505 = vsel %vm693, %v1473, 0.0
      %v1506 = vsel %vm694, %v1474, 0.0
      %v1507 = vsel %vm695, %v1475, 0.0
      %v1508 = vsel %vm696, %v1476, 0.0
      %v1509 = vsel %vm697, %v1477, 0.0
      %v1510 = vsel %vm698, %v1478, 0.0
      %v1511 = vsel %vm699, %v1479, 0.0
      %v1512 = vsel %vm700, %v1480, 0.0
      %v1513 = vsel %vm701, %v1481, 0.0
      %v1514 = vsel %vm702, %v1482, 0.0
      %v1515 = vsel %vm703, %v1483, 0.0
      %v1516 = vsel %vm704, %v1484, 0.0
      %v1517 = vsel %vm705, %v1485, 0.0
      %v1518 = vsel %vm706, %v1486, 0.0
      %v1519 = vsel %vm707, %v1487, 0.0
      %v1520 = vsel %vm708, %v1488, 0.0
      %v1521 = vsel %vm709, %v1489, 0.0
      %v1522 = vsel %vm710, %v1490, 0.0
      %v1523 = vsel %vm711, %v1491, 0.0
      %v1524 = vsel %vm712, %v1492, 0.0
      %v1525 = vsel %vm713, %v1493, 0.0
      %v1526 = vsel %vm714, %v1494, 0.0
      %v1527 = vsel %vm715, %v1495, 0.0
      %v1528 = vsel %vm716, %v1496, 0.0
      %v1529 = vsel %vm717, %v1497, 0.0
      %v1530 = vsel %vm718, %v1498, 0.0
      %v1531 = vsel %vm719, %v1499, 0.0
      %v1532 = vsel %vm720, %v1500, 0.0
      %v1533 = vsel %vm721, %v1501, 0.0
      %v1534 = vsel %vm722, %v1502, 0.0
      %v1535 = vsel %vm723, %v1503, 0.0
      %s1536 = scalar_lea.vmem %s1, 8
      %v1537 = vld [vmem:[%s1536] sm:$0xf]
      %v1539 = vsel %vm171, %v1504, 0
      %v1542 = vsel %vm171, %v1505, 0
      %v1545 = vsel %vm171, %v1506, 0
      %v1548 = vsel %vm171, %v1507, 0
      %v1551 = vsel %vm171, %v1508, 0
      %v1554 = vsel %vm171, %v1509, 0
      %v1557 = vsel %vm171, %v1510, 0
      %v1560 = vsel %vm171, %v1511, 0
      %v1563 = vsel %vm171, %v1512, 0
      %v1566 = vsel %vm171, %v1513, 0
      %v1569 = vsel %vm171, %v1514, 0
      %v1572 = vsel %vm171, %v1515, 0
      %v1575 = vsel %vm171, %v1516, 0
      %v1578 = vsel %vm171, %v1517, 0
      %v1581 = vsel %vm171, %v1518, 0
      %v1584 = vsel %vm171, %v1519, 0
      %v1587 = vsel %vm171, %v1520, 0
      %v1590 = vsel %vm171, %v1521, 0
      %v1593 = vsel %vm171, %v1522, 0
      %v1596 = vsel %vm171, %v1523, 0
      %v1599 = vsel %vm171, %v1524, 0
      %v1602 = vsel %vm171, %v1525, 0
      %v1605 = vsel %vm171, %v1526, 0
      %v1608 = vsel %vm171, %v1527, 0
      %v1611 = vsel %vm171, %v1528, 0
      %v1614 = vsel %vm171, %v1529, 0
      %v1617 = vsel %vm171, %v1530, 0
      %v1620 = vsel %vm171, %v1531, 0
      %v1623 = vsel %vm171, %v1532, 0
      %v1626 = vsel %vm171, %v1533, 0
      %v1629 = vsel %vm171, %v1534, 0
      %v1632 = vsel %vm171, %v1535, 0
      %v1635 = vsel %vm919, %v1537, 0
      %1637 = vmatprep.subr.mxu0 0.0
      %1638 = vmatpush1.msra.mxu0 %v1635
      %1639 = vmatprep.subr.mxu0 0.0
      %1640 = vmatpush1.msra.mxu0 0.0
      %1641 = vmatprep.subr.mxu0 0.0
      %1642 = vmatpush1.msra.mxu0 0.0
      %1643 = vmatprep.subr.mxu0 0.0
      %1644 = vmatpush1.msra.mxu0 0.0
      %1645 = vmatprep.subr.mxu0 0.0
      %1646 = vmatpush1.msra.mxu0 0.0
      %1647 = vmatprep.subr.mxu0 0.0
      %1648 = vmatpush1.msra.mxu0 0.0
      %1649 = vmatprep.subr.mxu0 0.0
      %1650 = vmatpush1.msra.mxu0 0.0
      %1651 = vmatprep.subr.mxu0 0.0
      %1652 = vmatpush1.msra.mxu0 0.0
      %1653 = vmatprep.subr.mxu0 0.0
      %1654 = vmatpush1.msra.mxu0 0.0
      %1655 = vmatprep.subr.mxu0 0.0
      %1656 = vmatpush1.msra.mxu0 0.0
      %1657 = vmatprep.subr.mxu0 0.0
      %1658 = vmatpush1.msra.mxu0 0.0
      %1659 = vmatprep.subr.mxu0 0.0
      %1660 = vmatpush1.msra.mxu0 0.0
      %1661 = vmatprep.subr.mxu0 0.0
      %1662 = vmatpush1.msra.mxu0 0.0
      %1663 = vmatprep.subr.mxu0 0.0
      %1664 = vmatpush1.msra.mxu0 0.0
      %1665 = vmatprep.subr.mxu0 0.0
      %1666 = vmatpush1.msra.mxu0 0.0
      %1667 = vmatprep.subr.mxu0 0.0
      %1668 = vmatpush1.msra.mxu0 0.0
      %1669 = vmatprep.subr.mxu0 0.0
      %1670 = vmatpush1.msra.mxu0 0.0
      %1671 = vmatprep.subr.mxu0 0.0
      %1672 = vmatpush1.msra.mxu0 0.0
      %1673 = vmatprep.subr.mxu0 0.0
      %1674 = vmatpush1.msra.mxu0 0.0
      %1675 = vmatprep.subr.mxu0 0.0
      %1676 = vmatpush1.msra.mxu0 0.0
      %1677 = vmatprep.subr.mxu0 0.0
      %1678 = vmatpush1.msra.mxu0 0.0
      %1679 = vmatprep.subr.mxu0 0.0
      %1680 = vmatpush1.msra.mxu0 0.0
      %1681 = vmatprep.subr.mxu0 0.0
      %1682 = vmatpush1.msra.mxu0 0.0
      %1683 = vmatprep.subr.mxu0 0.0
      %1684 = vmatpush1.msra.mxu0 0.0
      %1685 = vmatprep.subr.mxu0 0.0
      %1686 = vmatpush1.msra.mxu0 0.0
      %1687 = vmatprep.subr.mxu0 0.0
      %1688 = vmatpush1.msra.mxu0 0.0
      %1689 = vmatprep.subr.mxu0 0.0
      %1690 = vmatpush1.msra.mxu0 0.0
      %1691 = vmatprep.subr.mxu0 0.0
      %1692 = vmatpush1.msra.mxu0 0.0
      %1693 = vmatprep.subr.mxu0 0.0
      %1694 = vmatpush1.msra.mxu0 0.0
      %1695 = vmatprep.subr.mxu0 0.0
      %1696 = vmatpush1.msra.mxu0 0.0
      %1697 = vmatprep.subr.mxu0 0.0
      %1698 = vmatpush1.msra.mxu0 0.0
      %1699 = vmatprep.subr.mxu0 0.0
      %1700 = vmatpush1.msra.mxu0 0.0
      %1701 = vmatprep.mubr.f32.mxu0 0.0
      %1702 = vmatmul.mubr.f32.gmra.mrb[0].mxu0 %v1539
      %v1703 = vpop.f32.mrb[0].mxu0
      %v1704 = vadd.f32 0.0, %v1703
      %v1705 = vpop.f32.mrb[0].mxu0
      %1706 = vmatprep.mubr.f32.mxu0 0.0
      %1707 = vmatmul.mubr.f32.gmra.mrb[0].mxu0 %v1542
      %v1708 = vpop.f32.mrb[0].mxu0
      %v1709 = vadd.f32 0.0, %v1708
      %v1710 = vpop.f32.mrb[0].mxu0
      %1711 = vmatprep.mubr.f32.mxu0 0.0
      %1712 = vmatmul.mubr.f32.gmra.mrb[0].mxu0 %v1545
      %v1713 = vpop.f32.mrb[0].mxu0
      %v1714 = vadd.f32 0.0, %v1713
      %v1715 = vpop.f32.mrb[0].mxu0
      %1716 = vmatprep.mubr.f32.mxu0 0.0
      %1717 = vmatmul.mubr.f32.gmra.mrb[0].mxu0 %v1548
      %v1718 = vpop.f32.mrb[0].mxu0
      %v1719 = vadd.f32 0.0, %v1718
      %v1720 = vpop.f32.mrb[0].mxu0
      %1721 = vmatprep.mubr.f32.mxu0 0.0
      %1722 = vmatmul.mubr.f32.gmra.mrb[0].mxu0 %v1551
      %v1723 = vpop.f32.mrb[0].mxu0
      %v1724 = vadd.f32 0.0, %v1723
      %v1725 = vpop.f32.mrb[0].mxu0
      %1726 = vmatprep.mubr.f32.mxu0 0.0
      %1727 = vmatmul.mubr.f32.gmra.mrb[0].mxu0 %v1554
      %v1728 = vpop.f32.mrb[0].mxu0
      %v1729 = vadd.f32 0.0, %v1728
      %v1730 = vpop.f32.mrb[0].mxu0
      %1731 = vmatprep.mubr.f32.mxu0 0.0
      %1732 = vmatmul.mubr.f32.gmra.mrb[0].mxu0 %v1557
      %v1733 = vpop.f32.mrb[0].mxu0
      %v1734 = vadd.f32 0.0, %v1733
      %v1735 = vpop.f32.mrb[0].mxu0
      %1736 = vmatprep.mubr.f32.mxu0 0.0
      %1737 = vmatmul.mubr.f32.gmra.mrb[0].mxu0 %v1560
      %v1738 = vpop.f32.mrb[0].mxu0
      %v1739 = vadd.f32 0.0, %v1738
      %v1740 = vpop.f32.mrb[0].mxu0
      %1741 = vmatprep.mubr.f32.mxu0 0.0
      %1742 = vmatmul.mubr.f32.gmra.mrb[0].mxu0 %v1563
      %v1743 = vpop.f32.mrb[0].mxu0
      %v1744 = vadd.f32 0.0, %v1743
      %v1745 = vpop.f32.mrb[0].mxu0
      %1746 = vmatprep.mubr.f32.mxu0 0.0
      %1747 = vmatmul.mubr.f32.gmra.mrb[0].mxu0 %v1566
      %v1748 = vpop.f32.mrb[0].mxu0
      %v1749 = vadd.f32 0.0, %v1748
      %v1750 = vpop.f32.mrb[0].mxu0
      %1751 = vmatprep.mubr.f32.mxu0 0.0
      %1752 = vmatmul.mubr.f32.gmra.mrb[0].mxu0 %v1569
      %v1753 = vpop.f32.mrb[0].mxu0
      %v1754 = vadd.f32 0.0, %v1753
      %v1755 = vpop.f32.mrb[0].mxu0
      %1756 = vmatprep.mubr.f32.mxu0 0.0
      %1757 = vmatmul.mubr.f32.gmra.mrb[0].mxu0 %v1572
      %v1758 = vpop.f32.mrb[0].mxu0
      %v1759 = vadd.f32 0.0, %v1758
      %v1760 = vpop.f32.mrb[0].mxu0
      %1761 = vmatprep.mubr.f32.mxu0 0.0
      %1762 = vmatmul.mubr.f32.gmra.mrb[0].mxu0 %v1575
      %v1763 = vpop.f32.mrb[0].mxu0
      %v1764 = vadd.f32 0.0, %v1763
      %v1765 = vpop.f32.mrb[0].mxu0
      %1766 = vmatprep.mubr.f32.mxu0 0.0
      %1767 = vmatmul.mubr.f32.gmra.mrb[0].mxu0 %v1578
      %v1768 = vpop.f32.mrb[0].mxu0
      %v1769 = vadd.f32 0.0, %v1768
      %v1770 = vpop.f32.mrb[0].mxu0
      %1771 = vmatprep.mubr.f32.mxu0 0.0
      %1772 = vmatmul.mubr.f32.gmra.mrb[0].mxu0 %v1581
      %v1773 = vpop.f32.mrb[0].mxu0
      %v1774 = vadd.f32 0.0, %v1773
      %v1775 = vpop.f32.mrb[0].mxu0
      %1776 = vmatprep.mubr.f32.mxu0 0.0
      %1777 = vmatmul.mubr.f32.gmra.mrb[0].mxu0 %v1584
      %v1778 = vpop.f32.mrb[0].mxu0
      %v1779 = vadd.f32 0.0, %v1778
      %v1780 = vpop.f32.mrb[0].mxu0
      %1781 = vmatprep.mubr.f32.mxu0 0.0
      %1782 = vmatmul.mubr.f32.gmra.mrb[0].mxu0 %v1587
      %v1783 = vpop.f32.mrb[0].mxu0
      %v1784 = vadd.f32 0.0, %v1783
      %v1785 = vpop.f32.mrb[0].mxu0
      %1786 = vmatprep.mubr.f32.mxu0 0.0
      %1787 = vmatmul.mubr.f32.gmra.mrb[0].mxu0 %v1590
      %v1788 = vpop.f32.mrb[0].mxu0
      %v1789 = vadd.f32 0.0, %v1788
      %v1790 = vpop.f32.mrb[0].mxu0
      %1791 = vmatprep.mubr.f32.mxu0 0.0
      %1792 = vmatmul.mubr.f32.gmra.mrb[0].mxu0 %v1593
      %v1793 = vpop.f32.mrb[0].mxu0
      %v1794 = vadd.f32 0.0, %v1793
      %v1795 = vpop.f32.mrb[0].mxu0
      %1796 = vmatprep.mubr.f32.mxu0 0.0
      %1797 = vmatmul.mubr.f32.gmra.mrb[0].mxu0 %v1596
      %v1798 = vpop.f32.mrb[0].mxu0
      %v1799 = vadd.f32 0.0, %v1798
      %v1800 = vpop.f32.mrb[0].mxu0
      %1801 = vmatprep.mubr.f32.mxu0 0.0
      %1802 = vmatmul.mubr.f32.gmra.mrb[0].mxu0 %v1599
      %v1803 = vpop.f32.mrb[0].mxu0
      %v1804 = vadd.f32 0.0, %v1803
      %v1805 = vpop.f32.mrb[0].mxu0
      %1806 = vmatprep.mubr.f32.mxu0 0.0
      %1807 = vmatmul.mubr.f32.gmra.mrb[0].mxu0 %v1602
      %v1808 = vpop.f32.mrb[0].mxu0
      %v1809 = vadd.f32 0.0, %v1808
      %v1810 = vpop.f32.mrb[0].mxu0
      %1811 = vmatprep.mubr.f32.mxu0 0.0
      %1812 = vmatmul.mubr.f32.gmra.mrb[0].mxu0 %v1605
      %v1813 = vpop.f32.mrb[0].mxu0
      %v1814 = vadd.f32 0.0, %v1813
      %v1815 = vpop.f32.mrb[0].mxu0
      %1816 = vmatprep.mubr.f32.mxu0 0.0
      %1817 = vmatmul.mubr.f32.gmra.mrb[0].mxu0 %v1608
      %v1818 = vpop.f32.mrb[0].mxu0
      %v1819 = vadd.f32 0.0, %v1818
      %v1820 = vpop.f32.mrb[0].mxu0
      %1821 = vmatprep.mubr.f32.mxu0 0.0
      %1822 = vmatmul.mubr.f32.gmra.mrb[0].mxu0 %v1611
      %v1823 = vpop.f32.mrb[0].mxu0
      %v1824 = vadd.f32 0.0, %v1823
      %v1825 = vpop.f32.mrb[0].mxu0
      %1826 = vmatprep.mubr.f32.mxu0 0.0
      %1827 = vmatmul.mubr.f32.gmra.mrb[0].mxu0 %v1614
      %v1828 = vpop.f32.mrb[0].mxu0
      %v1829 = vadd.f32 0.0, %v1828
      %v1830 = vpop.f32.mrb[0].mxu0
      %1831 = vmatprep.mubr.f32.mxu0 0.0
      %1832 = vmatmul.mubr.f32.gmra.mrb[0].mxu0 %v1617
      %v1833 = vpop.f32.mrb[0].mxu0
      %v1834 = vadd.f32 0.0, %v1833
      %v1835 = vpop.f32.mrb[0].mxu0
      %1836 = vmatprep.mubr.f32.mxu0 0.0
      %1837 = vmatmul.mubr.f32.gmra.mrb[0].mxu0 %v1620
      %v1838 = vpop.f32.mrb[0].mxu0
      %v1839 = vadd.f32 0.0, %v1838
      %v1840 = vpop.f32.mrb[0].mxu0
      %1841 = vmatprep.mubr.f32.mxu0 0.0
      %1842 = vmatmul.mubr.f32.gmra.mrb[0].mxu0 %v1623
      %v1843 = vpop.f32.mrb[0].mxu0
      %v1844 = vadd.f32 0.0, %v1843
      %v1845 = vpop.f32.mrb[0].mxu0
      %1846 = vmatprep.mubr.f32.mxu0 0.0
      %1847 = vmatmul.mubr.f32.gmra.mrb[0].mxu0 %v1626
      %v1848 = vpop.f32.mrb[0].mxu0
      %v1849 = vadd.f32 0.0, %v1848
      %v1850 = vpop.f32.mrb[0].mxu0
      %1851 = vmatprep.mubr.f32.mxu0 0.0
      %1852 = vmatmul.mubr.f32.gmra.mrb[0].mxu0 %v1629
      %v1853 = vpop.f32.mrb[0].mxu0
      %v1854 = vadd.f32 0.0, %v1853
      %v1855 = vpop.f32.mrb[0].mxu0
      %1856 = vmatprep.mubr.f32.mxu0 0.0
      %1857 = vmatmul.mubr.f32.gmra.mrb[0].mxu0 %v1632
      %v1858 = vpop.f32.mrb[0].mxu0
      %v1859 = vadd.f32 0.0, %v1858
      %v1860 = vpop.f32.mrb[0].mxu0
      %1861 = vdwg.mxu0
      %v1862 = vadd.f32 %v1314, %v1704
      %v1863 = vadd.f32 %v1319, %v1709
      %v1864 = vadd.f32 %v1324, %v1714
      %v1865 = vadd.f32 %v1329, %v1719
      %v1866 = vadd.f32 %v1334, %v1724
      %v1867 = vadd.f32 %v1339, %v1729
      %v1868 = vadd.f32 %v1344, %v1734
      %v1869 = vadd.f32 %v1349, %v1739
      %v1870 = vadd.f32 %v1354, %v1744
      %v1871 = vadd.f32 %v1359, %v1749
      %v1872 = vadd.f32 %v1364, %v1754
      %v1873 = vadd.f32 %v1369, %v1759
      %v1874 = vadd.f32 %v1374, %v1764
      %v1875 = vadd.f32 %v1379, %v1769
      %v1876 = vadd.f32 %v1384, %v1774
      %v1877 = vadd.f32 %v1389, %v1779
      %v1878 = vadd.f32 %v1394, %v1784
      %v1879 = vadd.f32 %v1399, %v1789
      %v1880 = vadd.f32 %v1404, %v1794
      %v1881 = vadd.f32 %v1409, %v1799
      %v1882 = vadd.f32 %v1414, %v1804
      %v1883 = vadd.f32 %v1419, %v1809
      %v1884 = vadd.f32 %v1424, %v1814
      %v1885 = vadd.f32 %v1429, %v1819
      %v1886 = vadd.f32 %v1434, %v1824
      %v1887 = vadd.f32 %v1439, %v1829
      %v1888 = vadd.f32 %v1444, %v1834
      %v1889 = vadd.f32 %v1449, %v1839
      %v1890 = vadd.f32 %v1454, %v1844
      %v1891 = vadd.f32 %v1459, %v1849
      %v1892 = vadd.f32 %v1464, %v1854
      %v1893 = vadd.f32 %v1469, %v1859
      %v1894 = vld [vmem:[#allocation2 + $0x10] sm:$0xff]
      %v1895 = vld [vmem:[#allocation2 + $0x18] sm:$0xff]
      %v1896 = vld [vmem:[#allocation2 + $0x20] sm:$0xff]
      %v1897 = vld [vmem:[#allocation2 + $0x28] sm:$0xff]
      %v1898 = vld [vmem:[#allocation2 + $0x30] sm:$0xff]
      %v1899 = vld [vmem:[#allocation2 + $0x38] sm:$0xff]
      %v1900 = vld [vmem:[#allocation2 + $0x40] sm:$0xff]
      %v1901 = vld [vmem:[#allocation2 + $0x48] sm:$0xff]
      %v1902 = vld [vmem:[#allocation2 + $0x50] sm:$0xff]
      %v1903 = vld [vmem:[#allocation2 + $0x58] sm:$0xff]
      %v1904 = vld [vmem:[#allocation2 + $0x60] sm:$0xff]
      %v1905 = vld [vmem:[#allocation2 + $0x68] sm:$0xff]
      %v1906 = vld [vmem:[#allocation2 + $0x70] sm:$0xff]
      %v1907 = vld [vmem:[#allocation2 + $0x78] sm:$0xff]
      %v1908 = vld [vmem:[#allocation2 + $0x80] sm:$0xff]
      %v1909 = vld [vmem:[#allocation2 + $0x88] sm:$0xff]
      %v1910 = vld [vmem:[#allocation2 + $0x90] sm:$0xff]
      %v1911 = vld [vmem:[#allocation2 + $0x98] sm:$0xff]
      %v1912 = vld [vmem:[#allocation2 + $0xa0] sm:$0xff]
      %v1913 = vld [vmem:[#allocation2 + $0xa8] sm:$0xff]
      %v1914 = vld [vmem:[#allocation2 + $0xb0] sm:$0xff]
      %v1915 = vld [vmem:[#allocation2 + $0xb8] sm:$0xff]
      %v1916 = vld [vmem:[#allocation2 + $0xc0] sm:$0xff]
      %v1917 = vld [vmem:[#allocation2 + $0xc8] sm:$0xff]
      %v1918 = vld [vmem:[#allocation2 + $0xd0] sm:$0xff]
      %v1919 = vld [vmem:[#allocation2 + $0xd8] sm:$0xff]
      %v1920 = vld [vmem:[#allocation2 + $0xe0] sm:$0xff]
      %v1921 = vld [vmem:[#allocation2 + $0xe8] sm:$0xff]
      %v1922 = vld [vmem:[#allocation2 + $0xf0] sm:$0xff]
      %v1923 = vld [vmem:[#allocation2 + $0xf8] sm:$0xff]
      %v1924 = vld [vmem:[#allocation2 + $0x100] sm:$0xff]
      %v1925 = vld [vmem:[#allocation2 + $0x108] sm:$0xff]
      %v1926 = vsel %vm660, %v1894, 0.0
      %v1927 = vsel %vm661, %v1895, 0.0
      %v1928 = vsel %vm662, %v1896, 0.0
      %v1929 = vsel %vm663, %v1897, 0.0
      %v1930 = vsel %vm664, %v1898, 0.0
      %v1931 = vsel %vm665, %v1899, 0.0
      %v1932 = vsel %vm666, %v1900, 0.0
      %v1933 = vsel %vm667, %v1901, 0.0
      %v1934 = vsel %vm668, %v1902, 0.0
      %v1935 = vsel %vm669, %v1903, 0.0
      %v1936 = vsel %vm670, %v1904, 0.0
      %v1937 = vsel %vm671, %v1905, 0.0
      %v1938 = vsel %vm672, %v1906, 0.0
      %v1939 = vsel %vm673, %v1907, 0.0
      %v1940 = vsel %vm674, %v1908, 0.0
      %v1941 = vsel %vm675, %v1909, 0.0
      %v1942 = vsel %vm676, %v1910, 0.0
      %v1943 = vsel %vm677, %v1911, 0.0
      %v1944 = vsel %vm678, %v1912, 0.0
      %v1945 = vsel %vm679, %v1913, 0.0
      %v1946 = vsel %vm680, %v1914, 0.0
      %v1947 = vsel %vm681, %v1915, 0.0
      %v1948 = vsel %vm682, %v1916, 0.0
      %v1949 = vsel %vm683, %v1917, 0.0
      %v1950 = vsel %vm684, %v1918, 0.0
      %v1951 = vsel %vm685, %v1919, 0.0
      %v1952 = vsel %vm686, %v1920, 0.0
      %v1953 = vsel %vm687, %v1921, 0.0
      %v1954 = vsel %vm688, %v1922, 0.0
      %v1955 = vsel %vm689, %v1923, 0.0
      %v1956 = vsel %vm690, %v1924, 0.0
      %v1957 = vsel %vm691, %v1925, 0.0
      %s1958 = scalar_lea.vmem %s1, 12
      %v1959 = vld [vmem:[%s1958] sm:$0xf]
      %v1961 = vsel %vm171, %v1926, 0
      %v1964 = vsel %vm171, %v1927, 0
      %v1967 = vsel %vm171, %v1928, 0
      %v1970 = vsel %vm171, %v1929, 0
      %v1973 = vsel %vm171, %v1930, 0
      %v1976 = vsel %vm171, %v1931, 0
      %v1979 = vsel %vm171, %v1932, 0
      %v1982 = vsel %vm171, %v1933, 0
      %v1985 = vsel %vm171, %v1934, 0
      %v1988 = vsel %vm171, %v1935, 0
      %v1991 = vsel %vm171, %v1936, 0
      %v1994 = vsel %vm171, %v1937, 0
      %v1997 = vsel %vm171, %v1938, 0
      %v2000 = vsel %vm171, %v1939, 0
      %v2003 = vsel %vm171, %v1940, 0
      %v2006 = vsel %vm171, %v1941, 0
      %v2009 = vsel %vm171, %v1942, 0
      %v2012 = vsel %vm171, %v1943, 0
      %v2015 = vsel %vm171, %v1944, 0
      %v2018 = vsel %vm171, %v1945, 0
      %v2021 = vsel %vm171, %v1946, 0
      %v2024 = vsel %vm171, %v1947, 0
      %v2027 = vsel %vm171, %v1948, 0
      %v2030 = vsel %vm171, %v1949, 0
      %v2033 = vsel %vm171, %v1950, 0
      %v2036 = vsel %vm171, %v1951, 0
      %v2039 = vsel %vm171, %v1952, 0
      %v2042 = vsel %vm171, %v1953, 0
      %v2045 = vsel %vm171, %v1954, 0
      %v2048 = vsel %vm171, %v1955, 0
      %v2051 = vsel %vm171, %v1956, 0
      %v2054 = vsel %vm171, %v1957, 0
      %v2057 = vsel %vm919, %v1959, 0
      %2059 = vmatprep.subr.mxu0 0.0
      %2060 = vmatpush1.msra.mxu0 %v2057
      %2061 = vmatprep.subr.mxu0 0.0
      %2062 = vmatpush1.msra.mxu0 0.0
      %2063 = vmatprep.subr.mxu0 0.0
      %2064 = vmatpush1.msra.mxu0 0.0
      %2065 = vmatprep.subr.mxu0 0.0
      %2066 = vmatpush1.msra.mxu0 0.0
      %2067 = vmatprep.subr.mxu0 0.0
      %2068 = vmatpush1.msra.mxu0 0.0
      %2069 = vmatprep.subr.mxu0 0.0
      %2070 = vmatpush1.msra.mxu0 0.0
      %2071 = vmatprep.subr.mxu0 0.0
      %2072 = vmatpush1.msra.mxu0 0.0
      %2073 = vmatprep.subr.mxu0 0.0
      %2074 = vmatpush1.msra.mxu0 0.0
      %2075 = vmatprep.subr.mxu0 0.0
      %2076 = vmatpush1.msra.mxu0 0.0
      %2077 = vmatprep.subr.mxu0 0.0
      %2078 = vmatpush1.msra.mxu0 0.0
      %2079 = vmatprep.subr.mxu0 0.0
      %2080 = vmatpush1.msra.mxu0 0.0
      %2081 = vmatprep.subr.mxu0 0.0
      %2082 = vmatpush1.msra.mxu0 0.0
      %2083 = vmatprep.subr.mxu0 0.0
      %2084 = vmatpush1.msra.mxu0 0.0
      %2085 = vmatprep.subr.mxu0 0.0
      %2086 = vmatpush1.msra.mxu0 0.0
      %2087 = vmatprep.subr.mxu0 0.0
      %2088 = vmatpush1.msra.mxu0 0.0
      %2089 = vmatprep.subr.mxu0 0.0
      %2090 = vmatpush1.msra.mxu0 0.0
      %2091 = vmatprep.subr.mxu0 0.0
      %2092 = vmatpush1.msra.mxu0 0.0
      %2093 = vmatprep.subr.mxu0 0.0
      %2094 = vmatpush1.msra.mxu0 0.0
      %2095 = vmatprep.subr.mxu0 0.0
      %2096 = vmatpush1.msra.mxu0 0.0
      %2097 = vmatprep.subr.mxu0 0.0
      %2098 = vmatpush1.msra.mxu0 0.0
      %2099 = vmatprep.subr.mxu0 0.0
      %2100 = vmatpush1.msra.mxu0 0.0
      %2101 = vmatprep.subr.mxu0 0.0
      %2102 = vmatpush1.msra.mxu0 0.0
      %2103 = vmatprep.subr.mxu0 0.0
      %2104 = vmatpush1.msra.mxu0 0.0
      %2105 = vmatprep.subr.mxu0 0.0
      %2106 = vmatpush1.msra.mxu0 0.0
      %2107 = vmatprep.subr.mxu0 0.0
      %2108 = vmatpush1.msra.mxu0 0.0
      %2109 = vmatprep.subr.mxu0 0.0
      %2110 = vmatpush1.msra.mxu0 0.0
      %2111 = vmatprep.subr.mxu0 0.0
      %2112 = vmatpush1.msra.mxu0 0.0
      %2113 = vmatprep.subr.mxu0 0.0
      %2114 = vmatpush1.msra.mxu0 0.0
      %2115 = vmatprep.subr.mxu0 0.0
      %2116 = vmatpush1.msra.mxu0 0.0
      %2117 = vmatprep.subr.mxu0 0.0
      %2118 = vmatpush1.msra.mxu0 0.0
      %2119 = vmatprep.subr.mxu0 0.0
      %2120 = vmatpush1.msra.mxu0 0.0
      %2121 = vmatprep.subr.mxu0 0.0
      %2122 = vmatpush1.msra.mxu0 0.0
      %2123 = vmatprep.mubr.f32.mxu0 0.0
      %2124 = vmatmul.mubr.f32.gmra.mrb[0].mxu0 %v1961
      %v2125 = vpop.f32.mrb[0].mxu0
      %v2126 = vadd.f32 0.0, %v2125
      %v2127 = vpop.f32.mrb[0].mxu0
      %2128 = vmatprep.mubr.f32.mxu0 0.0
      %2129 = vmatmul.mubr.f32.gmra.mrb[0].mxu0 %v1964
      %v2130 = vpop.f32.mrb[0].mxu0
      %v2131 = vadd.f32 0.0, %v2130
      %v2132 = vpop.f32.mrb[0].mxu0
      %2133 = vmatprep.mubr.f32.mxu0 0.0
      %2134 = vmatmul.mubr.f32.gmra.mrb[0].mxu0 %v1967
      %v2135 = vpop.f32.mrb[0].mxu0
      %v2136 = vadd.f32 0.0, %v2135
      %v2137 = vpop.f32.mrb[0].mxu0
      %2138 = vmatprep.mubr.f32.mxu0 0.0
      %2139 = vmatmul.mubr.f32.gmra.mrb[0].mxu0 %v1970
      %v2140 = vpop.f32.mrb[0].mxu0
      %v2141 = vadd.f32 0.0, %v2140
      %v2142 = vpop.f32.mrb[0].mxu0
      %2143 = vmatprep.mubr.f32.mxu0 0.0
      %2144 = vmatmul.mubr.f32.gmra.mrb[0].mxu0 %v1973
      %v2145 = vpop.f32.mrb[0].mxu0
      %v2146 = vadd.f32 0.0, %v2145
      %v2147 = vpop.f32.mrb[0].mxu0
      %2148 = vmatprep.mubr.f32.mxu0 0.0
      %2149 = vmatmul.mubr.f32.gmra.mrb[0].mxu0 %v1976
      %v2150 = vpop.f32.mrb[0].mxu0
      %v2151 = vadd.f32 0.0, %v2150
      %v2152 = vpop.f32.mrb[0].mxu0
      %2153 = vmatprep.mubr.f32.mxu0 0.0
      %2154 = vmatmul.mubr.f32.gmra.mrb[0].mxu0 %v1979
      %v2155 = vpop.f32.mrb[0].mxu0
      %v2156 = vadd.f32 0.0, %v2155
      %v2157 = vpop.f32.mrb[0].mxu0
      %2158 = vmatprep.mubr.f32.mxu0 0.0
      %2159 = vmatmul.mubr.f32.gmra.mrb[0].mxu0 %v1982
      %v2160 = vpop.f32.mrb[0].mxu0
      %v2161 = vadd.f32 0.0, %v2160
      %v2162 = vpop.f32.mrb[0].mxu0
      %2163 = vmatprep.mubr.f32.mxu0 0.0
      %2164 = vmatmul.mubr.f32.gmra.mrb[0].mxu0 %v1985
      %v2165 = vpop.f32.mrb[0].mxu0
      %v2166 = vadd.f32 0.0, %v2165
      %v2167 = vpop.f32.mrb[0].mxu0
      %2168 = vmatprep.mubr.f32.mxu0 0.0
      %2169 = vmatmul.mubr.f32.gmra.mrb[0].mxu0 %v1988
      %v2170 = vpop.f32.mrb[0].mxu0
      %v2171 = vadd.f32 0.0, %v2170
      %v2172 = vpop.f32.mrb[0].mxu0
      %2173 = vmatprep.mubr.f32.mxu0 0.0
      %2174 = vmatmul.mubr.f32.gmra.mrb[0].mxu0 %v1991
      %v2175 = vpop.f32.mrb[0].mxu0
      %v2176 = vadd.f32 0.0, %v2175
      %v2177 = vpop.f32.mrb[0].mxu0
      %2178 = vmatprep.mubr.f32.mxu0 0.0
      %2179 = vmatmul.mubr.f32.gmra.mrb[0].mxu0 %v1994
      %v2180 = vpop.f32.mrb[0].mxu0
      %v2181 = vadd.f32 0.0, %v2180
      %v2182 = vpop.f32.mrb[0].mxu0
      %2183 = vmatprep.mubr.f32.mxu0 0.0
      %2184 = vmatmul.mubr.f32.gmra.mrb[0].mxu0 %v1997
      %v2185 = vpop.f32.mrb[0].mxu0
      %v2186 = vadd.f32 0.0, %v2185
      %v2187 = vpop.f32.mrb[0].mxu0
      %2188 = vmatprep.mubr.f32.mxu0 0.0
      %2189 = vmatmul.mubr.f32.gmra.mrb[0].mxu0 %v2000
      %v2190 = vpop.f32.mrb[0].mxu0
      %v2191 = vadd.f32 0.0, %v2190
      %v2192 = vpop.f32.mrb[0].mxu0
      %2193 = vmatprep.mubr.f32.mxu0 0.0
      %2194 = vmatmul.mubr.f32.gmra.mrb[0].mxu0 %v2003
      %v2195 = vpop.f32.mrb[0].mxu0
      %v2196 = vadd.f32 0.0, %v2195
      %v2197 = vpop.f32.mrb[0].mxu0
      %2198 = vmatprep.mubr.f32.mxu0 0.0
      %2199 = vmatmul.mubr.f32.gmra.mrb[0].mxu0 %v2006
      %v2200 = vpop.f32.mrb[0].mxu0
      %v2201 = vadd.f32 0.0, %v2200
      %v2202 = vpop.f32.mrb[0].mxu0
      %2203 = vmatprep.mubr.f32.mxu0 0.0
      %2204 = vmatmul.mubr.f32.gmra.mrb[0].mxu0 %v2009
      %v2205 = vpop.f32.mrb[0].mxu0
      %v2206 = vadd.f32 0.0, %v2205
      %v2207 = vpop.f32.mrb[0].mxu0
      %2208 = vmatprep.mubr.f32.mxu0 0.0
      %2209 = vmatmul.mubr.f32.gmra.mrb[0].mxu0 %v2012
      %v2210 = vpop.f32.mrb[0].mxu0
      %v2211 = vadd.f32 0.0, %v2210
      %v2212 = vpop.f32.mrb[0].mxu0
      %2213 = vmatprep.mubr.f32.mxu0 0.0
      %2214 = vmatmul.mubr.f32.gmra.mrb[0].mxu0 %v2015
      %v2215 = vpop.f32.mrb[0].mxu0
      %v2216 = vadd.f32 0.0, %v2215
      %v2217 = vpop.f32.mrb[0].mxu0
      %2218 = vmatprep.mubr.f32.mxu0 0.0
      %2219 = vmatmul.mubr.f32.gmra.mrb[0].mxu0 %v2018
      %v2220 = vpop.f32.mrb[0].mxu0
      %v2221 = vadd.f32 0.0, %v2220
      %v2222 = vpop.f32.mrb[0].mxu0
      %2223 = vmatprep.mubr.f32.mxu0 0.0
      %2224 = vmatmul.mubr.f32.gmra.mrb[0].mxu0 %v2021
      %v2225 = vpop.f32.mrb[0].mxu0
      %v2226 = vadd.f32 0.0, %v2225
      %v2227 = vpop.f32.mrb[0].mxu0
      %2228 = vmatprep.mubr.f32.mxu0 0.0
      %2229 = vmatmul.mubr.f32.gmra.mrb[0].mxu0 %v2024
      %v2230 = vpop.f32.mrb[0].mxu0
      %v2231 = vadd.f32 0.0, %v2230
      %v2232 = vpop.f32.mrb[0].mxu0
      %2233 = vmatprep.mubr.f32.mxu0 0.0
      %2234 = vmatmul.mubr.f32.gmra.mrb[0].mxu0 %v2027
      %v2235 = vpop.f32.mrb[0].mxu0
      %v2236 = vadd.f32 0.0, %v2235
      %v2237 = vpop.f32.mrb[0].mxu0
      %2238 = vmatprep.mubr.f32.mxu0 0.0
      %2239 = vmatmul.mubr.f32.gmra.mrb[0].mxu0 %v2030
      %v2240 = vpop.f32.mrb[0].mxu0
      %v2241 = vadd.f32 0.0, %v2240
      %v2242 = vpop.f32.mrb[0].mxu0
      %2243 = vmatprep.mubr.f32.mxu0 0.0
      %2244 = vmatmul.mubr.f32.gmra.mrb[0].mxu0 %v2033
      %v2245 = vpop.f32.mrb[0].mxu0
      %v2246 = vadd.f32 0.0, %v2245
      %v2247 = vpop.f32.mrb[0].mxu0
      %2248 = vmatprep.mubr.f32.mxu0 0.0
      %2249 = vmatmul.mubr.f32.gmra.mrb[0].mxu0 %v2036
      %v2250 = vpop.f32.mrb[0].mxu0
      %v2251 = vadd.f32 0.0, %v2250
      %v2252 = vpop.f32.mrb[0].mxu0
      %2253 = vmatprep.mubr.f32.mxu0 0.0
      %2254 = vmatmul.mubr.f32.gmra.mrb[0].mxu0 %v2039
      %v2255 = vpop.f32.mrb[0].mxu0
      %v2256 = vadd.f32 0.0, %v2255
      %v2257 = vpop.f32.mrb[0].mxu0
      %2258 = vmatprep.mubr.f32.mxu0 0.0
      %2259 = vmatmul.mubr.f32.gmra.mrb[0].mxu0 %v2042
      %v2260 = vpop.f32.mrb[0].mxu0
      %v2261 = vadd.f32 0.0, %v2260
      %v2262 = vpop.f32.mrb[0].mxu0
      %2263 = vmatprep.mubr.f32.mxu0 0.0
      %2264 = vmatmul.mubr.f32.gmra.mrb[0].mxu0 %v2045
      %v2265 = vpop.f32.mrb[0].mxu0
      %v2266 = vadd.f32 0.0, %v2265
      %v2267 = vpop.f32.mrb[0].mxu0
      %2268 = vmatprep.mubr.f32.mxu0 0.0
      %2269 = vmatmul.mubr.f32.gmra.mrb[0].mxu0 %v2048
      %v2270 = vpop.f32.mrb[0].mxu0
      %v2271 = vadd.f32 0.0, %v2270
      %v2272 = vpop.f32.mrb[0].mxu0
      %2273 = vmatprep.mubr.f32.mxu0 0.0
      %2274 = vmatmul.mubr.f32.gmra.mrb[0].mxu0 %v2051
      %v2275 = vpop.f32.mrb[0].mxu0
      %v2276 = vadd.f32 0.0, %v2275
      %v2277 = vpop.f32.mrb[0].mxu0
      %2278 = vmatprep.mubr.f32.mxu0 0.0
      %2279 = vmatmul.mubr.f32.gmra.mrb[0].mxu0 %v2054
      %v2280 = vpop.f32.mrb[0].mxu0
      %v2281 = vadd.f32 0.0, %v2280
      %v2282 = vpop.f32.mrb[0].mxu0
      %2283 = vdwg.mxu0
      %v2284 = vadd.f32 %v1862, %v2126
      %v2285 = vadd.f32 %v1863, %v2131
      %v2286 = vadd.f32 %v1864, %v2136
      %v2287 = vadd.f32 %v1865, %v2141
      %v2288 = vadd.f32 %v1866, %v2146
      %v2289 = vadd.f32 %v1867, %v2151
      %v2290 = vadd.f32 %v1868, %v2156
      %v2291 = vadd.f32 %v1869, %v2161
      %v2292 = vadd.f32 %v1870, %v2166
      %v2293 = vadd.f32 %v1871, %v2171
      %v2294 = vadd.f32 %v1872, %v2176
      %v2295 = vadd.f32 %v1873, %v2181
      %v2296 = vadd.f32 %v1874, %v2186
      %v2297 = vadd.f32 %v1875, %v2191
      %v2298 = vadd.f32 %v1876, %v2196
      %v2299 = vadd.f32 %v1877, %v2201
      %v2300 = vadd.f32 %v1878, %v2206
      %v2301 = vadd.f32 %v1879, %v2211
      %v2302 = vadd.f32 %v1880, %v2216
      %v2303 = vadd.f32 %v1881, %v2221
      %v2304 = vadd.f32 %v1882, %v2226
      %v2305 = vadd.f32 %v1883, %v2231
      %v2306 = vadd.f32 %v1884, %v2236
      %v2307 = vadd.f32 %v1885, %v2241
      %v2308 = vadd.f32 %v1886, %v2246
      %v2309 = vadd.f32 %v1887, %v2251
      %v2310 = vadd.f32 %v1888, %v2256
      %v2311 = vadd.f32 %v1889, %v2261
      %v2312 = vadd.f32 %v1890, %v2266
      %v2313 = vadd.f32 %v1891, %v2271
      %v2314 = vadd.f32 %v1892, %v2276
      %v2315 = vadd.f32 %v1893, %v2281
      %v2316 = vld [vmem:[#allocation2 + $0x11] sm:$0xff]
      %v2317 = vld [vmem:[#allocation2 + $0x19] sm:$0xff]
      %v2318 = vld [vmem:[#allocation2 + $0x21] sm:$0xff]
      %v2319 = vld [vmem:[#allocation2 + $0x29] sm:$0xff]
      %v2320 = vld [vmem:[#allocation2 + $0x31] sm:$0xff]
      %v2321 = vld [vmem:[#allocation2 + $0x39] sm:$0xff]
      %v2322 = vld [vmem:[#allocation2 + $0x41] sm:$0xff]
      %v2323 = vld [vmem:[#allocation2 + $0x49] sm:$0xff]
      %v2324 = vld [vmem:[#allocation2 + $0x51] sm:$0xff]
      %v2325 = vld [vmem:[#allocation2 + $0x59] sm:$0xff]
      %v2326 = vld [vmem:[#allocation2 + $0x61] sm:$0xff]
      %v2327 = vld [vmem:[#allocation2 + $0x69] sm:$0xff]
      %v2328 = vld [vmem:[#allocation2 + $0x71] sm:$0xff]
      %v2329 = vld [vmem:[#allocation2 + $0x79] sm:$0xff]
      %v2330 = vld [vmem:[#allocation2 + $0x81] sm:$0xff]
      %v2331 = vld [vmem:[#allocation2 + $0x89] sm:$0xff]
      %v2332 = vld [vmem:[#allocation2 + $0x91] sm:$0xff]
      %v2333 = vld [vmem:[#allocation2 + $0x99] sm:$0xff]
      %v2334 = vld [vmem:[#allocation2 + $0xa1] sm:$0xff]
      %v2335 = vld [vmem:[#allocation2 + $0xa9] sm:$0xff]
      %v2336 = vld [vmem:[#allocation2 + $0xb1] sm:$0xff]
      %v2337 = vld [vmem:[#allocation2 + $0xb9] sm:$0xff]
      %v2338 = vld [vmem:[#allocation2 + $0xc1] sm:$0xff]
      %v2339 = vld [vmem:[#allocation2 + $0xc9] sm:$0xff]
      %v2340 = vld [vmem:[#allocation2 + $0xd1] sm:$0xff]
      %v2341 = vld [vmem:[#allocation2 + $0xd9] sm:$0xff]
      %v2342 = vld [vmem:[#allocation2 + $0xe1] sm:$0xff]
      %v2343 = vld [vmem:[#allocation2 + $0xe9] sm:$0xff]
      %v2344 = vld [vmem:[#allocation2 + $0xf1] sm:$0xff]
      %v2345 = vld [vmem:[#allocation2 + $0xf9] sm:$0xff]
      %v2346 = vld [vmem:[#allocation2 + $0x101] sm:$0xff]
      %v2347 = vld [vmem:[#allocation2 + $0x109] sm:$0xff]
      %s2348 = scalar_lea.vmem %s1, 16
      %v2349 = vld [vmem:[%s2348] sm:$0xf]
      %v2351 = vsel %vm171, %v2316, 0
      %v2354 = vsel %vm171, %v2317, 0
      %v2357 = vsel %vm171, %v2318, 0
      %v2360 = vsel %vm171, %v2319, 0
      %v2363 = vsel %vm171, %v2320, 0
      %v2366 = vsel %vm171, %v2321, 0
      %v2369 = vsel %vm171, %v2322, 0
      %v2372 = vsel %vm171, %v2323, 0
      %v2375 = vsel %vm171, %v2324, 0
      %v2378 = vsel %vm171, %v2325, 0
      %v2381 = vsel %vm171, %v2326, 0
      %v2384 = vsel %vm171, %v2327, 0
      %v2387 = vsel %vm171, %v2328, 0
      %v2390 = vsel %vm171, %v2329, 0
      %v2393 = vsel %vm171, %v2330, 0
      %v2396 = vsel %vm171, %v2331, 0
      %v2399 = vsel %vm171, %v2332, 0
      %v2402 = vsel %vm171, %v2333, 0
      %v2405 = vsel %vm171, %v2334, 0
      %v2408 = vsel %vm171, %v2335, 0
      %v2411 = vsel %vm171, %v2336, 0
      %v2414 = vsel %vm171, %v2337, 0
      %v2417 = vsel %vm171, %v2338, 0
      %v2420 = vsel %vm171, %v2339, 0
      %v2423 = vsel %vm171, %v2340, 0
      %v2426 = vsel %vm171, %v2341, 0
      %v2429 = vsel %vm171, %v2342, 0
      %v2432 = vsel %vm171, %v2343, 0
      %v2435 = vsel %vm171, %v2344, 0
      %v2438 = vsel %vm171, %v2345, 0
      %v2441 = vsel %vm171, %v2346, 0
      %v2444 = vsel %vm171, %v2347, 0
      %v2447 = vsel %vm919, %v2349, 0
      %2449 = vmatprep.subr.mxu0 0.0
      %2450 = vmatpush1.msra.mxu0 %v2447
      %2451 = vmatprep.subr.mxu0 0.0
      %2452 = vmatpush1.msra.mxu0 0.0
      %2453 = vmatprep.subr.mxu0 0.0
      %2454 = vmatpush1.msra.mxu0 0.0
      %2455 = vmatprep.subr.mxu0 0.0
      %2456 = vmatpush1.msra.mxu0 0.0
      %2457 = vmatprep.subr.mxu0 0.0
      %2458 = vmatpush1.msra.mxu0 0.0
      %2459 = vmatprep.subr.mxu0 0.0
      %2460 = vmatpush1.msra.mxu0 0.0
      %2461 = vmatprep.subr.mxu0 0.0
      %2462 = vmatpush1.msra.mxu0 0.0
      %2463 = vmatprep.subr.mxu0 0.0
      %2464 = vmatpush1.msra.mxu0 0.0
      %2465 = vmatprep.subr.mxu0 0.0
      %2466 = vmatpush1.msra.mxu0 0.0
      %2467 = vmatprep.subr.mxu0 0.0
      %2468 = vmatpush1.msra.mxu0 0.0
      %2469 = vmatprep.subr.mxu0 0.0
      %2470 = vmatpush1.msra.mxu0 0.0
      %2471 = vmatprep.subr.mxu0 0.0
      %2472 = vmatpush1.msra.mxu0 0.0
      %2473 = vmatprep.subr.mxu0 0.0
      %2474 = vmatpush1.msra.mxu0 0.0
      %2475 = vmatprep.subr.mxu0 0.0
      %2476 = vmatpush1.msra.mxu0 0.0
      %2477 = vmatprep.subr.mxu0 0.0
      %2478 = vmatpush1.msra.mxu0 0.0
      %2479 = vmatprep.subr.mxu0 0.0
      %2480 = vmatpush1.msra.mxu0 0.0
      %2481 = vmatprep.subr.mxu0 0.0
      %2482 = vmatpush1.msra.mxu0 0.0
      %2483 = vmatprep.subr.mxu0 0.0
      %2484 = vmatpush1.msra.mxu0 0.0
      %2485 = vmatprep.subr.mxu0 0.0
      %2486 = vmatpush1.msra.mxu0 0.0
      %2487 = vmatprep.subr.mxu0 0.0
      %2488 = vmatpush1.msra.mxu0 0.0
      %2489 = vmatprep.subr.mxu0 0.0
      %2490 = vmatpush1.msra.mxu0 0.0
      %2491 = vmatprep.subr.mxu0 0.0
      %2492 = vmatpush1.msra.mxu0 0.0
      %2493 = vmatprep.subr.mxu0 0.0
      %2494 = vmatpush1.msra.mxu0 0.0
      %2495 = vmatprep.subr.mxu0 0.0
      %2496 = vmatpush1.msra.mxu0 0.0
      %2497 = vmatprep.subr.mxu0 0.0
      %2498 = vmatpush1.msra.mxu0 0.0
      %2499 = vmatprep.subr.mxu0 0.0
      %2500 = vmatpush1.msra.mxu0 0.0
      %2501 = vmatprep.subr.mxu0 0.0
      %2502 = vmatpush1.msra.mxu0 0.0
      %2503 = vmatprep.subr.mxu0 0.0
      %2504 = vmatpush1.msra.mxu0 0.0
      %2505 = vmatprep.subr.mxu0 0.0
      %2506 = vmatpush1.msra.mxu0 0.0
      %2507 = vmatprep.subr.mxu0 0.0
      %2508 = vmatpush1.msra.mxu0 0.0
      %2509 = vmatprep.subr.mxu0 0.0
      %2510 = vmatpush1.msra.mxu0 0.0
      %2511 = vmatprep.subr.mxu0 0.0
      %2512 = vmatpush1.msra.mxu0 0.0
      %2513 = vmatprep.mubr.f32.mxu0 0.0
      %2514 = vmatmul.mubr.f32.gmra.mrb[0].mxu0 %v2351
      %v2515 = vpop.f32.mrb[0].mxu0
      %v2516 = vadd.f32 0.0, %v2515
      %v2517 = vpop.f32.mrb[0].mxu0
      %2518 = vmatprep.mubr.f32.mxu0 0.0
      %2519 = vmatmul.mubr.f32.gmra.mrb[0].mxu0 %v2354
      %v2520 = vpop.f32.mrb[0].mxu0
      %v2521 = vadd.f32 0.0, %v2520
      %v2522 = vpop.f32.mrb[0].mxu0
      %2523 = vmatprep.mubr.f32.mxu0 0.0
      %2524 = vmatmul.mubr.f32.gmra.mrb[0].mxu0 %v2357
      %v2525 = vpop.f32.mrb[0].mxu0
      %v2526 = vadd.f32 0.0, %v2525
      %v2527 = vpop.f32.mrb[0].mxu0
      %2528 = vmatprep.mubr.f32.mxu0 0.0
      %2529 = vmatmul.mubr.f32.gmra.mrb[0].mxu0 %v2360
      %v2530 = vpop.f32.mrb[0].mxu0
      %v2531 = vadd.f32 0.0, %v2530
      %v2532 = vpop.f32.mrb[0].mxu0
      %2533 = vmatprep.mubr.f32.mxu0 0.0
      %2534 = vmatmul.mubr.f32.gmra.mrb[0].mxu0 %v2363
      %v2535 = vpop.f32.mrb[0].mxu0
      %v2536 = vadd.f32 0.0, %v2535
      %v2537 = vpop.f32.mrb[0].mxu0
      %2538 = vmatprep.mubr.f32.mxu0 0.0
      %2539 = vmatmul.mubr.f32.gmra.mrb[0].mxu0 %v2366
      %v2540 = vpop.f32.mrb[0].mxu0
      %v2541 = vadd.f32 0.0, %v2540
      %v2542 = vpop.f32.mrb[0].mxu0
      %2543 = vmatprep.mubr.f32.mxu0 0.0
      %2544 = vmatmul.mubr.f32.gmra.mrb[0].mxu0 %v2369
      %v2545 = vpop.f32.mrb[0].mxu0
      %v2546 = vadd.f32 0.0, %v2545
      %v2547 = vpop.f32.mrb[0].mxu0
      %2548 = vmatprep.mubr.f32.mxu0 0.0
      %2549 = vmatmul.mubr.f32.gmra.mrb[0].mxu0 %v2372
      %v2550 = vpop.f32.mrb[0].mxu0
      %v2551 = vadd.f32 0.0, %v2550
      %v2552 = vpop.f32.mrb[0].mxu0
      %2553 = vmatprep.mubr.f32.mxu0 0.0
      %2554 = vmatmul.mubr.f32.gmra.mrb[0].mxu0 %v2375
      %v2555 = vpop.f32.mrb[0].mxu0
      %v2556 = vadd.f32 0.0, %v2555
      %v2557 = vpop.f32.mrb[0].mxu0
      %2558 = vmatprep.mubr.f32.mxu0 0.0
      %2559 = vmatmul.mubr.f32.gmra.mrb[0].mxu0 %v2378
      %v2560 = vpop.f32.mrb[0].mxu0
      %v2561 = vadd.f32 0.0, %v2560
      %v2562 = vpop.f32.mrb[0].mxu0
      %2563 = vmatprep.mubr.f32.mxu0 0.0
      %2564 = vmatmul.mubr.f32.gmra.mrb[0].mxu0 %v2381
      %v2565 = vpop.f32.mrb[0].mxu0
      %v2566 = vadd.f32 0.0, %v2565
      %v2567 = vpop.f32.mrb[0].mxu0
      %2568 = vmatprep.mubr.f32.mxu0 0.0
      %2569 = vmatmul.mubr.f32.gmra.mrb[0].mxu0 %v2384
      %v2570 = vpop.f32.mrb[0].mxu0
      %v2571 = vadd.f32 0.0, %v2570
      %v2572 = vpop.f32.mrb[0].mxu0
      %2573 = vmatprep.mubr.f32.mxu0 0.0
      %2574 = vmatmul.mubr.f32.gmra.mrb[0].mxu0 %v2387
      %v2575 = vpop.f32.mrb[0].mxu0
      %v2576 = vadd.f32 0.0, %v2575
      %v2577 = vpop.f32.mrb[0].mxu0
      %2578 = vmatprep.mubr.f32.mxu0 0.0
      %2579 = vmatmul.mubr.f32.gmra.mrb[0].mxu0 %v2390
      %v2580 = vpop.f32.mrb[0].mxu0
      %v2581 = vadd.f32 0.0, %v2580
      %v2582 = vpop.f32.mrb[0].mxu0
      %2583 = vmatprep.mubr.f32.mxu0 0.0
      %2584 = vmatmul.mubr.f32.gmra.mrb[0].mxu0 %v2393
      %v2585 = vpop.f32.mrb[0].mxu0
      %v2586 = vadd.f32 0.0, %v2585
      %v2587 = vpop.f32.mrb[0].mxu0
      %2588 = vmatprep.mubr.f32.mxu0 0.0
      %2589 = vmatmul.mubr.f32.gmra.mrb[0].mxu0 %v2396
      %v2590 = vpop.f32.mrb[0].mxu0
      %v2591 = vadd.f32 0.0, %v2590
      %v2592 = vpop.f32.mrb[0].mxu0
      %2593 = vmatprep.mubr.f32.mxu0 0.0
      %2594 = vmatmul.mubr.f32.gmra.mrb[0].mxu0 %v2399
      %v2595 = vpop.f32.mrb[0].mxu0
      %v2596 = vadd.f32 0.0, %v2595
      %v2597 = vpop.f32.mrb[0].mxu0
      %2598 = vmatprep.mubr.f32.mxu0 0.0
      %2599 = vmatmul.mubr.f32.gmra.mrb[0].mxu0 %v2402
      %v2600 = vpop.f32.mrb[0].mxu0
      %v2601 = vadd.f32 0.0, %v2600
      %v2602 = vpop.f32.mrb[0].mxu0
      %2603 = vmatprep.mubr.f32.mxu0 0.0
      %2604 = vmatmul.mubr.f32.gmra.mrb[0].mxu0 %v2405
      %v2605 = vpop.f32.mrb[0].mxu0
      %v2606 = vadd.f32 0.0, %v2605
      %v2607 = vpop.f32.mrb[0].mxu0
      %2608 = vmatprep.mubr.f32.mxu0 0.0
      %2609 = vmatmul.mubr.f32.gmra.mrb[0].mxu0 %v2408
      %v2610 = vpop.f32.mrb[0].mxu0
      %v2611 = vadd.f32 0.0, %v2610
      %v2612 = vpop.f32.mrb[0].mxu0
      %2613 = vmatprep.mubr.f32.mxu0 0.0
      %2614 = vmatmul.mubr.f32.gmra.mrb[0].mxu0 %v2411
      %v2615 = vpop.f32.mrb[0].mxu0
      %v2616 = vadd.f32 0.0, %v2615
      %v2617 = vpop.f32.mrb[0].mxu0
      %2618 = vmatprep.mubr.f32.mxu0 0.0
      %2619 = vmatmul.mubr.f32.gmra.mrb[0].mxu0 %v2414
      %v2620 = vpop.f32.mrb[0].mxu0
      %v2621 = vadd.f32 0.0, %v2620
      %v2622 = vpop.f32.mrb[0].mxu0
      %2623 = vmatprep.mubr.f32.mxu0 0.0
      %2624 = vmatmul.mubr.f32.gmra.mrb[0].mxu0 %v2417
      %v2625 = vpop.f32.mrb[0].mxu0
      %v2626 = vadd.f32 0.0, %v2625
      %v2627 = vpop.f32.mrb[0].mxu0
      %2628 = vmatprep.mubr.f32.mxu0 0.0
      %2629 = vmatmul.mubr.f32.gmra.mrb[0].mxu0 %v2420
      %v2630 = vpop.f32.mrb[0].mxu0
      %v2631 = vadd.f32 0.0, %v2630
      %v2632 = vpop.f32.mrb[0].mxu0
      %2633 = vmatprep.mubr.f32.mxu0 0.0
      %2634 = vmatmul.mubr.f32.gmra.mrb[0].mxu0 %v2423
      %v2635 = vpop.f32.mrb[0].mxu0
      %v2636 = vadd.f32 0.0, %v2635
      %v2637 = vpop.f32.mrb[0].mxu0
      %2638 = vmatprep.mubr.f32.mxu0 0.0
      %2639 = vmatmul.mubr.f32.gmra.mrb[0].mxu0 %v2426
      %v2640 = vpop.f32.mrb[0].mxu0
      %v2641 = vadd.f32 0.0, %v2640
      %v2642 = vpop.f32.mrb[0].mxu0
      %2643 = vmatprep.mubr.f32.mxu0 0.0
      %2644 = vmatmul.mubr.f32.gmra.mrb[0].mxu0 %v2429
      %v2645 = vpop.f32.mrb[0].mxu0
      %v2646 = vadd.f32 0.0, %v2645
      %v2647 = vpop.f32.mrb[0].mxu0
      %2648 = vmatprep.mubr.f32.mxu0 0.0
      %2649 = vmatmul.mubr.f32.gmra.mrb[0].mxu0 %v2432
      %v2650 = vpop.f32.mrb[0].mxu0
      %v2651 = vadd.f32 0.0, %v2650
      %v2652 = vpop.f32.mrb[0].mxu0
      %2653 = vmatprep.mubr.f32.mxu0 0.0
      %2654 = vmatmul.mubr.f32.gmra.mrb[0].mxu0 %v2435
      %v2655 = vpop.f32.mrb[0].mxu0
      %v2656 = vadd.f32 0.0, %v2655
      %v2657 = vpop.f32.mrb[0].mxu0
      %2658 = vmatprep.mubr.f32.mxu0 0.0
      %2659 = vmatmul.mubr.f32.gmra.mrb[0].mxu0 %v2438
      %v2660 = vpop.f32.mrb[0].mxu0
      %v2661 = vadd.f32 0.0, %v2660
      %v2662 = vpop.f32.mrb[0].mxu0
      %2663 = vmatprep.mubr.f32.mxu0 0.0
      %2664 = vmatmul.mubr.f32.gmra.mrb[0].mxu0 %v2441
      %v2665 = vpop.f32.mrb[0].mxu0
      %v2666 = vadd.f32 0.0, %v2665
      %v2667 = vpop.f32.mrb[0].mxu0
      %2668 = vmatprep.mubr.f32.mxu0 0.0
      %2669 = vmatmul.mubr.f32.gmra.mrb[0].mxu0 %v2444
      %v2670 = vpop.f32.mrb[0].mxu0
      %v2671 = vadd.f32 0.0, %v2670
      %v2672 = vpop.f32.mrb[0].mxu0
      %2673 = vdwg.mxu0
      %v2674 = vadd.f32 %v2284, %v2516
      %v2675 = vadd.f32 %v2285, %v2521
      %v2676 = vadd.f32 %v2286, %v2526
      %v2677 = vadd.f32 %v2287, %v2531
      %v2678 = vadd.f32 %v2288, %v2536
      %v2679 = vadd.f32 %v2289, %v2541
      %v2680 = vadd.f32 %v2290, %v2546
      %v2681 = vadd.f32 %v2291, %v2551
      %v2682 = vadd.f32 %v2292, %v2556
      %v2683 = vadd.f32 %v2293, %v2561
      %v2684 = vadd.f32 %v2294, %v2566
      %v2685 = vadd.f32 %v2295, %v2571
      %v2686 = vadd.f32 %v2296, %v2576
      %v2687 = vadd.f32 %v2297, %v2581
      %v2688 = vadd.f32 %v2298, %v2586
      %v2689 = vadd.f32 %v2299, %v2591
      %v2690 = vadd.f32 %v2300, %v2596
      %v2691 = vadd.f32 %v2301, %v2601
      %v2692 = vadd.f32 %v2302, %v2606
      %v2693 = vadd.f32 %v2303, %v2611
      %v2694 = vadd.f32 %v2304, %v2616
      %v2695 = vadd.f32 %v2305, %v2621
      %v2696 = vadd.f32 %v2306, %v2626
      %v2697 = vadd.f32 %v2307, %v2631
      %v2698 = vadd.f32 %v2308, %v2636
      %v2699 = vadd.f32 %v2309, %v2641
      %v2700 = vadd.f32 %v2310, %v2646
      %v2701 = vadd.f32 %v2311, %v2651
      %v2702 = vadd.f32 %v2312, %v2656
      %v2703 = vadd.f32 %v2313, %v2661
      %v2704 = vadd.f32 %v2314, %v2666
      %v2705 = vadd.f32 %v2315, %v2671
      %v2706 = vld [vmem:[#allocation2 + $0x12] sm:$0xff]
      %v2707 = vld [vmem:[#allocation2 + $0x1a] sm:$0xff]
      %v2708 = vld [vmem:[#allocation2 + $0x22] sm:$0xff]
      %v2709 = vld [vmem:[#allocation2 + $0x2a] sm:$0xff]
      %v2710 = vld [vmem:[#allocation2 + $0x32] sm:$0xff]
      %v2711 = vld [vmem:[#allocation2 + $0x3a] sm:$0xff]
      %v2712 = vld [vmem:[#allocation2 + $0x42] sm:$0xff]
      %v2713 = vld [vmem:[#allocation2 + $0x4a] sm:$0xff]
      %v2714 = vld [vmem:[#allocation2 + $0x52] sm:$0xff]
      %v2715 = vld [vmem:[#allocation2 + $0x5a] sm:$0xff]
      %v2716 = vld [vmem:[#allocation2 + $0x62] sm:$0xff]
      %v2717 = vld [vmem:[#allocation2 + $0x6a] sm:$0xff]
      %v2718 = vld [vmem:[#allocation2 + $0x72] sm:$0xff]
      %v2719 = vld [vmem:[#allocation2 + $0x7a] sm:$0xff]
      %v2720 = vld [vmem:[#allocation2 + $0x82] sm:$0xff]
      %v2721 = vld [vmem:[#allocation2 + $0x8a] sm:$0xff]
      %v2722 = vld [vmem:[#allocation2 + $0x92] sm:$0xff]
      %v2723 = vld [vmem:[#allocation2 + $0x9a] sm:$0xff]
      %v2724 = vld [vmem:[#allocation2 + $0xa2] sm:$0xff]
      %v2725 = vld [vmem:[#allocation2 + $0xaa] sm:$0xff]
      %v2726 = vld [vmem:[#allocation2 + $0xb2] sm:$0xff]
      %v2727 = vld [vmem:[#allocation2 + $0xba] sm:$0xff]
      %v2728 = vld [vmem:[#allocation2 + $0xc2] sm:$0xff]
      %v2729 = vld [vmem:[#allocation2 + $0xca] sm:$0xff]
      %v2730 = vld [vmem:[#allocation2 + $0xd2] sm:$0xff]
      %v2731 = vld [vmem:[#allocation2 + $0xda] sm:$0xff]
      %v2732 = vld [vmem:[#allocation2 + $0xe2] sm:$0xff]
      %v2733 = vld [vmem:[#allocation2 + $0xea] sm:$0xff]
      %v2734 = vld [vmem:[#allocation2 + $0xf2] sm:$0xff]
      %v2735 = vld [vmem:[#allocation2 + $0xfa] sm:$0xff]
      %v2736 = vld [vmem:[#allocation2 + $0x102] sm:$0xff]
      %v2737 = vld [vmem:[#allocation2 + $0x10a] sm:$0xff]
      %v2738 = vsel %vm692, %v2706, 0.0
      %v2739 = vsel %vm693, %v2707, 0.0
      %v2740 = vsel %vm694, %v2708, 0.0
      %v2741 = vsel %vm695, %v2709, 0.0
      %v2742 = vsel %vm696, %v2710, 0.0
      %v2743 = vsel %vm697, %v2711, 0.0
      %v2744 = vsel %vm698, %v2712, 0.0
      %v2745 = vsel %vm699, %v2713, 0.0
      %v2746 = vsel %vm700, %v2714, 0.0
      %v2747 = vsel %vm701, %v2715, 0.0
      %v2748 = vsel %vm702, %v2716, 0.0
      %v2749 = vsel %vm703, %v2717, 0.0
      %v2750 = vsel %vm704, %v2718, 0.0
      %v2751 = vsel %vm705, %v2719, 0.0
      %v2752 = vsel %vm706, %v2720, 0.0
      %v2753 = vsel %vm707, %v2721, 0.0
      %v2754 = vsel %vm708, %v2722, 0.0
      %v2755 = vsel %vm709, %v2723, 0.0
      %v2756 = vsel %vm710, %v2724, 0.0
      %v2757 = vsel %vm711, %v2725, 0.0
      %v2758 = vsel %vm712, %v2726, 0.0
      %v2759 = vsel %vm713, %v2727, 0.0
      %v2760 = vsel %vm714, %v2728, 0.0
      %v2761 = vsel %vm715, %v2729, 0.0
      %v2762 = vsel %vm716, %v2730, 0.0
      %v2763 = vsel %vm717, %v2731, 0.0
      %v2764 = vsel %vm718, %v2732, 0.0
      %v2765 = vsel %vm719, %v2733, 0.0
      %v2766 = vsel %vm720, %v2734, 0.0
      %v2767 = vsel %vm721, %v2735, 0.0
      %v2768 = vsel %vm722, %v2736, 0.0
      %v2769 = vsel %vm723, %v2737, 0.0
      %s2770 = scalar_lea.vmem %s1, 20
      %v2771 = vld [vmem:[%s2770] sm:$0xf]
      %v2773 = vsel %vm171, %v2738, 0
      %v2776 = vsel %vm171, %v2739, 0
      %v2779 = vsel %vm171, %v2740, 0
      %v2782 = vsel %vm171, %v2741, 0
      %v2785 = vsel %vm171, %v2742, 0
      %v2788 = vsel %vm171, %v2743, 0
      %v2791 = vsel %vm171, %v2744, 0
      %v2794 = vsel %vm171, %v2745, 0
      %v2797 = vsel %vm171, %v2746, 0
      %v2800 = vsel %vm171, %v2747, 0
      %v2803 = vsel %vm171, %v2748, 0
      %v2806 = vsel %vm171, %v2749, 0
      %v2809 = vsel %vm171, %v2750, 0
      %v2812 = vsel %vm171, %v2751, 0
      %v2815 = vsel %vm171, %v2752, 0
      %v2818 = vsel %vm171, %v2753, 0
      %v2821 = vsel %vm171, %v2754, 0
      %v2824 = vsel %vm171, %v2755, 0
      %v2827 = vsel %vm171, %v2756, 0
      %v2830 = vsel %vm171, %v2757, 0
      %v2833 = vsel %vm171, %v2758, 0
      %v2836 = vsel %vm171, %v2759, 0
      %v2839 = vsel %vm171, %v2760, 0
      %v2842 = vsel %vm171, %v2761, 0
      %v2845 = vsel %vm171, %v2762, 0
      %v2848 = vsel %vm171, %v2763, 0
      %v2851 = vsel %vm171, %v2764, 0
      %v2854 = vsel %vm171, %v2765, 0
      %v2857 = vsel %vm171, %v2766, 0
      %v2860 = vsel %vm171, %v2767, 0
      %v2863 = vsel %vm171, %v2768, 0
      %v2866 = vsel %vm171, %v2769, 0
      %v2869 = vsel %vm919, %v2771, 0
      %2871 = vmatprep.subr.mxu0 0.0
      %2872 = vmatpush1.msra.mxu0 %v2869
      %2873 = vmatprep.subr.mxu0 0.0
      %2874 = vmatpush1.msra.mxu0 0.0
      %2875 = vmatprep.subr.mxu0 0.0
      %2876 = vmatpush1.msra.mxu0 0.0
      %2877 = vmatprep.subr.mxu0 0.0
      %2878 = vmatpush1.msra.mxu0 0.0
      %2879 = vmatprep.subr.mxu0 0.0
      %2880 = vmatpush1.msra.mxu0 0.0
      %2881 = vmatprep.subr.mxu0 0.0
      %2882 = vmatpush1.msra.mxu0 0.0
      %2883 = vmatprep.subr.mxu0 0.0
      %2884 = vmatpush1.msra.mxu0 0.0
      %2885 = vmatprep.subr.mxu0 0.0
      %2886 = vmatpush1.msra.mxu0 0.0
      %2887 = vmatprep.subr.mxu0 0.0
      %2888 = vmatpush1.msra.mxu0 0.0
      %2889 = vmatprep.subr.mxu0 0.0
      %2890 = vmatpush1.msra.mxu0 0.0
      %2891 = vmatprep.subr.mxu0 0.0
      %2892 = vmatpush1.msra.mxu0 0.0
      %2893 = vmatprep.subr.mxu0 0.0
      %2894 = vmatpush1.msra.mxu0 0.0
      %2895 = vmatprep.subr.mxu0 0.0
      %2896 = vmatpush1.msra.mxu0 0.0
      %2897 = vmatprep.subr.mxu0 0.0
      %2898 = vmatpush1.msra.mxu0 0.0
      %2899 = vmatprep.subr.mxu0 0.0
      %2900 = vmatpush1.msra.mxu0 0.0
      %2901 = vmatprep.subr.mxu0 0.0
      %2902 = vmatpush1.msra.mxu0 0.0
      %2903 = vmatprep.subr.mxu0 0.0
      %2904 = vmatpush1.msra.mxu0 0.0
      %2905 = vmatprep.subr.mxu0 0.0
      %2906 = vmatpush1.msra.mxu0 0.0
      %2907 = vmatprep.subr.mxu0 0.0
      %2908 = vmatpush1.msra.mxu0 0.0
      %2909 = vmatprep.subr.mxu0 0.0
      %2910 = vmatpush1.msra.mxu0 0.0
      %2911 = vmatprep.subr.mxu0 0.0
      %2912 = vmatpush1.msra.mxu0 0.0
      %2913 = vmatprep.subr.mxu0 0.0
      %2914 = vmatpush1.msra.mxu0 0.0
      %2915 = vmatprep.subr.mxu0 0.0
      %2916 = vmatpush1.msra.mxu0 0.0
      %2917 = vmatprep.subr.mxu0 0.0
      %2918 = vmatpush1.msra.mxu0 0.0
      %2919 = vmatprep.subr.mxu0 0.0
      %2920 = vmatpush1.msra.mxu0 0.0
      %2921 = vmatprep.subr.mxu0 0.0
      %2922 = vmatpush1.msra.mxu0 0.0
      %2923 = vmatprep.subr.mxu0 0.0
      %2924 = vmatpush1.msra.mxu0 0.0
      %2925 = vmatprep.subr.mxu0 0.0
      %2926 = vmatpush1.msra.mxu0 0.0
      %2927 = vmatprep.subr.mxu0 0.0
      %2928 = vmatpush1.msra.mxu0 0.0
      %2929 = vmatprep.subr.mxu0 0.0
      %2930 = vmatpush1.msra.mxu0 0.0
      %2931 = vmatprep.subr.mxu0 0.0
      %2932 = vmatpush1.msra.mxu0 0.0
      %2933 = vmatprep.subr.mxu0 0.0
      %2934 = vmatpush1.msra.mxu0 0.0
      %2935 = vmatprep.mubr.f32.mxu0 0.0
      %2936 = vmatmul.mubr.f32.gmra.mrb[0].mxu0 %v2773
      %v2937 = vpop.f32.mrb[0].mxu0
      %v2938 = vadd.f32 0.0, %v2937
      %v2939 = vpop.f32.mrb[0].mxu0
      %2940 = vmatprep.mubr.f32.mxu0 0.0
      %2941 = vmatmul.mubr.f32.gmra.mrb[0].mxu0 %v2776
      %v2942 = vpop.f32.mrb[0].mxu0
      %v2943 = vadd.f32 0.0, %v2942
      %v2944 = vpop.f32.mrb[0].mxu0
      %2945 = vmatprep.mubr.f32.mxu0 0.0
      %2946 = vmatmul.mubr.f32.gmra.mrb[0].mxu0 %v2779
      %v2947 = vpop.f32.mrb[0].mxu0
      %v2948 = vadd.f32 0.0, %v2947
      %v2949 = vpop.f32.mrb[0].mxu0
      %2950 = vmatprep.mubr.f32.mxu0 0.0
      %2951 = vmatmul.mubr.f32.gmra.mrb[0].mxu0 %v2782
      %v2952 = vpop.f32.mrb[0].mxu0
      %v2953 = vadd.f32 0.0, %v2952
      %v2954 = vpop.f32.mrb[0].mxu0
      %2955 = vmatprep.mubr.f32.mxu0 0.0
      %2956 = vmatmul.mubr.f32.gmra.mrb[0].mxu0 %v2785
      %v2957 = vpop.f32.mrb[0].mxu0
      %v2958 = vadd.f32 0.0, %v2957
      %v2959 = vpop.f32.mrb[0].mxu0
      %2960 = vmatprep.mubr.f32.mxu0 0.0
      %2961 = vmatmul.mubr.f32.gmra.mrb[0].mxu0 %v2788
      %v2962 = vpop.f32.mrb[0].mxu0
      %v2963 = vadd.f32 0.0, %v2962
      %v2964 = vpop.f32.mrb[0].mxu0
      %2965 = vmatprep.mubr.f32.mxu0 0.0
      %2966 = vmatmul.mubr.f32.gmra.mrb[0].mxu0 %v2791
      %v2967 = vpop.f32.mrb[0].mxu0
      %v2968 = vadd.f32 0.0, %v2967
      %v2969 = vpop.f32.mrb[0].mxu0
      %2970 = vmatprep.mubr.f32.mxu0 0.0
      %2971 = vmatmul.mubr.f32.gmra.mrb[0].mxu0 %v2794
      %v2972 = vpop.f32.mrb[0].mxu0
      %v2973 = vadd.f32 0.0, %v2972
      %v2974 = vpop.f32.mrb[0].mxu0
      %2975 = vmatprep.mubr.f32.mxu0 0.0
      %2976 = vmatmul.mubr.f32.gmra.mrb[0].mxu0 %v2797
      %v2977 = vpop.f32.mrb[0].mxu0
      %v2978 = vadd.f32 0.0, %v2977
      %v2979 = vpop.f32.mrb[0].mxu0
      %2980 = vmatprep.mubr.f32.mxu0 0.0
      %2981 = vmatmul.mubr.f32.gmra.mrb[0].mxu0 %v2800
      %v2982 = vpop.f32.mrb[0].mxu0
      %v2983 = vadd.f32 0.0, %v2982
      %v2984 = vpop.f32.mrb[0].mxu0
      %2985 = vmatprep.mubr.f32.mxu0 0.0
      %2986 = vmatmul.mubr.f32.gmra.mrb[0].mxu0 %v2803
      %v2987 = vpop.f32.mrb[0].mxu0
      %v2988 = vadd.f32 0.0, %v2987
      %v2989 = vpop.f32.mrb[0].mxu0
      %2990 = vmatprep.mubr.f32.mxu0 0.0
      %2991 = vmatmul.mubr.f32.gmra.mrb[0].mxu0 %v2806
      %v2992 = vpop.f32.mrb[0].mxu0
      %v2993 = vadd.f32 0.0, %v2992
      %v2994 = vpop.f32.mrb[0].mxu0
      %2995 = vmatprep.mubr.f32.mxu0 0.0
      %2996 = vmatmul.mubr.f32.gmra.mrb[0].mxu0 %v2809
      %v2997 = vpop.f32.mrb[0].mxu0
      %v2998 = vadd.f32 0.0, %v2997
      %v2999 = vpop.f32.mrb[0].mxu0
      %3000 = vmatprep.mubr.f32.mxu0 0.0
      %3001 = vmatmul.mubr.f32.gmra.mrb[0].mxu0 %v2812
      %v3002 = vpop.f32.mrb[0].mxu0
      %v3003 = vadd.f32 0.0, %v3002
      %v3004 = vpop.f32.mrb[0].mxu0
      %3005 = vmatprep.mubr.f32.mxu0 0.0
      %3006 = vmatmul.mubr.f32.gmra.mrb[0].mxu0 %v2815
      %v3007 = vpop.f32.mrb[0].mxu0
      %v3008 = vadd.f32 0.0, %v3007
      %v3009 = vpop.f32.mrb[0].mxu0
      %3010 = vmatprep.mubr.f32.mxu0 0.0
      %3011 = vmatmul.mubr.f32.gmra.mrb[0].mxu0 %v2818
      %v3012 = vpop.f32.mrb[0].mxu0
      %v3013 = vadd.f32 0.0, %v3012
      %v3014 = vpop.f32.mrb[0].mxu0
      %3015 = vmatprep.mubr.f32.mxu0 0.0
      %3016 = vmatmul.mubr.f32.gmra.mrb[0].mxu0 %v2821
      %v3017 = vpop.f32.mrb[0].mxu0
      %v3018 = vadd.f32 0.0, %v3017
      %v3019 = vpop.f32.mrb[0].mxu0
      %3020 = vmatprep.mubr.f32.mxu0 0.0
      %3021 = vmatmul.mubr.f32.gmra.mrb[0].mxu0 %v2824
      %v3022 = vpop.f32.mrb[0].mxu0
      %v3023 = vadd.f32 0.0, %v3022
      %v3024 = vpop.f32.mrb[0].mxu0
      %3025 = vmatprep.mubr.f32.mxu0 0.0
      %3026 = vmatmul.mubr.f32.gmra.mrb[0].mxu0 %v2827
      %v3027 = vpop.f32.mrb[0].mxu0
      %v3028 = vadd.f32 0.0, %v3027
      %v3029 = vpop.f32.mrb[0].mxu0
      %3030 = vmatprep.mubr.f32.mxu0 0.0
      %3031 = vmatmul.mubr.f32.gmra.mrb[0].mxu0 %v2830
      %v3032 = vpop.f32.mrb[0].mxu0
      %v3033 = vadd.f32 0.0, %v3032
      %v3034 = vpop.f32.mrb[0].mxu0
      %3035 = vmatprep.mubr.f32.mxu0 0.0
      %3036 = vmatmul.mubr.f32.gmra.mrb[0].mxu0 %v2833
      %v3037 = vpop.f32.mrb[0].mxu0
      %v3038 = vadd.f32 0.0, %v3037
      %v3039 = vpop.f32.mrb[0].mxu0
      %3040 = vmatprep.mubr.f32.mxu0 0.0
      %3041 = vmatmul.mubr.f32.gmra.mrb[0].mxu0 %v2836
      %v3042 = vpop.f32.mrb[0].mxu0
      %v3043 = vadd.f32 0.0, %v3042
      %v3044 = vpop.f32.mrb[0].mxu0
      %3045 = vmatprep.mubr.f32.mxu0 0.0
      %3046 = vmatmul.mubr.f32.gmra.mrb[0].mxu0 %v2839
      %v3047 = vpop.f32.mrb[0].mxu0
      %v3048 = vadd.f32 0.0, %v3047
      %v3049 = vpop.f32.mrb[0].mxu0
      %3050 = vmatprep.mubr.f32.mxu0 0.0
      %3051 = vmatmul.mubr.f32.gmra.mrb[0].mxu0 %v2842
      %v3052 = vpop.f32.mrb[0].mxu0
      %v3053 = vadd.f32 0.0, %v3052
      %v3054 = vpop.f32.mrb[0].mxu0
      %3055 = vmatprep.mubr.f32.mxu0 0.0
      %3056 = vmatmul.mubr.f32.gmra.mrb[0].mxu0 %v2845
      %v3057 = vpop.f32.mrb[0].mxu0
      %v3058 = vadd.f32 0.0, %v3057
      %v3059 = vpop.f32.mrb[0].mxu0
      %3060 = vmatprep.mubr.f32.mxu0 0.0
      %3061 = vmatmul.mubr.f32.gmra.mrb[0].mxu0 %v2848
      %v3062 = vpop.f32.mrb[0].mxu0
      %v3063 = vadd.f32 0.0, %v3062
      %v3064 = vpop.f32.mrb[0].mxu0
      %3065 = vmatprep.mubr.f32.mxu0 0.0
      %3066 = vmatmul.mubr.f32.gmra.mrb[0].mxu0 %v2851
      %v3067 = vpop.f32.mrb[0].mxu0
      %v3068 = vadd.f32 0.0, %v3067
      %v3069 = vpop.f32.mrb[0].mxu0
      %3070 = vmatprep.mubr.f32.mxu0 0.0
      %3071 = vmatmul.mubr.f32.gmra.mrb[0].mxu0 %v2854
      %v3072 = vpop.f32.mrb[0].mxu0
      %v3073 = vadd.f32 0.0, %v3072
      %v3074 = vpop.f32.mrb[0].mxu0
      %3075 = vmatprep.mubr.f32.mxu0 0.0
      %3076 = vmatmul.mubr.f32.gmra.mrb[0].mxu0 %v2857
      %v3077 = vpop.f32.mrb[0].mxu0
      %v3078 = vadd.f32 0.0, %v3077
      %v3079 = vpop.f32.mrb[0].mxu0
      %3080 = vmatprep.mubr.f32.mxu0 0.0
      %3081 = vmatmul.mubr.f32.gmra.mrb[0].mxu0 %v2860
      %v3082 = vpop.f32.mrb[0].mxu0
      %v3083 = vadd.f32 0.0, %v3082
      %v3084 = vpop.f32.mrb[0].mxu0
      %3085 = vmatprep.mubr.f32.mxu0 0.0
      %3086 = vmatmul.mubr.f32.gmra.mrb[0].mxu0 %v2863
      %v3087 = vpop.f32.mrb[0].mxu0
      %v3088 = vadd.f32 0.0, %v3087
      %v3089 = vpop.f32.mrb[0].mxu0
      %3090 = vmatprep.mubr.f32.mxu0 0.0
      %3091 = vmatmul.mubr.f32.gmra.mrb[0].mxu0 %v2866
      %v3092 = vpop.f32.mrb[0].mxu0
      %v3093 = vadd.f32 0.0, %v3092
      %v3094 = vpop.f32.mrb[0].mxu0
      %3095 = vdwg.mxu0
      %v3096 = vadd.f32 %v2674, %v2938
      %v3097 = vadd.f32 %v2675, %v2943
      %v3098 = vadd.f32 %v2676, %v2948
      %v3099 = vadd.f32 %v2677, %v2953
      %v3100 = vadd.f32 %v2678, %v2958
      %v3101 = vadd.f32 %v2679, %v2963
      %v3102 = vadd.f32 %v2680, %v2968
      %v3103 = vadd.f32 %v2681, %v2973
      %v3104 = vadd.f32 %v2682, %v2978
      %v3105 = vadd.f32 %v2683, %v2983
      %v3106 = vadd.f32 %v2684, %v2988
      %v3107 = vadd.f32 %v2685, %v2993
      %v3108 = vadd.f32 %v2686, %v2998
      %v3109 = vadd.f32 %v2687, %v3003
      %v3110 = vadd.f32 %v2688, %v3008
      %v3111 = vadd.f32 %v2689, %v3013
      %v3112 = vadd.f32 %v2690, %v3018
      %v3113 = vadd.f32 %v2691, %v3023
      %v3114 = vadd.f32 %v2692, %v3028
      %v3115 = vadd.f32 %v2693, %v3033
      %v3116 = vadd.f32 %v2694, %v3038
      %v3117 = vadd.f32 %v2695, %v3043
      %v3118 = vadd.f32 %v2696, %v3048
      %v3119 = vadd.f32 %v2697, %v3053
      %v3120 = vadd.f32 %v2698, %v3058
      %v3121 = vadd.f32 %v2699, %v3063
      %v3122 = vadd.f32 %v2700, %v3068
      %v3123 = vadd.f32 %v2701, %v3073
      %v3124 = vadd.f32 %v2702, %v3078
      %v3125 = vadd.f32 %v2703, %v3083
      %v3126 = vadd.f32 %v2704, %v3088
      %v3127 = vadd.f32 %v2705, %v3093
      %v3128 = vld [vmem:[#allocation2 + $0x20] sm:$0xff]
      %v3129 = vld [vmem:[#allocation2 + $0x28] sm:$0xff]
      %v3130 = vld [vmem:[#allocation2 + $0x30] sm:$0xff]
      %v3131 = vld [vmem:[#allocation2 + $0x38] sm:$0xff]
      %v3132 = vld [vmem:[#allocation2 + $0x40] sm:$0xff]
      %v3133 = vld [vmem:[#allocation2 + $0x48] sm:$0xff]
      %v3134 = vld [vmem:[#allocation2 + $0x50] sm:$0xff]
      %v3135 = vld [vmem:[#allocation2 + $0x58] sm:$0xff]
      %v3136 = vld [vmem:[#allocation2 + $0x60] sm:$0xff]
      %v3137 = vld [vmem:[#allocation2 + $0x68] sm:$0xff]
      %v3138 = vld [vmem:[#allocation2 + $0x70] sm:$0xff]
      %v3139 = vld [vmem:[#allocation2 + $0x78] sm:$0xff]
      %v3140 = vld [vmem:[#allocation2 + $0x80] sm:$0xff]
      %v3141 = vld [vmem:[#allocation2 + $0x88] sm:$0xff]
      %v3142 = vld [vmem:[#allocation2 + $0x90] sm:$0xff]
      %v3143 = vld [vmem:[#allocation2 + $0x98] sm:$0xff]
      %v3144 = vld [vmem:[#allocation2 + $0xa0] sm:$0xff]
      %v3145 = vld [vmem:[#allocation2 + $0xa8] sm:$0xff]
      %v3146 = vld [vmem:[#allocation2 + $0xb0] sm:$0xff]
      %v3147 = vld [vmem:[#allocation2 + $0xb8] sm:$0xff]
      %v3148 = vld [vmem:[#allocation2 + $0xc0] sm:$0xff]
      %v3149 = vld [vmem:[#allocation2 + $0xc8] sm:$0xff]
      %v3150 = vld [vmem:[#allocation2 + $0xd0] sm:$0xff]
      %v3151 = vld [vmem:[#allocation2 + $0xd8] sm:$0xff]
      %v3152 = vld [vmem:[#allocation2 + $0xe0] sm:$0xff]
      %v3153 = vld [vmem:[#allocation2 + $0xe8] sm:$0xff]
      %v3154 = vld [vmem:[#allocation2 + $0xf0] sm:$0xff]
      %v3155 = vld [vmem:[#allocation2 + $0xf8] sm:$0xff]
      %v3156 = vld [vmem:[#allocation2 + $0x100] sm:$0xff]
      %v3157 = vld [vmem:[#allocation2 + $0x108] sm:$0xff]
      %v3158 = vld [vmem:[#allocation2 + $0x110] sm:$0xff]
      %v3159 = vld [vmem:[#allocation2 + $0x118] sm:$0xff]
      %v3160 = vsel %vm660, %v3128, 0.0
      %v3161 = vsel %vm661, %v3129, 0.0
      %v3162 = vsel %vm662, %v3130, 0.0
      %v3163 = vsel %vm663, %v3131, 0.0
      %v3164 = vsel %vm664, %v3132, 0.0
      %v3165 = vsel %vm665, %v3133, 0.0
      %v3166 = vsel %vm666, %v3134, 0.0
      %v3167 = vsel %vm667, %v3135, 0.0
      %v3168 = vsel %vm668, %v3136, 0.0
      %v3169 = vsel %vm669, %v3137, 0.0
      %v3170 = vsel %vm670, %v3138, 0.0
      %v3171 = vsel %vm671, %v3139, 0.0
      %v3172 = vsel %vm672, %v3140, 0.0
      %v3173 = vsel %vm673, %v3141, 0.0
      %v3174 = vsel %vm674, %v3142, 0.0
      %v3175 = vsel %vm675, %v3143, 0.0
      %v3176 = vsel %vm676, %v3144, 0.0
      %v3177 = vsel %vm677, %v3145, 0.0
      %v3178 = vsel %vm678, %v3146, 0.0
      %v3179 = vsel %vm679, %v3147, 0.0
      %v3180 = vsel %vm680, %v3148, 0.0
      %v3181 = vsel %vm681, %v3149, 0.0
      %v3182 = vsel %vm682, %v3150, 0.0
      %v3183 = vsel %vm683, %v3151, 0.0
      %v3184 = vsel %vm684, %v3152, 0.0
      %v3185 = vsel %vm685, %v3153, 0.0
      %v3186 = vsel %vm686, %v3154, 0.0
      %v3187 = vsel %vm687, %v3155, 0.0
      %v3188 = vsel %vm688, %v3156, 0.0
      %v3189 = vsel %vm689, %v3157, 0.0
      %v3190 = vsel %vm690, %v3158, 0.0
      %v3191 = vsel %vm691, %v3159, 0.0
      %s3192 = scalar_lea.vmem %s1, 24
      %v3193 = vld [vmem:[%s3192] sm:$0xf]
      %v3195 = vsel %vm171, %v3160, 0
      %v3198 = vsel %vm171, %v3161, 0
      %v3201 = vsel %vm171, %v3162, 0
      %v3204 = vsel %vm171, %v3163, 0
      %v3207 = vsel %vm171, %v3164, 0
      %v3210 = vsel %vm171, %v3165, 0
      %v3213 = vsel %vm171, %v3166, 0
      %v3216 = vsel %vm171, %v3167, 0
      %v3219 = vsel %vm171, %v3168, 0
      %v3222 = vsel %vm171, %v3169, 0
      %v3225 = vsel %vm171, %v3170, 0
      %v3228 = vsel %vm171, %v3171, 0
      %v3231 = vsel %vm171, %v3172, 0
      %v3234 = vsel %vm171, %v3173, 0
      %v3237 = vsel %vm171, %v3174, 0
      %v3240 = vsel %vm171, %v3175, 0
      %v3243 = vsel %vm171, %v3176, 0
      %v3246 = vsel %vm171, %v3177, 0
      %v3249 = vsel %vm171, %v3178, 0
      %v3252 = vsel %vm171, %v3179, 0
      %v3255 = vsel %vm171, %v3180, 0
      %v3258 = vsel %vm171, %v3181, 0
      %v3261 = vsel %vm171, %v3182, 0
      %v3264 = vsel %vm171, %v3183, 0
      %v3267 = vsel %vm171, %v3184, 0
      %v3270 = vsel %vm171, %v3185, 0
      %v3273 = vsel %vm171, %v3186, 0
      %v3276 = vsel %vm171, %v3187, 0
      %v3279 = vsel %vm171, %v3188, 0
      %v3282 = vsel %vm171, %v3189, 0
      %v3285 = vsel %vm171, %v3190, 0
      %v3288 = vsel %vm171, %v3191, 0
      %v3291 = vsel %vm919, %v3193, 0
      %3293 = vmatprep.subr.mxu0 0.0
      %3294 = vmatpush1.msra.mxu0 %v3291
      %3295 = vmatprep.subr.mxu0 0.0
      %3296 = vmatpush1.msra.mxu0 0.0
      %3297 = vmatprep.subr.mxu0 0.0
      %3298 = vmatpush1.msra.mxu0 0.0
      %3299 = vmatprep.subr.mxu0 0.0
      %3300 = vmatpush1.msra.mxu0 0.0
      %3301 = vmatprep.subr.mxu0 0.0
      %3302 = vmatpush1.msra.mxu0 0.0
      %3303 = vmatprep.subr.mxu0 0.0
      %3304 = vmatpush1.msra.mxu0 0.0
      %3305 = vmatprep.subr.mxu0 0.0
      %3306 = vmatpush1.msra.mxu0 0.0
      %3307 = vmatprep.subr.mxu0 0.0
      %3308 = vmatpush1.msra.mxu0 0.0
      %3309 = vmatprep.subr.mxu0 0.0
      %3310 = vmatpush1.msra.mxu0 0.0
      %3311 = vmatprep.subr.mxu0 0.0
      %3312 = vmatpush1.msra.mxu0 0.0
      %3313 = vmatprep.subr.mxu0 0.0
      %3314 = vmatpush1.msra.mxu0 0.0
      %3315 = vmatprep.subr.mxu0 0.0
      %3316 = vmatpush1.msra.mxu0 0.0
      %3317 = vmatprep.subr.mxu0 0.0
      %3318 = vmatpush1.msra.mxu0 0.0
      %3319 = vmatprep.subr.mxu0 0.0
      %3320 = vmatpush1.msra.mxu0 0.0
      %3321 = vmatprep.subr.mxu0 0.0
      %3322 = vmatpush1.msra.mxu0 0.0
      %3323 = vmatprep.subr.mxu0 0.0
      %3324 = vmatpush1.msra.mxu0 0.0
      %3325 = vmatprep.subr.mxu0 0.0
      %3326 = vmatpush1.msra.mxu0 0.0
      %3327 = vmatprep.subr.mxu0 0.0
      %3328 = vmatpush1.msra.mxu0 0.0
      %3329 = vmatprep.subr.mxu0 0.0
      %3330 = vmatpush1.msra.mxu0 0.0
      %3331 = vmatprep.subr.mxu0 0.0
      %3332 = vmatpush1.msra.mxu0 0.0
      %3333 = vmatprep.subr.mxu0 0.0
      %3334 = vmatpush1.msra.mxu0 0.0
      %3335 = vmatprep.subr.mxu0 0.0
      %3336 = vmatpush1.msra.mxu0 0.0
      %3337 = vmatprep.subr.mxu0 0.0
      %3338 = vmatpush1.msra.mxu0 0.0
      %3339 = vmatprep.subr.mxu0 0.0
      %3340 = vmatpush1.msra.mxu0 0.0
      %3341 = vmatprep.subr.mxu0 0.0
      %3342 = vmatpush1.msra.mxu0 0.0
      %3343 = vmatprep.subr.mxu0 0.0
      %3344 = vmatpush1.msra.mxu0 0.0
      %3345 = vmatprep.subr.mxu0 0.0
      %3346 = vmatpush1.msra.mxu0 0.0
      %3347 = vmatprep.subr.mxu0 0.0
      %3348 = vmatpush1.msra.mxu0 0.0
      %3349 = vmatprep.subr.mxu0 0.0
      %3350 = vmatpush1.msra.mxu0 0.0
      %3351 = vmatprep.subr.mxu0 0.0
      %3352 = vmatpush1.msra.mxu0 0.0
      %3353 = vmatprep.subr.mxu0 0.0
      %3354 = vmatpush1.msra.mxu0 0.0
      %3355 = vmatprep.subr.mxu0 0.0
      %3356 = vmatpush1.msra.mxu0 0.0
      %3357 = vmatprep.mubr.f32.mxu0 0.0
      %3358 = vmatmul.mubr.f32.gmra.mrb[0].mxu0 %v3195
      %v3359 = vpop.f32.mrb[0].mxu0
      %v3360 = vadd.f32 0.0, %v3359
      %v3361 = vpop.f32.mrb[0].mxu0
      %3362 = vmatprep.mubr.f32.mxu0 0.0
      %3363 = vmatmul.mubr.f32.gmra.mrb[0].mxu0 %v3198
      %v3364 = vpop.f32.mrb[0].mxu0
      %v3365 = vadd.f32 0.0, %v3364
      %v3366 = vpop.f32.mrb[0].mxu0
      %3367 = vmatprep.mubr.f32.mxu0 0.0
      %3368 = vmatmul.mubr.f32.gmra.mrb[0].mxu0 %v3201
      %v3369 = vpop.f32.mrb[0].mxu0
      %v3370 = vadd.f32 0.0, %v3369
      %v3371 = vpop.f32.mrb[0].mxu0
      %3372 = vmatprep.mubr.f32.mxu0 0.0
      %3373 = vmatmul.mubr.f32.gmra.mrb[0].mxu0 %v3204
      %v3374 = vpop.f32.mrb[0].mxu0
      %v3375 = vadd.f32 0.0, %v3374
      %v3376 = vpop.f32.mrb[0].mxu0
      %3377 = vmatprep.mubr.f32.mxu0 0.0
      %3378 = vmatmul.mubr.f32.gmra.mrb[0].mxu0 %v3207
      %v3379 = vpop.f32.mrb[0].mxu0
      %v3380 = vadd.f32 0.0, %v3379
      %v3381 = vpop.f32.mrb[0].mxu0
      %3382 = vmatprep.mubr.f32.mxu0 0.0
      %3383 = vmatmul.mubr.f32.gmra.mrb[0].mxu0 %v3210
      %v3384 = vpop.f32.mrb[0].mxu0
      %v3385 = vadd.f32 0.0, %v3384
      %v3386 = vpop.f32.mrb[0].mxu0
      %3387 = vmatprep.mubr.f32.mxu0 0.0
      %3388 = vmatmul.mubr.f32.gmra.mrb[0].mxu0 %v3213
      %v3389 = vpop.f32.mrb[0].mxu0
      %v3390 = vadd.f32 0.0, %v3389
      %v3391 = vpop.f32.mrb[0].mxu0
      %3392 = vmatprep.mubr.f32.mxu0 0.0
      %3393 = vmatmul.mubr.f32.gmra.mrb[0].mxu0 %v3216
      %v3394 = vpop.f32.mrb[0].mxu0
      %v3395 = vadd.f32 0.0, %v3394
      %v3396 = vpop.f32.mrb[0].mxu0
      %3397 = vmatprep.mubr.f32.mxu0 0.0
      %3398 = vmatmul.mubr.f32.gmra.mrb[0].mxu0 %v3219
      %v3399 = vpop.f32.mrb[0].mxu0
      %v3400 = vadd.f32 0.0, %v3399
      %v3401 = vpop.f32.mrb[0].mxu0
      %3402 = vmatprep.mubr.f32.mxu0 0.0
      %3403 = vmatmul.mubr.f32.gmra.mrb[0].mxu0 %v3222
      %v3404 = vpop.f32.mrb[0].mxu0
      %v3405 = vadd.f32 0.0, %v3404
      %v3406 = vpop.f32.mrb[0].mxu0
      %3407 = vmatprep.mubr.f32.mxu0 0.0
      %3408 = vmatmul.mubr.f32.gmra.mrb[0].mxu0 %v3225
      %v3409 = vpop.f32.mrb[0].mxu0
      %v3410 = vadd.f32 0.0, %v3409
      %v3411 = vpop.f32.mrb[0].mxu0
      %3412 = vmatprep.mubr.f32.mxu0 0.0
      %3413 = vmatmul.mubr.f32.gmra.mrb[0].mxu0 %v3228
      %v3414 = vpop.f32.mrb[0].mxu0
      %v3415 = vadd.f32 0.0, %v3414
      %v3416 = vpop.f32.mrb[0].mxu0
      %3417 = vmatprep.mubr.f32.mxu0 0.0
      %3418 = vmatmul.mubr.f32.gmra.mrb[0].mxu0 %v3231
      %v3419 = vpop.f32.mrb[0].mxu0
      %v3420 = vadd.f32 0.0, %v3419
      %v3421 = vpop.f32.mrb[0].mxu0
      %3422 = vmatprep.mubr.f32.mxu0 0.0
      %3423 = vmatmul.mubr.f32.gmra.mrb[0].mxu0 %v3234
      %v3424 = vpop.f32.mrb[0].mxu0
      %v3425 = vadd.f32 0.0, %v3424
      %v3426 = vpop.f32.mrb[0].mxu0
      %3427 = vmatprep.mubr.f32.mxu0 0.0
      %3428 = vmatmul.mubr.f32.gmra.mrb[0].mxu0 %v3237
      %v3429 = vpop.f32.mrb[0].mxu0
      %v3430 = vadd.f32 0.0, %v3429
      %v3431 = vpop.f32.mrb[0].mxu0
      %3432 = vmatprep.mubr.f32.mxu0 0.0
      %3433 = vmatmul.mubr.f32.gmra.mrb[0].mxu0 %v3240
      %v3434 = vpop.f32.mrb[0].mxu0
      %v3435 = vadd.f32 0.0, %v3434
      %v3436 = vpop.f32.mrb[0].mxu0
      %3437 = vmatprep.mubr.f32.mxu0 0.0
      %3438 = vmatmul.mubr.f32.gmra.mrb[0].mxu0 %v3243
      %v3439 = vpop.f32.mrb[0].mxu0
      %v3440 = vadd.f32 0.0, %v3439
      %v3441 = vpop.f32.mrb[0].mxu0
      %3442 = vmatprep.mubr.f32.mxu0 0.0
      %3443 = vmatmul.mubr.f32.gmra.mrb[0].mxu0 %v3246
      %v3444 = vpop.f32.mrb[0].mxu0
      %v3445 = vadd.f32 0.0, %v3444
      %v3446 = vpop.f32.mrb[0].mxu0
      %3447 = vmatprep.mubr.f32.mxu0 0.0
      %3448 = vmatmul.mubr.f32.gmra.mrb[0].mxu0 %v3249
      %v3449 = vpop.f32.mrb[0].mxu0
      %v3450 = vadd.f32 0.0, %v3449
      %v3451 = vpop.f32.mrb[0].mxu0
      %3452 = vmatprep.mubr.f32.mxu0 0.0
      %3453 = vmatmul.mubr.f32.gmra.mrb[0].mxu0 %v3252
      %v3454 = vpop.f32.mrb[0].mxu0
      %v3455 = vadd.f32 0.0, %v3454
      %v3456 = vpop.f32.mrb[0].mxu0
      %3457 = vmatprep.mubr.f32.mxu0 0.0
      %3458 = vmatmul.mubr.f32.gmra.mrb[0].mxu0 %v3255
      %v3459 = vpop.f32.mrb[0].mxu0
      %v3460 = vadd.f32 0.0, %v3459
      %v3461 = vpop.f32.mrb[0].mxu0
      %3462 = vmatprep.mubr.f32.mxu0 0.0
      %3463 = vmatmul.mubr.f32.gmra.mrb[0].mxu0 %v3258
      %v3464 = vpop.f32.mrb[0].mxu0
      %v3465 = vadd.f32 0.0, %v3464
      %v3466 = vpop.f32.mrb[0].mxu0
      %3467 = vmatprep.mubr.f32.mxu0 0.0
      %3468 = vmatmul.mubr.f32.gmra.mrb[0].mxu0 %v3261
      %v3469 = vpop.f32.mrb[0].mxu0
      %v3470 = vadd.f32 0.0, %v3469
      %v3471 = vpop.f32.mrb[0].mxu0
      %3472 = vmatprep.mubr.f32.mxu0 0.0
      %3473 = vmatmul.mubr.f32.gmra.mrb[0].mxu0 %v3264
      %v3474 = vpop.f32.mrb[0].mxu0
      %v3475 = vadd.f32 0.0, %v3474
      %v3476 = vpop.f32.mrb[0].mxu0
      %3477 = vmatprep.mubr.f32.mxu0 0.0
      %3478 = vmatmul.mubr.f32.gmra.mrb[0].mxu0 %v3267
      %v3479 = vpop.f32.mrb[0].mxu0
      %v3480 = vadd.f32 0.0, %v3479
      %v3481 = vpop.f32.mrb[0].mxu0
      %3482 = vmatprep.mubr.f32.mxu0 0.0
      %3483 = vmatmul.mubr.f32.gmra.mrb[0].mxu0 %v3270
      %v3484 = vpop.f32.mrb[0].mxu0
      %v3485 = vadd.f32 0.0, %v3484
      %v3486 = vpop.f32.mrb[0].mxu0
      %3487 = vmatprep.mubr.f32.mxu0 0.0
      %3488 = vmatmul.mubr.f32.gmra.mrb[0].mxu0 %v3273
      %v3489 = vpop.f32.mrb[0].mxu0
      %v3490 = vadd.f32 0.0, %v3489
      %v3491 = vpop.f32.mrb[0].mxu0
      %3492 = vmatprep.mubr.f32.mxu0 0.0
      %3493 = vmatmul.mubr.f32.gmra.mrb[0].mxu0 %v3276
      %v3494 = vpop.f32.mrb[0].mxu0
      %v3495 = vadd.f32 0.0, %v3494
      %v3496 = vpop.f32.mrb[0].mxu0
      %3497 = vmatprep.mubr.f32.mxu0 0.0
      %3498 = vmatmul.mubr.f32.gmra.mrb[0].mxu0 %v3279
      %v3499 = vpop.f32.mrb[0].mxu0
      %v3500 = vadd.f32 0.0, %v3499
      %v3501 = vpop.f32.mrb[0].mxu0
      %3502 = vmatprep.mubr.f32.mxu0 0.0
      %3503 = vmatmul.mubr.f32.gmra.mrb[0].mxu0 %v3282
      %v3504 = vpop.f32.mrb[0].mxu0
      %v3505 = vadd.f32 0.0, %v3504
      %v3506 = vpop.f32.mrb[0].mxu0
      %3507 = vmatprep.mubr.f32.mxu0 0.0
      %3508 = vmatmul.mubr.f32.gmra.mrb[0].mxu0 %v3285
      %v3509 = vpop.f32.mrb[0].mxu0
      %v3510 = vadd.f32 0.0, %v3509
      %v3511 = vpop.f32.mrb[0].mxu0
      %3512 = vmatprep.mubr.f32.mxu0 0.0
      %3513 = vmatmul.mubr.f32.gmra.mrb[0].mxu0 %v3288
      %v3514 = vpop.f32.mrb[0].mxu0
      %v3515 = vadd.f32 0.0, %v3514
      %v3516 = vpop.f32.mrb[0].mxu0
      %3517 = vdwg.mxu0
      %v3518 = vadd.f32 %v3096, %v3360
      %v3519 = vadd.f32 %v3097, %v3365
      %v3520 = vadd.f32 %v3098, %v3370
      %v3521 = vadd.f32 %v3099, %v3375
      %v3522 = vadd.f32 %v3100, %v3380
      %v3523 = vadd.f32 %v3101, %v3385
      %v3524 = vadd.f32 %v3102, %v3390
      %v3525 = vadd.f32 %v3103, %v3395
      %v3526 = vadd.f32 %v3104, %v3400
      %v3527 = vadd.f32 %v3105, %v3405
      %v3528 = vadd.f32 %v3106, %v3410
      %v3529 = vadd.f32 %v3107, %v3415
      %v3530 = vadd.f32 %v3108, %v3420
      %v3531 = vadd.f32 %v3109, %v3425
      %v3532 = vadd.f32 %v3110, %v3430
      %v3533 = vadd.f32 %v3111, %v3435
      %v3534 = vadd.f32 %v3112, %v3440
      %v3535 = vadd.f32 %v3113, %v3445
      %v3536 = vadd.f32 %v3114, %v3450
      %v3537 = vadd.f32 %v3115, %v3455
      %v3538 = vadd.f32 %v3116, %v3460
      %v3539 = vadd.f32 %v3117, %v3465
      %v3540 = vadd.f32 %v3118, %v3470
      %v3541 = vadd.f32 %v3119, %v3475
      %v3542 = vadd.f32 %v3120, %v3480
      %v3543 = vadd.f32 %v3121, %v3485
      %v3544 = vadd.f32 %v3122, %v3490
      %v3545 = vadd.f32 %v3123, %v3495
      %v3546 = vadd.f32 %v3124, %v3500
      %v3547 = vadd.f32 %v3125, %v3505
      %v3548 = vadd.f32 %v3126, %v3510
      %v3549 = vadd.f32 %v3127, %v3515
      %v3550 = vld [vmem:[#allocation2 + $0x21] sm:$0xff]
      %v3551 = vld [vmem:[#allocation2 + $0x29] sm:$0xff]
      %v3552 = vld [vmem:[#allocation2 + $0x31] sm:$0xff]
      %v3553 = vld [vmem:[#allocation2 + $0x39] sm:$0xff]
      %v3554 = vld [vmem:[#allocation2 + $0x41] sm:$0xff]
      %v3555 = vld [vmem:[#allocation2 + $0x49] sm:$0xff]
      %v3556 = vld [vmem:[#allocation2 + $0x51] sm:$0xff]
      %v3557 = vld [vmem:[#allocation2 + $0x59] sm:$0xff]
      %v3558 = vld [vmem:[#allocation2 + $0x61] sm:$0xff]
      %v3559 = vld [vmem:[#allocation2 + $0x69] sm:$0xff]
      %v3560 = vld [vmem:[#allocation2 + $0x71] sm:$0xff]
      %v3561 = vld [vmem:[#allocation2 + $0x79] sm:$0xff]
      %v3562 = vld [vmem:[#allocation2 + $0x81] sm:$0xff]
      %v3563 = vld [vmem:[#allocation2 + $0x89] sm:$0xff]
      %v3564 = vld [vmem:[#allocation2 + $0x91] sm:$0xff]
      %v3565 = vld [vmem:[#allocation2 + $0x99] sm:$0xff]
      %v3566 = vld [vmem:[#allocation2 + $0xa1] sm:$0xff]
      %v3567 = vld [vmem:[#allocation2 + $0xa9] sm:$0xff]
      %v3568 = vld [vmem:[#allocation2 + $0xb1] sm:$0xff]
      %v3569 = vld [vmem:[#allocation2 + $0xb9] sm:$0xff]
      %v3570 = vld [vmem:[#allocation2 + $0xc1] sm:$0xff]
      %v3571 = vld [vmem:[#allocation2 + $0xc9] sm:$0xff]
      %v3572 = vld [vmem:[#allocation2 + $0xd1] sm:$0xff]
      %v3573 = vld [vmem:[#allocation2 + $0xd9] sm:$0xff]
      %v3574 = vld [vmem:[#allocation2 + $0xe1] sm:$0xff]
      %v3575 = vld [vmem:[#allocation2 + $0xe9] sm:$0xff]
      %v3576 = vld [vmem:[#allocation2 + $0xf1] sm:$0xff]
      %v3577 = vld [vmem:[#allocation2 + $0xf9] sm:$0xff]
      %v3578 = vld [vmem:[#allocation2 + $0x101] sm:$0xff]
      %v3579 = vld [vmem:[#allocation2 + $0x109] sm:$0xff]
      %v3580 = vld [vmem:[#allocation2 + $0x111] sm:$0xff]
      %v3581 = vld [vmem:[#allocation2 + $0x119] sm:$0xff]
      %s3582 = scalar_lea.vmem %s1, 28
      %v3583 = vld [vmem:[%s3582] sm:$0xf]
      %v3585 = vsel %vm171, %v3550, 0
      %v3588 = vsel %vm171, %v3551, 0
      %v3591 = vsel %vm171, %v3552, 0
      %v3594 = vsel %vm171, %v3553, 0
      %v3597 = vsel %vm171, %v3554, 0
      %v3600 = vsel %vm171, %v3555, 0
      %v3603 = vsel %vm171, %v3556, 0
      %v3606 = vsel %vm171, %v3557, 0
      %v3609 = vsel %vm171, %v3558, 0
      %v3612 = vsel %vm171, %v3559, 0
      %v3615 = vsel %vm171, %v3560, 0
      %v3618 = vsel %vm171, %v3561, 0
      %v3621 = vsel %vm171, %v3562, 0
      %v3624 = vsel %vm171, %v3563, 0
      %v3627 = vsel %vm171, %v3564, 0
      %v3630 = vsel %vm171, %v3565, 0
      %v3633 = vsel %vm171, %v3566, 0
      %v3636 = vsel %vm171, %v3567, 0
      %v3639 = vsel %vm171, %v3568, 0
      %v3642 = vsel %vm171, %v3569, 0
      %v3645 = vsel %vm171, %v3570, 0
      %v3648 = vsel %vm171, %v3571, 0
      %v3651 = vsel %vm171, %v3572, 0
      %v3654 = vsel %vm171, %v3573, 0
      %v3657 = vsel %vm171, %v3574, 0
      %v3660 = vsel %vm171, %v3575, 0
      %v3663 = vsel %vm171, %v3576, 0
      %v3666 = vsel %vm171, %v3577, 0
      %v3669 = vsel %vm171, %v3578, 0
      %v3672 = vsel %vm171, %v3579, 0
      %v3675 = vsel %vm171, %v3580, 0
      %v3678 = vsel %vm171, %v3581, 0
      %v3681 = vsel %vm919, %v3583, 0
      %3683 = vmatprep.subr.mxu0 0.0
      %3684 = vmatpush1.msra.mxu0 %v3681
      %3685 = vmatprep.subr.mxu0 0.0
      %3686 = vmatpush1.msra.mxu0 0.0
      %3687 = vmatprep.subr.mxu0 0.0
      %3688 = vmatpush1.msra.mxu0 0.0
      %3689 = vmatprep.subr.mxu0 0.0
      %3690 = vmatpush1.msra.mxu0 0.0
      %3691 = vmatprep.subr.mxu0 0.0
      %3692 = vmatpush1.msra.mxu0 0.0
      %3693 = vmatprep.subr.mxu0 0.0
      %3694 = vmatpush1.msra.mxu0 0.0
      %3695 = vmatprep.subr.mxu0 0.0
      %3696 = vmatpush1.msra.mxu0 0.0
      %3697 = vmatprep.subr.mxu0 0.0
      %3698 = vmatpush1.msra.mxu0 0.0
      %3699 = vmatprep.subr.mxu0 0.0
      %3700 = vmatpush1.msra.mxu0 0.0
      %3701 = vmatprep.subr.mxu0 0.0
      %3702 = vmatpush1.msra.mxu0 0.0
      %3703 = vmatprep.subr.mxu0 0.0
      %3704 = vmatpush1.msra.mxu0 0.0
      %3705 = vmatprep.subr.mxu0 0.0
      %3706 = vmatpush1.msra.mxu0 0.0
      %3707 = vmatprep.subr.mxu0 0.0
      %3708 = vmatpush1.msra.mxu0 0.0
      %3709 = vmatprep.subr.mxu0 0.0
      %3710 = vmatpush1.msra.mxu0 0.0
      %3711 = vmatprep.subr.mxu0 0.0
      %3712 = vmatpush1.msra.mxu0 0.0
      %3713 = vmatprep.subr.mxu0 0.0
      %3714 = vmatpush1.msra.mxu0 0.0
      %3715 = vmatprep.subr.mxu0 0.0
      %3716 = vmatpush1.msra.mxu0 0.0
      %3717 = vmatprep.subr.mxu0 0.0
      %3718 = vmatpush1.msra.mxu0 0.0
      %3719 = vmatprep.subr.mxu0 0.0
      %3720 = vmatpush1.msra.mxu0 0.0
      %3721 = vmatprep.subr.mxu0 0.0
      %3722 = vmatpush1.msra.mxu0 0.0
      %3723 = vmatprep.subr.mxu0 0.0
      %3724 = vmatpush1.msra.mxu0 0.0
      %3725 = vmatprep.subr.mxu0 0.0
      %3726 = vmatpush1.msra.mxu0 0.0
      %3727 = vmatprep.subr.mxu0 0.0
      %3728 = vmatpush1.msra.mxu0 0.0
      %3729 = vmatprep.subr.mxu0 0.0
      %3730 = vmatpush1.msra.mxu0 0.0
      %3731 = vmatprep.subr.mxu0 0.0
      %3732 = vmatpush1.msra.mxu0 0.0
      %3733 = vmatprep.subr.mxu0 0.0
      %3734 = vmatpush1.msra.mxu0 0.0
      %3735 = vmatprep.subr.mxu0 0.0
      %3736 = vmatpush1.msra.mxu0 0.0
      %3737 = vmatprep.subr.mxu0 0.0
      %3738 = vmatpush1.msra.mxu0 0.0
      %3739 = vmatprep.subr.mxu0 0.0
      %3740 = vmatpush1.msra.mxu0 0.0
      %3741 = vmatprep.subr.mxu0 0.0
      %3742 = vmatpush1.msra.mxu0 0.0
      %3743 = vmatprep.subr.mxu0 0.0
      %3744 = vmatpush1.msra.mxu0 0.0
      %3745 = vmatprep.subr.mxu0 0.0
      %3746 = vmatpush1.msra.mxu0 0.0
      %3747 = vmatprep.mubr.f32.mxu0 0.0
      %3748 = vmatmul.mubr.f32.gmra.mrb[0].mxu0 %v3585
      %v3749 = vpop.f32.mrb[0].mxu0
      %v3750 = vadd.f32 0.0, %v3749
      %v3751 = vpop.f32.mrb[0].mxu0
      %3752 = vmatprep.mubr.f32.mxu0 0.0
      %3753 = vmatmul.mubr.f32.gmra.mrb[0].mxu0 %v3588
      %v3754 = vpop.f32.mrb[0].mxu0
      %v3755 = vadd.f32 0.0, %v3754
      %v3756 = vpop.f32.mrb[0].mxu0
      %3757 = vmatprep.mubr.f32.mxu0 0.0
      %3758 = vmatmul.mubr.f32.gmra.mrb[0].mxu0 %v3591
      %v3759 = vpop.f32.mrb[0].mxu0
      %v3760 = vadd.f32 0.0, %v3759
      %v3761 = vpop.f32.mrb[0].mxu0
      %3762 = vmatprep.mubr.f32.mxu0 0.0
      %3763 = vmatmul.mubr.f32.gmra.mrb[0].mxu0 %v3594
      %v3764 = vpop.f32.mrb[0].mxu0
      %v3765 = vadd.f32 0.0, %v3764
      %v3766 = vpop.f32.mrb[0].mxu0
      %3767 = vmatprep.mubr.f32.mxu0 0.0
      %3768 = vmatmul.mubr.f32.gmra.mrb[0].mxu0 %v3597
      %v3769 = vpop.f32.mrb[0].mxu0
      %v3770 = vadd.f32 0.0, %v3769
      %v3771 = vpop.f32.mrb[0].mxu0
      %3772 = vmatprep.mubr.f32.mxu0 0.0
      %3773 = vmatmul.mubr.f32.gmra.mrb[0].mxu0 %v3600
      %v3774 = vpop.f32.mrb[0].mxu0
      %v3775 = vadd.f32 0.0, %v3774
      %v3776 = vpop.f32.mrb[0].mxu0
      %3777 = vmatprep.mubr.f32.mxu0 0.0
      %3778 = vmatmul.mubr.f32.gmra.mrb[0].mxu0 %v3603
      %v3779 = vpop.f32.mrb[0].mxu0
      %v3780 = vadd.f32 0.0, %v3779
      %v3781 = vpop.f32.mrb[0].mxu0
      %3782 = vmatprep.mubr.f32.mxu0 0.0
      %3783 = vmatmul.mubr.f32.gmra.mrb[0].mxu0 %v3606
      %v3784 = vpop.f32.mrb[0].mxu0
      %v3785 = vadd.f32 0.0, %v3784
      %v3786 = vpop.f32.mrb[0].mxu0
      %3787 = vmatprep.mubr.f32.mxu0 0.0
      %3788 = vmatmul.mubr.f32.gmra.mrb[0].mxu0 %v3609
      %v3789 = vpop.f32.mrb[0].mxu0
      %v3790 = vadd.f32 0.0, %v3789
      %v3791 = vpop.f32.mrb[0].mxu0
      %3792 = vmatprep.mubr.f32.mxu0 0.0
      %3793 = vmatmul.mubr.f32.gmra.mrb[0].mxu0 %v3612
      %v3794 = vpop.f32.mrb[0].mxu0
      %v3795 = vadd.f32 0.0, %v3794
      %v3796 = vpop.f32.mrb[0].mxu0
      %3797 = vmatprep.mubr.f32.mxu0 0.0
      %3798 = vmatmul.mubr.f32.gmra.mrb[0].mxu0 %v3615
      %v3799 = vpop.f32.mrb[0].mxu0
      %v3800 = vadd.f32 0.0, %v3799
      %v3801 = vpop.f32.mrb[0].mxu0
      %3802 = vmatprep.mubr.f32.mxu0 0.0
      %3803 = vmatmul.mubr.f32.gmra.mrb[0].mxu0 %v3618
      %v3804 = vpop.f32.mrb[0].mxu0
      %v3805 = vadd.f32 0.0, %v3804
      %v3806 = vpop.f32.mrb[0].mxu0
      %3807 = vmatprep.mubr.f32.mxu0 0.0
      %3808 = vmatmul.mubr.f32.gmra.mrb[0].mxu0 %v3621
      %v3809 = vpop.f32.mrb[0].mxu0
      %v3810 = vadd.f32 0.0, %v3809
      %v3811 = vpop.f32.mrb[0].mxu0
      %3812 = vmatprep.mubr.f32.mxu0 0.0
      %3813 = vmatmul.mubr.f32.gmra.mrb[0].mxu0 %v3624
      %v3814 = vpop.f32.mrb[0].mxu0
      %v3815 = vadd.f32 0.0, %v3814
      %v3816 = vpop.f32.mrb[0].mxu0
      %3817 = vmatprep.mubr.f32.mxu0 0.0
      %3818 = vmatmul.mubr.f32.gmra.mrb[0].mxu0 %v3627
      %v3819 = vpop.f32.mrb[0].mxu0
      %v3820 = vadd.f32 0.0, %v3819
      %v3821 = vpop.f32.mrb[0].mxu0
      %3822 = vmatprep.mubr.f32.mxu0 0.0
      %3823 = vmatmul.mubr.f32.gmra.mrb[0].mxu0 %v3630
      %v3824 = vpop.f32.mrb[0].mxu0
      %v3825 = vadd.f32 0.0, %v3824
      %v3826 = vpop.f32.mrb[0].mxu0
      %3827 = vmatprep.mubr.f32.mxu0 0.0
      %3828 = vmatmul.mubr.f32.gmra.mrb[0].mxu0 %v3633
      %v3829 = vpop.f32.mrb[0].mxu0
      %v3830 = vadd.f32 0.0, %v3829
      %v3831 = vpop.f32.mrb[0].mxu0
      %3832 = vmatprep.mubr.f32.mxu0 0.0
      %3833 = vmatmul.mubr.f32.gmra.mrb[0].mxu0 %v3636
      %v3834 = vpop.f32.mrb[0].mxu0
      %v3835 = vadd.f32 0.0, %v3834
      %v3836 = vpop.f32.mrb[0].mxu0
      %3837 = vmatprep.mubr.f32.mxu0 0.0
      %3838 = vmatmul.mubr.f32.gmra.mrb[0].mxu0 %v3639
      %v3839 = vpop.f32.mrb[0].mxu0
      %v3840 = vadd.f32 0.0, %v3839
      %v3841 = vpop.f32.mrb[0].mxu0
      %3842 = vmatprep.mubr.f32.mxu0 0.0
      %3843 = vmatmul.mubr.f32.gmra.mrb[0].mxu0 %v3642
      %v3844 = vpop.f32.mrb[0].mxu0
      %v3845 = vadd.f32 0.0, %v3844
      %v3846 = vpop.f32.mrb[0].mxu0
      %3847 = vmatprep.mubr.f32.mxu0 0.0
      %3848 = vmatmul.mubr.f32.gmra.mrb[0].mxu0 %v3645
      %v3849 = vpop.f32.mrb[0].mxu0
      %v3850 = vadd.f32 0.0, %v3849
      %v3851 = vpop.f32.mrb[0].mxu0
      %3852 = vmatprep.mubr.f32.mxu0 0.0
      %3853 = vmatmul.mubr.f32.gmra.mrb[0].mxu0 %v3648
      %v3854 = vpop.f32.mrb[0].mxu0
      %v3855 = vadd.f32 0.0, %v3854
      %v3856 = vpop.f32.mrb[0].mxu0
      %3857 = vmatprep.mubr.f32.mxu0 0.0
      %3858 = vmatmul.mubr.f32.gmra.mrb[0].mxu0 %v3651
      %v3859 = vpop.f32.mrb[0].mxu0
      %v3860 = vadd.f32 0.0, %v3859
      %v3861 = vpop.f32.mrb[0].mxu0
      %3862 = vmatprep.mubr.f32.mxu0 0.0
      %3863 = vmatmul.mubr.f32.gmra.mrb[0].mxu0 %v3654
      %v3864 = vpop.f32.mrb[0].mxu0
      %v3865 = vadd.f32 0.0, %v3864
      %v3866 = vpop.f32.mrb[0].mxu0
      %3867 = vmatprep.mubr.f32.mxu0 0.0
      %3868 = vmatmul.mubr.f32.gmra.mrb[0].mxu0 %v3657
      %v3869 = vpop.f32.mrb[0].mxu0
      %v3870 = vadd.f32 0.0, %v3869
      %v3871 = vpop.f32.mrb[0].mxu0
      %3872 = vmatprep.mubr.f32.mxu0 0.0
      %3873 = vmatmul.mubr.f32.gmra.mrb[0].mxu0 %v3660
      %v3874 = vpop.f32.mrb[0].mxu0
      %v3875 = vadd.f32 0.0, %v3874
      %v3876 = vpop.f32.mrb[0].mxu0
      %3877 = vmatprep.mubr.f32.mxu0 0.0
      %3878 = vmatmul.mubr.f32.gmra.mrb[0].mxu0 %v3663
      %v3879 = vpop.f32.mrb[0].mxu0
      %v3880 = vadd.f32 0.0, %v3879
      %v3881 = vpop.f32.mrb[0].mxu0
      %3882 = vmatprep.mubr.f32.mxu0 0.0
      %3883 = vmatmul.mubr.f32.gmra.mrb[0].mxu0 %v3666
      %v3884 = vpop.f32.mrb[0].mxu0
      %v3885 = vadd.f32 0.0, %v3884
      %v3886 = vpop.f32.mrb[0].mxu0
      %3887 = vmatprep.mubr.f32.mxu0 0.0
      %3888 = vmatmul.mubr.f32.gmra.mrb[0].mxu0 %v3669
      %v3889 = vpop.f32.mrb[0].mxu0
      %v3890 = vadd.f32 0.0, %v3889
      %v3891 = vpop.f32.mrb[0].mxu0
      %3892 = vmatprep.mubr.f32.mxu0 0.0
      %3893 = vmatmul.mubr.f32.gmra.mrb[0].mxu0 %v3672
      %v3894 = vpop.f32.mrb[0].mxu0
      %v3895 = vadd.f32 0.0, %v3894
      %v3896 = vpop.f32.mrb[0].mxu0
      %3897 = vmatprep.mubr.f32.mxu0 0.0
      %3898 = vmatmul.mubr.f32.gmra.mrb[0].mxu0 %v3675
      %v3899 = vpop.f32.mrb[0].mxu0
      %v3900 = vadd.f32 0.0, %v3899
      %v3901 = vpop.f32.mrb[0].mxu0
      %3902 = vmatprep.mubr.f32.mxu0 0.0
      %3903 = vmatmul.mubr.f32.gmra.mrb[0].mxu0 %v3678
      %v3904 = vpop.f32.mrb[0].mxu0
      %v3905 = vadd.f32 0.0, %v3904
      %v3906 = vpop.f32.mrb[0].mxu0
      %3907 = vdwg.mxu0
      %v3908 = vadd.f32 %v3518, %v3750
      %v3909 = vadd.f32 %v3519, %v3755
      %v3910 = vadd.f32 %v3520, %v3760
      %v3911 = vadd.f32 %v3521, %v3765
      %v3912 = vadd.f32 %v3522, %v3770
      %v3913 = vadd.f32 %v3523, %v3775
      %v3914 = vadd.f32 %v3524, %v3780
      %v3915 = vadd.f32 %v3525, %v3785
      %v3916 = vadd.f32 %v3526, %v3790
      %v3917 = vadd.f32 %v3527, %v3795
      %v3918 = vadd.f32 %v3528, %v3800
      %v3919 = vadd.f32 %v3529, %v3805
      %v3920 = vadd.f32 %v3530, %v3810
      %v3921 = vadd.f32 %v3531, %v3815
      %v3922 = vadd.f32 %v3532, %v3820
      %v3923 = vadd.f32 %v3533, %v3825
      %v3924 = vadd.f32 %v3534, %v3830
      %v3925 = vadd.f32 %v3535, %v3835
      %v3926 = vadd.f32 %v3536, %v3840
      %v3927 = vadd.f32 %v3537, %v3845
      %v3928 = vadd.f32 %v3538, %v3850
      %v3929 = vadd.f32 %v3539, %v3855
      %v3930 = vadd.f32 %v3540, %v3860
      %v3931 = vadd.f32 %v3541, %v3865
      %v3932 = vadd.f32 %v3542, %v3870
      %v3933 = vadd.f32 %v3543, %v3875
      %v3934 = vadd.f32 %v3544, %v3880
      %v3935 = vadd.f32 %v3545, %v3885
      %v3936 = vadd.f32 %v3546, %v3890
      %v3937 = vadd.f32 %v3547, %v3895
      %v3938 = vadd.f32 %v3548, %v3900
      %v3939 = vadd.f32 %v3549, %v3905
      %v3940 = vld [vmem:[#allocation2 + $0x22] sm:$0xff]
      %v3941 = vld [vmem:[#allocation2 + $0x2a] sm:$0xff]
      %v3942 = vld [vmem:[#allocation2 + $0x32] sm:$0xff]
      %v3943 = vld [vmem:[#allocation2 + $0x3a] sm:$0xff]
      %v3944 = vld [vmem:[#allocation2 + $0x42] sm:$0xff]
      %v3945 = vld [vmem:[#allocation2 + $0x4a] sm:$0xff]
      %v3946 = vld [vmem:[#allocation2 + $0x52] sm:$0xff]
      %v3947 = vld [vmem:[#allocation2 + $0x5a] sm:$0xff]
      %v3948 = vld [vmem:[#allocation2 + $0x62] sm:$0xff]
      %v3949 = vld [vmem:[#allocation2 + $0x6a] sm:$0xff]
      %v3950 = vld [vmem:[#allocation2 + $0x72] sm:$0xff]
      %v3951 = vld [vmem:[#allocation2 + $0x7a] sm:$0xff]
      %v3952 = vld [vmem:[#allocation2 + $0x82] sm:$0xff]
      %v3953 = vld [vmem:[#allocation2 + $0x8a] sm:$0xff]
      %v3954 = vld [vmem:[#allocation2 + $0x92] sm:$0xff]
      %v3955 = vld [vmem:[#allocation2 + $0x9a] sm:$0xff]
      %v3956 = vld [vmem:[#allocation2 + $0xa2] sm:$0xff]
      %v3957 = vld [vmem:[#allocation2 + $0xaa] sm:$0xff]
      %v3958 = vld [vmem:[#allocation2 + $0xb2] sm:$0xff]
      %v3959 = vld [vmem:[#allocation2 + $0xba] sm:$0xff]
      %v3960 = vld [vmem:[#allocation2 + $0xc2] sm:$0xff]
      %v3961 = vld [vmem:[#allocation2 + $0xca] sm:$0xff]
      %v3962 = vld [vmem:[#allocation2 + $0xd2] sm:$0xff]
      %v3963 = vld [vmem:[#allocation2 + $0xda] sm:$0xff]
      %v3964 = vld [vmem:[#allocation2 + $0xe2] sm:$0xff]
      %v3965 = vld [vmem:[#allocation2 + $0xea] sm:$0xff]
      %v3966 = vld [vmem:[#allocation2 + $0xf2] sm:$0xff]
      %v3967 = vld [vmem:[#allocation2 + $0xfa] sm:$0xff]
      %v3968 = vld [vmem:[#allocation2 + $0x102] sm:$0xff]
      %v3969 = vld [vmem:[#allocation2 + $0x10a] sm:$0xff]
      %v3970 = vld [vmem:[#allocation2 + $0x112] sm:$0xff]
      %v3971 = vld [vmem:[#allocation2 + $0x11a] sm:$0xff]
      %v3972 = vsel %vm692, %v3940, 0.0
      %v3973 = vsel %vm693, %v3941, 0.0
      %v3974 = vsel %vm694, %v3942, 0.0
      %v3975 = vsel %vm695, %v3943, 0.0
      %v3976 = vsel %vm696, %v3944, 0.0
      %v3977 = vsel %vm697, %v3945, 0.0
      %v3978 = vsel %vm698, %v3946, 0.0
      %v3979 = vsel %vm699, %v3947, 0.0
      %v3980 = vsel %vm700, %v3948, 0.0
      %v3981 = vsel %vm701, %v3949, 0.0
      %v3982 = vsel %vm702, %v3950, 0.0
      %v3983 = vsel %vm703, %v3951, 0.0
      %v3984 = vsel %vm704, %v3952, 0.0
      %v3985 = vsel %vm705, %v3953, 0.0
      %v3986 = vsel %vm706, %v3954, 0.0
      %v3987 = vsel %vm707, %v3955, 0.0
      %v3988 = vsel %vm708, %v3956, 0.0
      %v3989 = vsel %vm709, %v3957, 0.0
      %v3990 = vsel %vm710, %v3958, 0.0
      %v3991 = vsel %vm711, %v3959, 0.0
      %v3992 = vsel %vm712, %v3960, 0.0
      %v3993 = vsel %vm713, %v3961, 0.0
      %v3994 = vsel %vm714, %v3962, 0.0
      %v3995 = vsel %vm715, %v3963, 0.0
      %v3996 = vsel %vm716, %v3964, 0.0
      %v3997 = vsel %vm717, %v3965, 0.0
      %v3998 = vsel %vm718, %v3966, 0.0
      %v3999 = vsel %vm719, %v3967, 0.0
      %v4000 = vsel %vm720, %v3968, 0.0
      %v4001 = vsel %vm721, %v3969, 0.0
      %v4002 = vsel %vm722, %v3970, 0.0
      %v4003 = vsel %vm723, %v3971, 0.0
      %s4004 = scalar_lea.vmem %s1, 32
      %v4005 = vld [vmem:[%s4004] sm:$0xf]
      %v4007 = vsel %vm171, %v3972, 0
      %v4010 = vsel %vm171, %v3973, 0
      %v4013 = vsel %vm171, %v3974, 0
      %v4016 = vsel %vm171, %v3975, 0
      %v4019 = vsel %vm171, %v3976, 0
      %v4022 = vsel %vm171, %v3977, 0
      %v4025 = vsel %vm171, %v3978, 0
      %v4028 = vsel %vm171, %v3979, 0
      %v4031 = vsel %vm171, %v3980, 0
      %v4034 = vsel %vm171, %v3981, 0
      %v4037 = vsel %vm171, %v3982, 0
      %v4040 = vsel %vm171, %v3983, 0
      %v4043 = vsel %vm171, %v3984, 0
      %v4046 = vsel %vm171, %v3985, 0
      %v4049 = vsel %vm171, %v3986, 0
      %v4052 = vsel %vm171, %v3987, 0
      %v4055 = vsel %vm171, %v3988, 0
      %v4058 = vsel %vm171, %v3989, 0
      %v4061 = vsel %vm171, %v3990, 0
      %v4064 = vsel %vm171, %v3991, 0
      %v4067 = vsel %vm171, %v3992, 0
      %v4070 = vsel %vm171, %v3993, 0
      %v4073 = vsel %vm171, %v3994, 0
      %v4076 = vsel %vm171, %v3995, 0
      %v4079 = vsel %vm171, %v3996, 0
      %v4082 = vsel %vm171, %v3997, 0
      %v4085 = vsel %vm171, %v3998, 0
      %v4088 = vsel %vm171, %v3999, 0
      %v4091 = vsel %vm171, %v4000, 0
      %v4094 = vsel %vm171, %v4001, 0
      %v4097 = vsel %vm171, %v4002, 0
      %v4100 = vsel %vm171, %v4003, 0
      %v4103 = vsel %vm919, %v4005, 0
      %4105 = vmatprep.subr.mxu0 0.0
      %4106 = vmatpush1.msra.mxu0 %v4103
      %4107 = vmatprep.subr.mxu0 0.0
      %4108 = vmatpush1.msra.mxu0 0.0
      %4109 = vmatprep.subr.mxu0 0.0
      %4110 = vmatpush1.msra.mxu0 0.0
      %4111 = vmatprep.subr.mxu0 0.0
      %4112 = vmatpush1.msra.mxu0 0.0
      %4113 = vmatprep.subr.mxu0 0.0
      %4114 = vmatpush1.msra.mxu0 0.0
      %4115 = vmatprep.subr.mxu0 0.0
      %4116 = vmatpush1.msra.mxu0 0.0
      %4117 = vmatprep.subr.mxu0 0.0
      %4118 = vmatpush1.msra.mxu0 0.0
      %4119 = vmatprep.subr.mxu0 0.0
      %4120 = vmatpush1.msra.mxu0 0.0
      %4121 = vmatprep.subr.mxu0 0.0
      %4122 = vmatpush1.msra.mxu0 0.0
      %4123 = vmatprep.subr.mxu0 0.0
      %4124 = vmatpush1.msra.mxu0 0.0
      %4125 = vmatprep.subr.mxu0 0.0
      %4126 = vmatpush1.msra.mxu0 0.0
      %4127 = vmatprep.subr.mxu0 0.0
      %4128 = vmatpush1.msra.mxu0 0.0
      %4129 = vmatprep.subr.mxu0 0.0
      %4130 = vmatpush1.msra.mxu0 0.0
      %4131 = vmatprep.subr.mxu0 0.0
      %4132 = vmatpush1.msra.mxu0 0.0
      %4133 = vmatprep.subr.mxu0 0.0
      %4134 = vmatpush1.msra.mxu0 0.0
      %4135 = vmatprep.subr.mxu0 0.0
      %4136 = vmatpush1.msra.mxu0 0.0
      %4137 = vmatprep.subr.mxu0 0.0
      %4138 = vmatpush1.msra.mxu0 0.0
      %4139 = vmatprep.subr.mxu0 0.0
      %4140 = vmatpush1.msra.mxu0 0.0
      %4141 = vmatprep.subr.mxu0 0.0
      %4142 = vmatpush1.msra.mxu0 0.0
      %4143 = vmatprep.subr.mxu0 0.0
      %4144 = vmatpush1.msra.mxu0 0.0
      %4145 = vmatprep.subr.mxu0 0.0
      %4146 = vmatpush1.msra.mxu0 0.0
      %4147 = vmatprep.subr.mxu0 0.0
      %4148 = vmatpush1.msra.mxu0 0.0
      %4149 = vmatprep.subr.mxu0 0.0
      %4150 = vmatpush1.msra.mxu0 0.0
      %4151 = vmatprep.subr.mxu0 0.0
      %4152 = vmatpush1.msra.mxu0 0.0
      %4153 = vmatprep.subr.mxu0 0.0
      %4154 = vmatpush1.msra.mxu0 0.0
      %4155 = vmatprep.subr.mxu0 0.0
      %4156 = vmatpush1.msra.mxu0 0.0
      %4157 = vmatprep.subr.mxu0 0.0
      %4158 = vmatpush1.msra.mxu0 0.0
      %4159 = vmatprep.subr.mxu0 0.0
      %4160 = vmatpush1.msra.mxu0 0.0
      %4161 = vmatprep.subr.mxu0 0.0
      %4162 = vmatpush1.msra.mxu0 0.0
      %4163 = vmatprep.subr.mxu0 0.0
      %4164 = vmatpush1.msra.mxu0 0.0
      %4165 = vmatprep.subr.mxu0 0.0
      %4166 = vmatpush1.msra.mxu0 0.0
      %4167 = vmatprep.subr.mxu0 0.0
      %4168 = vmatpush1.msra.mxu0 0.0
      %4169 = vmatprep.mubr.f32.mxu0 0.0
      %4170 = vmatmul.mubr.f32.gmra.mrb[0].mxu0 %v4007
      %v4171 = vpop.f32.mrb[0].mxu0
      %v4172 = vadd.f32 0.0, %v4171
      %v4173 = vpop.f32.mrb[0].mxu0
      %4174 = vmatprep.mubr.f32.mxu0 0.0
      %4175 = vmatmul.mubr.f32.gmra.mrb[0].mxu0 %v4010
      %v4176 = vpop.f32.mrb[0].mxu0
      %v4177 = vadd.f32 0.0, %v4176
      %v4178 = vpop.f32.mrb[0].mxu0
      %4179 = vmatprep.mubr.f32.mxu0 0.0
      %4180 = vmatmul.mubr.f32.gmra.mrb[0].mxu0 %v4013
      %v4181 = vpop.f32.mrb[0].mxu0
      %v4182 = vadd.f32 0.0, %v4181
      %v4183 = vpop.f32.mrb[0].mxu0
      %4184 = vmatprep.mubr.f32.mxu0 0.0
      %4185 = vmatmul.mubr.f32.gmra.mrb[0].mxu0 %v4016
      %v4186 = vpop.f32.mrb[0].mxu0
      %v4187 = vadd.f32 0.0, %v4186
      %v4188 = vpop.f32.mrb[0].mxu0
      %4189 = vmatprep.mubr.f32.mxu0 0.0
      %4190 = vmatmul.mubr.f32.gmra.mrb[0].mxu0 %v4019
      %v4191 = vpop.f32.mrb[0].mxu0
      %v4192 = vadd.f32 0.0, %v4191
      %v4193 = vpop.f32.mrb[0].mxu0
      %4194 = vmatprep.mubr.f32.mxu0 0.0
      %4195 = vmatmul.mubr.f32.gmra.mrb[0].mxu0 %v4022
      %v4196 = vpop.f32.mrb[0].mxu0
      %v4197 = vadd.f32 0.0, %v4196
      %v4198 = vpop.f32.mrb[0].mxu0
      %4199 = vmatprep.mubr.f32.mxu0 0.0
      %4200 = vmatmul.mubr.f32.gmra.mrb[0].mxu0 %v4025
      %v4201 = vpop.f32.mrb[0].mxu0
      %v4202 = vadd.f32 0.0, %v4201
      %v4203 = vpop.f32.mrb[0].mxu0
      %4204 = vmatprep.mubr.f32.mxu0 0.0
      %4205 = vmatmul.mubr.f32.gmra.mrb[0].mxu0 %v4028
      %v4206 = vpop.f32.mrb[0].mxu0
      %v4207 = vadd.f32 0.0, %v4206
      %v4208 = vpop.f32.mrb[0].mxu0
      %4209 = vmatprep.mubr.f32.mxu0 0.0
      %4210 = vmatmul.mubr.f32.gmra.mrb[0].mxu0 %v4031
      %v4211 = vpop.f32.mrb[0].mxu0
      %v4212 = vadd.f32 0.0, %v4211
      %v4213 = vpop.f32.mrb[0].mxu0
      %4214 = vmatprep.mubr.f32.mxu0 0.0
      %4215 = vmatmul.mubr.f32.gmra.mrb[0].mxu0 %v4034
      %v4216 = vpop.f32.mrb[0].mxu0
      %v4217 = vadd.f32 0.0, %v4216
      %v4218 = vpop.f32.mrb[0].mxu0
      %4219 = vmatprep.mubr.f32.mxu0 0.0
      %4220 = vmatmul.mubr.f32.gmra.mrb[0].mxu0 %v4037
      %v4221 = vpop.f32.mrb[0].mxu0
      %v4222 = vadd.f32 0.0, %v4221
      %v4223 = vpop.f32.mrb[0].mxu0
      %4224 = vmatprep.mubr.f32.mxu0 0.0
      %4225 = vmatmul.mubr.f32.gmra.mrb[0].mxu0 %v4040
      %v4226 = vpop.f32.mrb[0].mxu0
      %v4227 = vadd.f32 0.0, %v4226
      %v4228 = vpop.f32.mrb[0].mxu0
      %4229 = vmatprep.mubr.f32.mxu0 0.0
      %4230 = vmatmul.mubr.f32.gmra.mrb[0].mxu0 %v4043
      %v4231 = vpop.f32.mrb[0].mxu0
      %v4232 = vadd.f32 0.0, %v4231
      %v4233 = vpop.f32.mrb[0].mxu0
      %4234 = vmatprep.mubr.f32.mxu0 0.0
      %4235 = vmatmul.mubr.f32.gmra.mrb[0].mxu0 %v4046
      %v4236 = vpop.f32.mrb[0].mxu0
      %v4237 = vadd.f32 0.0, %v4236
      %v4238 = vpop.f32.mrb[0].mxu0
      %4239 = vmatprep.mubr.f32.mxu0 0.0
      %4240 = vmatmul.mubr.f32.gmra.mrb[0].mxu0 %v4049
      %v4241 = vpop.f32.mrb[0].mxu0
      %v4242 = vadd.f32 0.0, %v4241
      %v4243 = vpop.f32.mrb[0].mxu0
      %4244 = vmatprep.mubr.f32.mxu0 0.0
      %4245 = vmatmul.mubr.f32.gmra.mrb[0].mxu0 %v4052
      %v4246 = vpop.f32.mrb[0].mxu0
      %v4247 = vadd.f32 0.0, %v4246
      %v4248 = vpop.f32.mrb[0].mxu0
      %4249 = vmatprep.mubr.f32.mxu0 0.0
      %4250 = vmatmul.mubr.f32.gmra.mrb[0].mxu0 %v4055
      %v4251 = vpop.f32.mrb[0].mxu0
      %v4252 = vadd.f32 0.0, %v4251
      %v4253 = vpop.f32.mrb[0].mxu0
      %4254 = vmatprep.mubr.f32.mxu0 0.0
      %4255 = vmatmul.mubr.f32.gmra.mrb[0].mxu0 %v4058
      %v4256 = vpop.f32.mrb[0].mxu0
      %v4257 = vadd.f32 0.0, %v4256
      %v4258 = vpop.f32.mrb[0].mxu0
      %4259 = vmatprep.mubr.f32.mxu0 0.0
      %4260 = vmatmul.mubr.f32.gmra.mrb[0].mxu0 %v4061
      %v4261 = vpop.f32.mrb[0].mxu0
      %v4262 = vadd.f32 0.0, %v4261
      %v4263 = vpop.f32.mrb[0].mxu0
      %4264 = vmatprep.mubr.f32.mxu0 0.0
      %4265 = vmatmul.mubr.f32.gmra.mrb[0].mxu0 %v4064
      %v4266 = vpop.f32.mrb[0].mxu0
      %v4267 = vadd.f32 0.0, %v4266
      %v4268 = vpop.f32.mrb[0].mxu0
      %4269 = vmatprep.mubr.f32.mxu0 0.0
      %4270 = vmatmul.mubr.f32.gmra.mrb[0].mxu0 %v4067
      %v4271 = vpop.f32.mrb[0].mxu0
      %v4272 = vadd.f32 0.0, %v4271
      %v4273 = vpop.f32.mrb[0].mxu0
      %4274 = vmatprep.mubr.f32.mxu0 0.0
      %4275 = vmatmul.mubr.f32.gmra.mrb[0].mxu0 %v4070
      %v4276 = vpop.f32.mrb[0].mxu0
      %v4277 = vadd.f32 0.0, %v4276
      %v4278 = vpop.f32.mrb[0].mxu0
      %4279 = vmatprep.mubr.f32.mxu0 0.0
      %4280 = vmatmul.mubr.f32.gmra.mrb[0].mxu0 %v4073
      %v4281 = vpop.f32.mrb[0].mxu0
      %v4282 = vadd.f32 0.0, %v4281
      %v4283 = vpop.f32.mrb[0].mxu0
      %4284 = vmatprep.mubr.f32.mxu0 0.0
      %4285 = vmatmul.mubr.f32.gmra.mrb[0].mxu0 %v4076
      %v4286 = vpop.f32.mrb[0].mxu0
      %v4287 = vadd.f32 0.0, %v4286
      %v4288 = vpop.f32.mrb[0].mxu0
      %4289 = vmatprep.mubr.f32.mxu0 0.0
      %4290 = vmatmul.mubr.f32.gmra.mrb[0].mxu0 %v4079
      %v4291 = vpop.f32.mrb[0].mxu0
      %v4292 = vadd.f32 0.0, %v4291
      %v4293 = vpop.f32.mrb[0].mxu0
      %4294 = vmatprep.mubr.f32.mxu0 0.0
      %4295 = vmatmul.mubr.f32.gmra.mrb[0].mxu0 %v4082
      %v4296 = vpop.f32.mrb[0].mxu0
      %v4297 = vadd.f32 0.0, %v4296
      %v4298 = vpop.f32.mrb[0].mxu0
      %4299 = vmatprep.mubr.f32.mxu0 0.0
      %4300 = vmatmul.mubr.f32.gmra.mrb[0].mxu0 %v4085
      %v4301 = vpop.f32.mrb[0].mxu0
      %v4302 = vadd.f32 0.0, %v4301
      %v4303 = vpop.f32.mrb[0].mxu0
      %4304 = vmatprep.mubr.f32.mxu0 0.0
      %4305 = vmatmul.mubr.f32.gmra.mrb[0].mxu0 %v4088
      %v4306 = vpop.f32.mrb[0].mxu0
      %v4307 = vadd.f32 0.0, %v4306
      %v4308 = vpop.f32.mrb[0].mxu0
      %4309 = vmatprep.mubr.f32.mxu0 0.0
      %4310 = vmatmul.mubr.f32.gmra.mrb[0].mxu0 %v4091
      %v4311 = vpop.f32.mrb[0].mxu0
      %v4312 = vadd.f32 0.0, %v4311
      %v4313 = vpop.f32.mrb[0].mxu0
      %4314 = vmatprep.mubr.f32.mxu0 0.0
      %4315 = vmatmul.mubr.f32.gmra.mrb[0].mxu0 %v4094
      %v4316 = vpop.f32.mrb[0].mxu0
      %v4317 = vadd.f32 0.0, %v4316
      %v4318 = vpop.f32.mrb[0].mxu0
      %4319 = vmatprep.mubr.f32.mxu0 0.0
      %4320 = vmatmul.mubr.f32.gmra.mrb[0].mxu0 %v4097
      %v4321 = vpop.f32.mrb[0].mxu0
      %v4322 = vadd.f32 0.0, %v4321
      %v4323 = vpop.f32.mrb[0].mxu0
      %4324 = vmatprep.mubr.f32.mxu0 0.0
      %4325 = vmatmul.mubr.f32.gmra.mrb[0].mxu0 %v4100
      %v4326 = vpop.f32.mrb[0].mxu0
      %v4327 = vadd.f32 0.0, %v4326
      %v4328 = vpop.f32.mrb[0].mxu0
      %4329 = vdwg.mxu0
      %v4330 = vadd.f32 %v3908, %v4172
      %v4331 = vadd.f32 %v3909, %v4177
      %v4332 = vadd.f32 %v3910, %v4182
      %v4333 = vadd.f32 %v3911, %v4187
      %v4334 = vadd.f32 %v3912, %v4192
      %v4335 = vadd.f32 %v3913, %v4197
      %v4336 = vadd.f32 %v3914, %v4202
      %v4337 = vadd.f32 %v3915, %v4207
      %v4338 = vadd.f32 %v3916, %v4212
      %v4339 = vadd.f32 %v3917, %v4217
      %v4340 = vadd.f32 %v3918, %v4222
      %v4341 = vadd.f32 %v3919, %v4227
      %v4342 = vadd.f32 %v3920, %v4232
      %v4343 = vadd.f32 %v3921, %v4237
      %v4344 = vadd.f32 %v3922, %v4242
      %v4345 = vadd.f32 %v3923, %v4247
      %v4346 = vadd.f32 %v3924, %v4252
      %v4347 = vadd.f32 %v3925, %v4257
      %v4348 = vadd.f32 %v3926, %v4262
      %v4349 = vadd.f32 %v3927, %v4267
      %v4350 = vadd.f32 %v3928, %v4272
      %v4351 = vadd.f32 %v3929, %v4277
      %v4352 = vadd.f32 %v3930, %v4282
      %v4353 = vadd.f32 %v3931, %v4287
      %v4354 = vadd.f32 %v3932, %v4292
      %v4355 = vadd.f32 %v3933, %v4297
      %v4356 = vadd.f32 %v3934, %v4302
      %v4357 = vadd.f32 %v3935, %v4307
      %v4358 = vadd.f32 %v3936, %v4312
      %v4359 = vadd.f32 %v3937, %v4317
      %v4360 = vadd.f32 %v3938, %v4322
      %v4361 = vadd.f32 %v3939, %v4327
      %v4362 = vld [vmem:[%s2] sm:$0x1]
      %v4364 = vlaneseq
      %v4365 = vshrl.u32 %v4364, 7
      %v4366 = vsub.s32 0, %v4365
      %v4367 = vrot.slane %v4362, %v4366
      %v4369 = vadd.f32 %v4330, %v4367
      %v4370 = vadd.f32 %v4331, %v4367
      %v4371 = vadd.f32 %v4332, %v4367
      %v4372 = vadd.f32 %v4333, %v4367
      %v4373 = vadd.f32 %v4334, %v4367
      %v4374 = vadd.f32 %v4335, %v4367
      %v4375 = vadd.f32 %v4336, %v4367
      %v4376 = vadd.f32 %v4337, %v4367
      %v4377 = vadd.f32 %v4338, %v4367
      %v4378 = vadd.f32 %v4339, %v4367
      %v4379 = vadd.f32 %v4340, %v4367
      %v4380 = vadd.f32 %v4341, %v4367
      %v4381 = vadd.f32 %v4342, %v4367
      %v4382 = vadd.f32 %v4343, %v4367
      %v4383 = vadd.f32 %v4344, %v4367
      %v4384 = vadd.f32 %v4345, %v4367
      %v4385 = vadd.f32 %v4346, %v4367
      %v4386 = vadd.f32 %v4347, %v4367
      %v4387 = vadd.f32 %v4348, %v4367
      %v4388 = vadd.f32 %v4349, %v4367
      %v4389 = vadd.f32 %v4350, %v4367
      %v4390 = vadd.f32 %v4351, %v4367
      %v4391 = vadd.f32 %v4352, %v4367
      %v4392 = vadd.f32 %v4353, %v4367
      %v4393 = vadd.f32 %v4354, %v4367
      %v4394 = vadd.f32 %v4355, %v4367
      %v4395 = vadd.f32 %v4356, %v4367
      %v4396 = vadd.f32 %v4357, %v4367
      %v4397 = vadd.f32 %v4358, %v4367
      %v4398 = vadd.f32 %v4359, %v4367
      %v4399 = vadd.f32 %v4360, %v4367
      %v4400 = vadd.f32 %v4361, %v4367
      %4401 = vst.msk [vmem:[%s170] sm:$0xff] %vm171, %v4369
      %4402 = vst.msk [vmem:[%s170 + $0x8] sm:$0xff] %vm171, %v4370
      %4403 = vst.msk [vmem:[%s170 + $0x10] sm:$0xff] %vm171, %v4371
      %4404 = vst.msk [vmem:[%s170 + $0x18] sm:$0xff] %vm171, %v4372
      %4405 = vst.msk [vmem:[%s170 + $0x20] sm:$0xff] %vm171, %v4373
      %4406 = vst.msk [vmem:[%s170 + $0x28] sm:$0xff] %vm171, %v4374
      %4407 = vst.msk [vmem:[%s170 + $0x30] sm:$0xff] %vm171, %v4375
      %4408 = vst.msk [vmem:[%s170 + $0x38] sm:$0xff] %vm171, %v4376
      %4409 = vst.msk [vmem:[%s170 + $0x40] sm:$0xff] %vm171, %v4377
      %4410 = vst.msk [vmem:[%s170 + $0x48] sm:$0xff] %vm171, %v4378
      %4411 = vst.msk [vmem:[%s170 + $0x50] sm:$0xff] %vm171, %v4379
      %4412 = vst.msk [vmem:[%s170 + $0x58] sm:$0xff] %vm171, %v4380
      %4413 = vst.msk [vmem:[%s170 + $0x60] sm:$0xff] %vm171, %v4381
      %4414 = vst.msk [vmem:[%s170 + $0x68] sm:$0xff] %vm171, %v4382
      %4415 = vst.msk [vmem:[%s170 + $0x70] sm:$0xff] %vm171, %v4383
      %4416 = vst.msk [vmem:[%s170 + $0x78] sm:$0xff] %vm171, %v4384
      %4417 = vst.msk [vmem:[%s170 + $0x80] sm:$0xff] %vm171, %v4385
      %4418 = vst.msk [vmem:[%s170 + $0x88] sm:$0xff] %vm171, %v4386
      %4419 = vst.msk [vmem:[%s170 + $0x90] sm:$0xff] %vm171, %v4387
      %4420 = vst.msk [vmem:[%s170 + $0x98] sm:$0xff] %vm171, %v4388
      %4421 = vst.msk [vmem:[%s170 + $0xa0] sm:$0xff] %vm171, %v4389
      %4422 = vst.msk [vmem:[%s170 + $0xa8] sm:$0xff] %vm171, %v4390
      %4423 = vst.msk [vmem:[%s170 + $0xb0] sm:$0xff] %vm171, %v4391
      %4424 = vst.msk [vmem:[%s170 + $0xb8] sm:$0xff] %vm171, %v4392
      %4425 = vst.msk [vmem:[%s170 + $0xc0] sm:$0xff] %vm171, %v4393
      %4426 = vst.msk [vmem:[%s170 + $0xc8] sm:$0xff] %vm171, %v4394
      %4427 = vst.msk [vmem:[%s170 + $0xd0] sm:$0xff] %vm171, %v4395
      %4428 = vst.msk [vmem:[%s170 + $0xd8] sm:$0xff] %vm171, %v4396
      %4429 = vst.msk [vmem:[%s170 + $0xe0] sm:$0xff] %vm171, %v4397
      %4430 = vst.msk [vmem:[%s170 + $0xe8] sm:$0xff] %vm171, %v4398
      %4431 = vst.msk [vmem:[%s170 + $0xf0] sm:$0xff] %vm171, %v4399
      %4432 = vst.msk [vmem:[%s170 + $0xf8] sm:$0xff] %vm171, %v4400
      %p4433 = scmp.lt.s32.totalorder %s14, 1
      %s4434 = scalar_select %p4433, %s14, 1
      %s4435 = smul.addr %s4434, 32
      %s4436 = smul.addr %s4435, 8
      %s4437 = scalar_lea.vmem %s3, %s4436
      // Predicated region
      $region33: #{tpu_custom_call.1} parent=31 // pred_check
        %p4438 = pneg %p100
      $region34: #{tpu_custom_call.1} parent=31 // pred_check_branch
        %4440 = sbr.rel (%p4438) target = $region36
      $region35: #{tpu_custom_call.1} parent=31 // pred_region
        _
      $region36: #{tpu_custom_call.1} parent=31 // pred_fallthru
        _
    $region32: #{tpu_custom_call.1} parent=5 // pred_fallthru
      _
    %p4441 = scmp.le.s32.totalorder 2, %s9
    // Predicated region
    $region37: #{tpu_custom_call.1} parent=5 // pred_check
      %p4442 = pneg %p4441
    $region38: #{tpu_custom_call.1} parent=5 // pred_check_branch
      %4444 = sbr.rel (%p4442) target = $region40
    $region39: #{tpu_custom_call.1} parent=5 // pred_region
      %s4445 = ssub.s32 %s9, 2
      // Predicated region
      $region41: #{tpu_custom_call.1} parent=39 // pred_check
        %p4446 = pneg %p106
      $region42: #{tpu_custom_call.1} parent=39 // pred_check_branch
        %4448 = sbr.rel (%p4446) target = $region44
      $region43: #{tpu_custom_call.1} parent=39 // pred_region
        %p4449 = scmp.lt.s32.totalorder %s15, 1
        %s4450 = scalar_select %p4449, %s15, 1
        %s4451 = smul.addr %s4450, 32
        %s4452 = smul.addr %s4451, 8
        %s4453 = scalar_lea.vmem %s3, %s4452
      $region44: #{tpu_custom_call.1} parent=39 // pred_fallthru
        _
    $region40: #{tpu_custom_call.1} parent=5 // pred_fallthru
      _
  $region6: #{tpu_custom_call.1} parent=0 // loop_footer
    %s13 = sadd.s32 1, %s9
  $region7: #{tpu_custom_call.1} parent=0 // loop_footer_branch
    %8 = sbr.rel target = $region3
  $region8: #{tpu_custom_call.1} parent=0 // loop_exit
    _

</llo_original>
